<compile_context>
chip_gen: v6e
topology: v6e:2x2x1
jax: 0.10.0
libtpu: 0.0.40
codegen_flags: <defaults>
</compile_context>

<pallas_src>
import functools
import math

import jax
import jax.numpy as jnp
from jax import lax
from jax.experimental import pallas as pl
from jax.experimental.pallas import tpu as pltpu

# ---- module hyper-parameters (from the PyTorch file) -------------------------
ADIM = 256          # idim == adim == odim == 256
AHEADS = 4
EUNITS = 1024
ELAYERS = 3
ODIM = 256
LN_EPS = 1e-12      # espnet LayerNorm eps

_CPARAMS = pltpu.CompilerParams(
    dimension_semantics=("parallel",),
    vmem_limit_bytes=32 * 1024 * 1024,
)


def _round_up(x, m):
    return ((x + m - 1) // m) * m


def _pick_tm(m, target=512):
    """Largest row-tile from a fixed list that divides M (M is a multiple of 8)."""
    for tm in (target, 256, 128, 64, 32, 16, 8):
        if tm <= m and m % tm == 0:
            return tm
    return m


def _ln_f32(x, g, b):
    mean = jnp.mean(x, axis=-1, keepdims=True)
    var = jnp.mean(jnp.square(x - mean), axis=-1, keepdims=True)
    return (x - mean) * lax.rsqrt(var + LN_EPS) * g + b


# =============================== Pallas kernels ===============================

# ---- fc1 + positional encoding (sqrt(D) scale folded into w1/b1) -------------
def _fc1_pe_kernel(x_ref, w_ref, peb_ref, o_ref):
    y = jnp.dot(x_ref[0], w_ref[...], preferred_element_type=jnp.float32)
    o_ref[0] = (y + peb_ref[...]).astype(o_ref.dtype)


def fc1_posenc(x_btd, w_scaled, peb):
    """x_btd: (B, Tp, Din) bf16; w_scaled: (Din, D) bf16; peb: (Tp, D) f32 (pe + b1*sqrt(D))."""
    B, Tp, Din = x_btd.shape
    D = w_scaled.shape[1]
    return pl.pallas_call(
        _fc1_pe_kernel,
        grid=(B,),
        in_specs=[
            pl.BlockSpec((1, Tp, Din), lambda b: (b, 0, 0)),
            pl.BlockSpec((Din, D), lambda b: (0, 0)),
            pl.BlockSpec((Tp, D), lambda b: (0, 0)),
        ],
        out_specs=pl.BlockSpec((1, Tp, D), lambda b: (b, 0, 0)),
        out_shape=jax.ShapeDtypeStruct((B, Tp, D), jnp.bfloat16),
        compiler_params=_CPARAMS,
    )(x_btd, w_scaled, peb)


# ---- LayerNorm1 + fused QKV projection, tiled over M rows ---------------------
def _ln_qkv_kernel(x_ref, g_ref, b_ref, w_ref, bias_ref, o_ref):
    x = x_ref[...].astype(jnp.float32)
    xn = _ln_f32(x, g_ref[...], b_ref[...])
    y = jnp.dot(xn.astype(jnp.bfloat16), w_ref[...],
                preferred_element_type=jnp.float32) + bias_ref[...]
    o_ref[...] = y.astype(o_ref.dtype)


def ln_qkv_proj(x, g, b, wqkv, bqkv, tm):
    M, D = x.shape
    N = wqkv.shape[1]
    return pl.pallas_call(
        _ln_qkv_kernel,
        grid=(M // tm,),
        in_specs=[
            pl.BlockSpec((tm, D), lambda i: (i, 0)),
            pl.BlockSpec((1, D), lambda i: (0, 0)),
            pl.BlockSpec((1, D), lambda i: (0, 0)),
            pl.BlockSpec((D, N), lambda i: (0, 0)),
            pl.BlockSpec((1, N), lambda i: (0, 0)),
        ],
        out_specs=pl.BlockSpec((tm, N), lambda i: (i, 0)),
        out_shape=jax.ShapeDtypeStruct((M, N), jnp.bfloat16),
        compiler_params=_CPARAMS,
    )(x, g, b, wqkv, bqkv)


# ---- attention + output projection + residual, one batch element per step ----
def _attn_kernel(qkv_ref, mask_ref, wo_ref, bo_ref, res_ref, o_ref, *, nheads):
    Tp, three_d = qkv_ref.shape
    D = three_d // 3
    dh = D // nheads

    qkv = qkv_ref[...]                          # (Tp, 3D) bf16
    mask = mask_ref[0]                          # (1, Tp) f32 in {0, 1} over keys
    bias = (mask - 1.0) * 1e30                  # 0 for valid, -1e30 for pad

    ctx_parts = []
    for h in range(nheads):                     # static head loop inside the kernel
        qh = qkv[:, h * dh:(h + 1) * dh]                    # scale folded into wq
        kh = qkv[:, D + h * dh:D + (h + 1) * dh]
        vh = qkv[:, 2 * D + h * dh:2 * D + (h + 1) * dh]
        # q @ k^T without an explicit transpose (contract last dims).
        s = lax.dot_general(qh, kh, (((1,), (1,)), ((), ())),
                            preferred_element_type=jnp.float32)   # (Tp, Tp)
        s = s + bias
        p = jnp.exp(s - jnp.max(s, axis=-1, keepdims=True)) * mask  # espnet zeroes masked probs
        p = p * pl.reciprocal(jnp.sum(p, axis=-1, keepdims=True), approx=True)
        ctx_parts.append(jnp.dot(p.astype(jnp.bfloat16), vh,
                                 preferred_element_type=jnp.float32))
    ctx = jnp.concatenate(ctx_parts, axis=-1)   # (Tp, D) f32, lane-dense

    y = jnp.dot(ctx.astype(jnp.bfloat16), wo_ref[...],
                preferred_element_type=jnp.float32)
    o_ref[...] = (y + bo_ref[...] + res_ref[...].astype(jnp.float32)).astype(o_ref.dtype)


def attention_block(qkv, mask, wo, bo, resid, B, Tp, nheads):
    M, three_d = qkv.shape
    D = three_d // 3
    return pl.pallas_call(
        functools.partial(_attn_kernel, nheads=nheads),
        grid=(B,),
        in_specs=[
            pl.BlockSpec((Tp, three_d), lambda b: (b, 0)),
            pl.BlockSpec((1, 1, Tp), lambda b: (b, 0, 0)),
            pl.BlockSpec((D, D), lambda b: (0, 0)),
            pl.BlockSpec((1, D), lambda b: (0, 0)),
            pl.BlockSpec((Tp, D), lambda b: (b, 0)),
        ],
        out_specs=pl.BlockSpec((Tp, D), lambda b: (b, 0)),
        out_shape=jax.ShapeDtypeStruct((M, D), jnp.bfloat16),
        compiler_params=_CPARAMS,
    )(qkv, mask, wo, bo, resid)


# ---- LayerNorm2 + FF1 + ReLU + FF2 + residual, tiled over M rows --------------
def _ff_kernel(x_ref, g_ref, b_ref, w1_ref, b1_ref, w2_ref, b2_ref, o_ref):
    x = x_ref[...].astype(jnp.float32)
    xn = _ln_f32(x, g_ref[...], b_ref[...])
    h = jnp.dot(xn.astype(jnp.bfloat16), w1_ref[...],
                preferred_element_type=jnp.float32) + b1_ref[...]
    h = jnp.maximum(h, 0.0)                      # 1024-wide intermediate stays in VMEM
    y = jnp.dot(h.astype(jnp.bfloat16), w2_ref[...],
                preferred_element_type=jnp.float32) + b2_ref[...]
    o_ref[...] = (y + x).astype(o_ref.dtype)     # residual fused


def ff_block(x, g, b, w1, b1, w2, b2, tm):
    M, D = x.shape
    F = w1.shape[1]
    return pl.pallas_call(
        _ff_kernel,
        grid=(M // tm,),
        in_specs=[
            pl.BlockSpec((tm, D), lambda i: (i, 0)),
            pl.BlockSpec((1, D), lambda i: (0, 0)),
            pl.BlockSpec((1, D), lambda i: (0, 0)),
            pl.BlockSpec((D, F), lambda i: (0, 0)),
            pl.BlockSpec((1, F), lambda i: (0, 0)),
            pl.BlockSpec((F, D), lambda i: (0, 0)),
            pl.BlockSpec((1, D), lambda i: (0, 0)),
        ],
        out_specs=pl.BlockSpec((tm, D), lambda i: (i, 0)),
        out_shape=jax.ShapeDtypeStruct((M, D), jnp.bfloat16),
        compiler_params=_CPARAMS,
    )(x, g, b, w1, b1, w2, b2)


# ---- after_norm + mean over time + fc2 + fc3 (padded to 128 lanes) ------------
def _pool_head_kernel(x_ref, g_ref, b_ref, w2_ref, b2_ref, w3_ref, b3_ref,
                      logits_ref, hid_ref, *, t_valid):
    x = x_ref[...].astype(jnp.float32)                       # (Tp, D)
    xn = _ln_f32(x, g_ref[...], b_ref[...])
    Tp = x.shape[0]
    # mean over the ORIGINAL T frames (matches torch `out.mean(1)`, which includes
    # length-padded frames inside T but not the extra rows added to round T up to 8).
    tmask = (lax.broadcasted_iota(jnp.int32, (Tp, 1), 0) < t_valid).astype(jnp.float32)
    pooled = jnp.sum(xn * tmask, axis=0, keepdims=True) * (1.0 / t_valid)   # (1, D)
    h = jnp.dot(pooled, w2_ref[...], preferred_element_type=jnp.float32) + b2_ref[...]
    logits = jnp.dot(h, w3_ref[...], preferred_element_type=jnp.float32) + b3_ref[...]
    hid_ref[0] = h.astype(hid_ref.dtype)
    logits_ref[0] = logits.astype(logits_ref.dtype)


def pool_and_heads(x, g, b, w2, b2, w3p, b3p, B, Tp, t_valid):
    M, D = x.shape
    N2 = w2.shape[1]
    N3 = w3p.shape[1]
    logits, hid = pl.pallas_call(
        functools.partial(_pool_head_kernel, t_valid=t_valid),
        grid=(B,),
        in_specs=[
            pl.BlockSpec((Tp, D), lambda bb: (bb, 0)),
            pl.BlockSpec((1, D), lambda bb: (0, 0)),
            pl.BlockSpec((1, D), lambda bb: (0, 0)),
            pl.BlockSpec((D, N2), lambda bb: (0, 0)),
            pl.BlockSpec((1, N2), lambda bb: (0, 0)),
            pl.BlockSpec((N2, N3), lambda bb: (0, 0)),
            pl.BlockSpec((1, N3), lambda bb: (0, 0)),
        ],
        out_specs=(
            pl.BlockSpec((1, 1, N3), lambda bb: (bb, 0, 0)),
            pl.BlockSpec((1, 1, N2), lambda bb: (bb, 0, 0)),
        ),
        out_shape=(
            jax.ShapeDtypeStruct((B, 1, N3), jnp.float32),
            jax.ShapeDtypeStruct((B, 1, N2), jnp.float32),
        ),
        compiler_params=_CPARAMS,
    )(x, g, b, w2, b2, w3p, b3p)
    return logits[:, 0, :], hid[:, 0, :]


# =============================== glue (plain JAX) ==============================

def sinusoidal_pe(T, D):
    position = jnp.arange(T, dtype=jnp.float32)[:, None]
    div_term = jnp.exp(jnp.arange(0, D, 2, dtype=jnp.float32) * (-math.log(10000.0) / D))
    pe = jnp.zeros((T, D), jnp.float32)
    pe = pe.at[:, 0::2].set(jnp.sin(position * div_term))
    pe = pe.at[:, 1::2].set(jnp.cos(position * div_term))
    return pe


def init_params(key, input_dim, num_dialog_acts):
    keys = iter(jax.random.split(key, 64))

    def w(shape, scale=0.02):
        return (scale * jax.random.normal(next(keys), shape)).astype(jnp.float32)

    params = {
        "fc1_w": w((input_dim, ADIM)), "fc1_b": w((ADIM,)),
        "after_norm_g": jnp.ones((ADIM,), jnp.float32),
        "after_norm_b": jnp.zeros((ADIM,), jnp.float32),
        "fc2_w": w((ODIM, ODIM // 2)), "fc2_b": w((ODIM // 2,)),
        "fc3_w": w((ODIM // 2, num_dialog_acts)), "fc3_b": w((num_dialog_acts,)),
        "layers": [],
    }
    for _ in range(ELAYERS):
        params["layers"].append({
            "norm1_g": jnp.ones((ADIM,), jnp.float32),
            "norm1_b": jnp.zeros((ADIM,), jnp.float32),
            "wq": w((ADIM, ADIM)), "bq": w((ADIM,)),
            "wk": w((ADIM, ADIM)), "bk": w((ADIM,)),
            "wv": w((ADIM, ADIM)), "bv": w((ADIM,)),
            "wo": w((ADIM, ADIM)), "bo": w((ADIM,)),
            "norm2_g": jnp.ones((ADIM,), jnp.float32),
            "norm2_b": jnp.zeros((ADIM,), jnp.float32),
            "w_ff1": w((ADIM, EUNITS)), "b_ff1": w((EUNITS,)),
            "w_ff2": w((EUNITS, ADIM)), "b_ff2": w((ADIM,)),
        })
    return params


def dialog_acts_predictor_forward(params, inputs, input_lengths):
    """inputs: (B, T, input_dim) float32 ; input_lengths: (B,) int32."""
    B, T, Din = inputs.shape
    D, H = ADIM, AHEADS
    dh = D // H
    Tp = _round_up(T, 8)            # pad time to a sublane multiple (masked everywhere it matters)
    M = B * Tp
    TM = _pick_tm(M)

    sqrt_d = math.sqrt(D)
    inv_sqrt_dh = 1.0 / math.sqrt(dh)

    # ---- fc1 + positional encoding (scale folded into fc1 weights) ----
    w1s = (params["fc1_w"] * sqrt_d).astype(jnp.bfloat16)
    peb = sinusoidal_pe(Tp, D) + (params["fc1_b"] * sqrt_d)[None, :]    # (Tp, D) f32

    x_in = inputs.astype(jnp.bfloat16)
    if Tp != T:
        x_in = jnp.pad(x_in, ((0, 0), (0, Tp - T), (0, 0)))
    x = fc1_posenc(x_in, w1s, peb).reshape(M, D)                         # bf16 residual stream

    # ---- key mask (B, 1, Tp): 1 for valid frames, 0 for padding ----
    t_idx = jnp.arange(Tp)[None, :]
    mask = (t_idx < input_lengths[:, None]).astype(jnp.float32)[:, None, :]

    # ---- 3 transformer encoder blocks (normalize_before=True) ----
    for l in range(ELAYERS):
        lp = params["layers"][l]
        # fused QKV weight, 1/sqrt(dh) folded into the Q columns
        wqkv = jnp.concatenate(
            [lp["wq"] * inv_sqrt_dh, lp["wk"], lp["wv"]], axis=1).astype(jnp.bfloat16)
        bqkv = jnp.concatenate(
            [lp["bq"] * inv_sqrt_dh, lp["bk"], lp["bv"]], axis=0)[None, :]

        qkv = ln_qkv_proj(x, lp["norm1_g"][None, :], lp["norm1_b"][None, :],
                          wqkv, bqkv, TM)                                # (M, 3D) bf16
        x = attention_block(qkv, mask, lp["wo"].astype(jnp.bfloat16),
                            lp["bo"][None, :], x, B, Tp, H)              # (M, D) bf16
        x = ff_block(x, lp["norm2_g"][None, :], lp["norm2_b"][None, :],
                     lp["w_ff1"].astype(jnp.bfloat16), lp["b_ff1"][None, :],
                     lp["w_ff2"].astype(jnp.bfloat16), lp["b_ff2"][None, :], TM)

    # ---- after_norm + mean over time + fc2 + fc3 (fc3 padded to 128 lanes) ----
    num_da = params["fc3_w"].shape[1]
    N3 = _round_up(num_da, 128)
    w3p = jnp.zeros((ODIM // 2, N3), jnp.float32).at[:, :num_da].set(params["fc3_w"])
    b3p = jnp.zeros((1, N3), jnp.float32).at[0, :num_da].set(params["fc3_b"])

    logits_p, out = pool_and_heads(x, params["after_norm_g"][None, :],
                                   params["after_norm_b"][None, :],
                                   params["fc2_w"], params["fc2_b"][None, :],
                                   w3p, b3p, B, Tp, T)
    return logits_p[:, :num_da], out


# TODO(synk): get_loss (BCEWithLogitsLoss) is a training-time criterion, not part of forward.

if __name__ == "__main__":
    B, T, INPUT_DIM, NUM_DA = 2, 8, 32, 7
    key = jax.random.PRNGKey(0)
    k_param, k_in = jax.random.split(key)

    params = init_params(k_param, INPUT_DIM, NUM_DA)
    inputs = jax.random.normal(k_in, (B, T, INPUT_DIM), jnp.float32)
    input_lengths = jnp.array([T, 5], jnp.int32)

    fwd = jax.jit(dialog_acts_predictor_forward)
    logits, out = fwd(params, inputs, input_lengths)
    jax.block_until_ready((logits, out))

    assert logits.shape == (B, NUM_DA), logits.shape
    assert out.shape == (B, ODIM // 2), out.shape
    assert bool(jnp.all(jnp.isfinite(logits))) and bool(jnp.all(jnp.isfinite(out)))
    print("KERNEL_OK")
</pallas_src>

<mosaic_0001>
module attributes {stable_mosaic.version = 11 : i64} {
  func.func @_fc1_pe_kernel(%arg0: i32, %arg1: memref<1x8x32xbf16, #tpu.memory_space<vmem>>, %arg2: memref<32x256xbf16, #tpu.memory_space<vmem>>, %arg3: memref<8x256xf32, #tpu.memory_space<vmem>>, %arg4: memref<1x8x256xbf16, #tpu.memory_space<vmem>>) attributes {dimension_semantics = [#tpu.dimension_semantics<parallel>], iteration_bounds = array<i64: 2>, scalar_prefetch = 0 : i64, scratch_operands = 0 : i64, tpu.core_type = #tpu.core_type<tc>, window_params = [{transform_indices = @transform_0, window_bounds = array<i64: 1, 8, 32>}, {pipeline_mode = #tpu.pipeline_mode<synchronous>, transform_indices = @transform_1, window_bounds = array<i64: 32, 256>}, {pipeline_mode = #tpu.pipeline_mode<synchronous>, transform_indices = @transform_2, window_bounds = array<i64: 8, 256>}, {transform_indices = @transform_3, window_bounds = array<i64: 1, 8, 256>}]} {
    %c0 = arith.constant 0 : index
    %c0_0 = arith.constant 0 : index
    %c0_1 = arith.constant 0 : index
    %0 = vector.load %arg1[%c0, %c0_0, %c0_1] : memref<1x8x32xbf16, #tpu.memory_space<vmem>>, vector<1x8x32xbf16>
    %1 = vector.shape_cast %0 : vector<1x8x32xbf16> to vector<8x32xbf16>
    %c0_2 = arith.constant 0 : index
    %c0_3 = arith.constant 0 : index
    %2 = vector.load %arg2[%c0_2, %c0_3] : memref<32x256xbf16, #tpu.memory_space<vmem>>, vector<32x256xbf16>
    %cst = arith.constant dense<0.000000e+00> : vector<8x256xf32>
    %3 = tpu.matmul %1, %2, %cst {dimension_numbers = #tpu.dot_dimension_numbers<[1], [0], [0], [1], [0, 0, 1, 1], [], []>} : vector<8x32xbf16>, vector<32x256xbf16>, vector<8x256xf32> -> vector<8x256xf32>
    %c0_4 = arith.constant 0 : index
    %c0_5 = arith.constant 0 : index
    %4 = vector.load %arg3[%c0_4, %c0_5] : memref<8x256xf32, #tpu.memory_space<vmem>>, vector<8x256xf32>
    %5 = arith.addf %3, %4 : vector<8x256xf32>
    %6 = arith.truncf %5 : vector<8x256xf32> to vector<8x256xbf16>
    %c0_6 = arith.constant 0 : index
    %c0_7 = arith.constant 0 : index
    %c0_8 = arith.constant 0 : index
    %7 = vector.load %arg4[%c0_6, %c0_7, %c0_8] : memref<1x8x256xbf16, #tpu.memory_space<vmem>>, vector<1x8x256xbf16>
    %8 = vector.shape_cast %7 : vector<1x8x256xbf16> to vector<8x256xbf16>
    %9 = vector.shape_cast %6 : vector<8x256xbf16> to vector<1x8x256xbf16>
    tpu.vector_store %arg4[%c0_6, %c0_7, %c0_8], %9 {strides = array<i32>} : memref<1x8x256xbf16, #tpu.memory_space<vmem>>, vector<1x8x256xbf16>,
    return
  }
  func.func @transform_0(%arg0: i32) -> (i32, i32, i32) {
    %c0_i32 = arith.constant 0 : i32
    %c0_i32_0 = arith.constant 0 : i32
    %c0_i32_1 = arith.constant 0 : i32
    return %arg0, %c0_i32, %c0_i32_0 : i32, i32, i32
  }
  func.func @transform_1(%arg0: i32) -> (i32, i32) {
    %c0_i32 = arith.constant 0 : i32
    %c0_i32_0 = arith.constant 0 : i32
    %c0_i32_1 = arith.constant 0 : i32
    return %c0_i32, %c0_i32_0 : i32, i32
  }
  func.func @transform_2(%arg0: i32) -> (i32, i32) {
    %c0_i32 = arith.constant 0 : i32
    %c0_i32_0 = arith.constant 0 : i32
    %c0_i32_1 = arith.constant 0 : i32
    return %c0_i32, %c0_i32_0 : i32, i32
  }
  func.func @transform_3(%arg0: i32) -> (i32, i32, i32) {
    %c0_i32 = arith.constant 0 : i32
    %c0_i32_0 = arith.constant 0 : i32
    %c0_i32_1 = arith.constant 0 : i32
    return %arg0, %c0_i32, %c0_i32_0 : i32, i32, i32
  }
}

module attributes {stable_mosaic.version = 11 : i64} {
  func.func @_attn_kernel(%arg0: i32, %arg1: memref<8x768xbf16, #tpu.memory_space<vmem>>, %arg2: memref<1x1x8xf32, #tpu.memory_space<vmem>>, %arg3: memref<256x256xbf16, #tpu.memory_space<vmem>>, %arg4: memref<1x256xf32, #tpu.memory_space<vmem>>, %arg5: memref<8x256xbf16, #tpu.memory_space<vmem>>, %arg6: memref<8x256xbf16, #tpu.memory_space<vmem>>) attributes {dimension_semantics = [#tpu.dimension_semantics<parallel>], iteration_bounds = array<i64: 2>, scalar_prefetch = 0 : i64, scratch_operands = 0 : i64, tpu.core_type = #tpu.core_type<tc>, window_params = [{transform_indices = @transform_0, window_bounds = array<i64: 8, 768>}, {transform_indices = @transform_1, window_bounds = array<i64: 1, 1, 8>}, {pipeline_mode = #tpu.pipeline_mode<synchronous>, transform_indices = @transform_2, window_bounds = array<i64: 256, 256>}, {pipeline_mode = #tpu.pipeline_mode<synchronous>, transform_indices = @transform_3, window_bounds = array<i64: 1, 256>}, {transform_indices = @transform_4, window_bounds = array<i64: 8, 256>}, {transform_indices = @transform_5, window_bounds = array<i64: 8, 256>}]} {
    %c0 = arith.constant 0 : index
    %c0_0 = arith.constant 0 : index
    %0 = vector.load %arg1[%c0, %c0_0] : memref<8x768xbf16, #tpu.memory_space<vmem>>, vector<8x768xbf16>
    %c0_1 = arith.constant 0 : index
    %c0_2 = arith.constant 0 : index
    %c0_3 = arith.constant 0 : index
    %1 = vector.load %arg2[%c0_1, %c0_2, %c0_3] : memref<1x1x8xf32, #tpu.memory_space<vmem>>, vector<1x1x8xf32>
    %2 = vector.shape_cast %1 : vector<1x1x8xf32> to vector<1x8xf32>
    %cst = arith.constant 1.000000e+00 : f32
    %3 = vector.broadcast %cst : f32 to vector<1x8xf32>
    %4 = arith.subf %2, %3 : vector<1x8xf32>
    %cst_4 = arith.constant 1.000000e+30 : f32
    %5 = vector.broadcast %cst_4 : f32 to vector<1x8xf32>
    %6 = arith.mulf %4, %5 : vector<1x8xf32>
    %7 = vector.extract_strided_slice %0 {offsets = [0, 0], sizes = [8, 64], strides = [1, 1]} : vector<8x768xbf16> to vector<8x64xbf16>
    %8 = vector.extract_strided_slice %0 {offsets = [0, 256], sizes = [8, 64], strides = [1, 1]} : vector<8x768xbf16> to vector<8x64xbf16>
    %9 = vector.extract_strided_slice %0 {offsets = [0, 512], sizes = [8, 64], strides = [1, 1]} : vector<8x768xbf16> to vector<8x64xbf16>
    %cst_5 = arith.constant dense<0.000000e+00> : vector<8x8xf32>
    %10 = tpu.matmul %7, %8, %cst_5 {dimension_numbers = #tpu.dot_dimension_numbers<[1], [1], [0], [0], [0, 0, 1, 0], [], []>} : vector<8x64xbf16>, vector<8x64xbf16>, vector<8x8xf32> -> vector<8x8xf32>
    %11 = vector.broadcast %6 : vector<1x8xf32> to vector<8x8xf32>
    %12 = arith.addf %10, %11 : vector<8x8xf32>
    %cst_6 = arith.constant dense<0xFF800000> : vector<8xf32>
    %13 = vector.multi_reduction <maximumf>, %12, %cst_6 [1] : vector<8x8xf32> to vector<8xf32>
    %14 = vector.shape_cast %13 : vector<8xf32> to vector<8x1xf32>
    %15 = vector.broadcast %14 : vector<8x1xf32> to vector<8x8xf32>
    %16 = arith.subf %12, %15 : vector<8x8xf32>
    %17 = math.exp %16 : vector<8x8xf32>
    %18 = vector.broadcast %2 : vector<1x8xf32> to vector<8x8xf32>
    %19 = arith.mulf %17, %18 : vector<8x8xf32>
    %cst_7 = arith.constant dense<0.000000e+00> : vector<8xf32>
    %20 = vector.multi_reduction <add>, %19, %cst_7 [1] : vector<8x8xf32> to vector<8xf32>
    %21 = vector.shape_cast %20 : vector<8xf32> to vector<8x1xf32>
    %22 = tpu.reciprocal %21 {approx = true} : vector<8x1xf32> -> vector<8x1xf32>
    %23 = vector.broadcast %22 : vector<8x1xf32> to vector<8x8xf32>
    %24 = arith.mulf %19, %23 : vector<8x8xf32>
    %25 = arith.truncf %24 : vector<8x8xf32> to vector<8x8xbf16>
    %cst_8 = arith.constant dense<0.000000e+00> : vector<8x64xf32>
    %26 = tpu.matmul %25, %9, %cst_8 {dimension_numbers = #tpu.dot_dimension_numbers<[1], [0], [0], [1], [0, 0, 1, 1], [], []>} : vector<8x8xbf16>, vector<8x64xbf16>, vector<8x64xf32> -> vector<8x64xf32>
    %27 = vector.extract_strided_slice %0 {offsets = [0, 64], sizes = [8, 64], strides = [1, 1]} : vector<8x768xbf16> to vector<8x64xbf16>
    %28 = vector.extract_strided_slice %0 {offsets = [0, 320], sizes = [8, 64], strides = [1, 1]} : vector<8x768xbf16> to vector<8x64xbf16>
    %29 = vector.extract_strided_slice %0 {offsets = [0, 576], sizes = [8, 64], strides = [1, 1]} : vector<8x768xbf16> to vector<8x64xbf16>
    %cst_9 = arith.constant dense<0.000000e+00> : vector<8x8xf32>
    %30 = tpu.matmul %27, %28, %cst_9 {dimension_numbers = #tpu.dot_dimension_numbers<[1], [1], [0], [0], [0, 0, 1, 0], [], []>} : vector<8x64xbf16>, vector<8x64xbf16>, vector<8x8xf32> -> vector<8x8xf32>
    %31 = vector.broadcast %6 : vector<1x8xf32> to vector<8x8xf32>
    %32 = arith.addf %30, %31 : vector<8x8xf32>
    %cst_10 = arith.constant dense<0xFF800000> : vector<8xf32>
    %33 = vector.multi_reduction <maximumf>, %32, %cst_10 [1] : vector<8x8xf32> to vector<8xf32>
    %34 = vector.shape_cast %33 : vector<8xf32> to vector<8x1xf32>
    %35 = vector.broadcast %34 : vector<8x1xf32> to vector<8x8xf32>
    %36 = arith.subf %32, %35 : vector<8x8xf32>
    %37 = math.exp %36 : vector<8x8xf32>
    %38 = vector.broadcast %2 : vector<1x8xf32> to vector<8x8xf32>
    %39 = arith.mulf %37, %38 : vector<8x8xf32>
    %cst_11 = arith.constant dense<0.000000e+00> : vector<8xf32>
    %40 = vector.multi_reduction <add>, %39, %cst_11 [1] : vector<8x8xf32> to vector<8xf32>
    %41 = vector.shape_cast %40 : vector<8xf32> to vector<8x1xf32>
    %42 = tpu.reciprocal %41 {approx = true} : vector<8x1xf32> -> vector<8x1xf32>
    %43 = vector.broadcast %42 : vector<8x1xf32> to vector<8x8xf32>
    %44 = arith.mulf %39, %43 : vector<8x8xf32>
    %45 = arith.truncf %44 : vector<8x8xf32> to vector<8x8xbf16>
    %cst_12 = arith.constant dense<0.000000e+00> : vector<8x64xf32>
    %46 = tpu.matmul %45, %29, %cst_12 {dimension_numbers = #tpu.dot_dimension_numbers<[1], [0], [0], [1], [0, 0, 1, 1], [], []>} : vector<8x8xbf16>, vector<8x64xbf16>, vector<8x64xf32> -> vector<8x64xf32>
    %47 = vector.extract_strided_slice %0 {offsets = [0, 128], sizes = [8, 64], strides = [1, 1]} : vector<8x768xbf16> to vector<8x64xbf16>
    %48 = vector.extract_strided_slice %0 {offsets = [0, 384], sizes = [8, 64], strides = [1, 1]} : vector<8x768xbf16> to vector<8x64xbf16>
    %49 = vector.extract_strided_slice %0 {offsets = [0, 640], sizes = [8, 64], strides = [1, 1]} : vector<8x768xbf16> to vector<8x64xbf16>
    %cst_13 = arith.constant dense<0.000000e+00> : vector<8x8xf32>
    %50 = tpu.matmul %47, %48, %cst_13 {dimension_numbers = #tpu.dot_dimension_numbers<[1], [1], [0], [0], [0, 0, 1, 0], [], []>} : vector<8x64xbf16>, vector<8x64xbf16>, vector<8x8xf32> -> vector<8x8xf32>
    %51 = vector.broadcast %6 : vector<1x8xf32> to vector<8x8xf32>
    %52 = arith.addf %50, %51 : vector<8x8xf32>
    %cst_14 = arith.constant dense<0xFF800000> : vector<8xf32>
    %53 = vector.multi_reduction <maximumf>, %52, %cst_14 [1] : vector<8x8xf32> to vector<8xf32>
    %54 = vector.shape_cast %53 : vector<8xf32> to vector<8x1xf32>
    %55 = vector.broadcast %54 : vector<8x1xf32> to vector<8x8xf32>
    %56 = arith.subf %52, %55 : vector<8x8xf32>
    %57 = math.exp %56 : vector<8x8xf32>
    %58 = vector.broadcast %2 : vector<1x8xf32> to vector<8x8xf32>
    %59 = arith.mulf %57, %58 : vector<8x8xf32>
    %cst_15 = arith.constant dense<0.000000e+00> : vector<8xf32>
    %60 = vector.multi_reduction <add>, %59, %cst_15 [1] : vector<8x8xf32> to vector<8xf32>
    %61 = vector.shape_cast %60 : vector<8xf32> to vector<8x1xf32>
    %62 = tpu.reciprocal %61 {approx = true} : vector<8x1xf32> -> vector<8x1xf32>
    %63 = vector.broadcast %62 : vector<8x1xf32> to vector<8x8xf32>
    %64 = arith.mulf %59, %63 : vector<8x8xf32>
    %65 = arith.truncf %64 : vector<8x8xf32> to vector<8x8xbf16>
    %cst_16 = arith.constant dense<0.000000e+00> : vector<8x64xf32>
    %66 = tpu.matmul %65, %49, %cst_16 {dimension_numbers = #tpu.dot_dimension_numbers<[1], [0], [0], [1], [0, 0, 1, 1], [], []>} : vector<8x8xbf16>, vector<8x64xbf16>, vector<8x64xf32> -> vector<8x64xf32>
    %67 = vector.extract_strided_slice %0 {offsets = [0, 192], sizes = [8, 64], strides = [1, 1]} : vector<8x768xbf16> to vector<8x64xbf16>
    %68 = vector.extract_strided_slice %0 {offsets = [0, 448], sizes = [8, 64], strides = [1, 1]} : vector<8x768xbf16> to vector<8x64xbf16>
    %69 = vector.extract_strided_slice %0 {offsets = [0, 704], sizes = [8, 64], strides = [1, 1]} : vector<8x768xbf16> to vector<8x64xbf16>
    %cst_17 = arith.constant dense<0.000000e+00> : vector<8x8xf32>
    %70 = tpu.matmul %67, %68, %cst_17 {dimension_numbers = #tpu.dot_dimension_numbers<[1], [1], [0], [0], [0, 0, 1, 0], [], []>} : vector<8x64xbf16>, vector<8x64xbf16>, vector<8x8xf32> -> vector<8x8xf32>
    %71 = vector.broadcast %6 : vector<1x8xf32> to vector<8x8xf32>
    %72 = arith.addf %70, %71 : vector<8x8xf32>
    %cst_18 = arith.constant dense<0xFF800000> : vector<8xf32>
    %73 = vector.multi_reduction <maximumf>, %72, %cst_18 [1] : vector<8x8xf32> to vector<8xf32>
    %74 = vector.shape_cast %73 : vector<8xf32> to vector<8x1xf32>
    %75 = vector.broadcast %74 : vector<8x1xf32> to vector<8x8xf32>
    %76 = arith.subf %72, %75 : vector<8x8xf32>
    %77 = math.exp %76 : vector<8x8xf32>
    %78 = vector.broadcast %2 : vector<1x8xf32> to vector<8x8xf32>
    %79 = arith.mulf %77, %78 : vector<8x8xf32>
    %cst_19 = arith.constant dense<0.000000e+00> : vector<8xf32>
    %80 = vector.multi_reduction <add>, %79, %cst_19 [1] : vector<8x8xf32> to vector<8xf32>
    %81 = vector.shape_cast %80 : vector<8xf32> to vector<8x1xf32>
    %82 = tpu.reciprocal %81 {approx = true} : vector<8x1xf32> -> vector<8x1xf32>
    %83 = vector.broadcast %82 : vector<8x1xf32> to vector<8x8xf32>
    %84 = arith.mulf %79, %83 : vector<8x8xf32>
    %85 = arith.truncf %84 : vector<8x8xf32> to vector<8x8xbf16>
    %cst_20 = arith.constant dense<0.000000e+00> : vector<8x64xf32>
    %86 = tpu.matmul %85, %69, %cst_20 {dimension_numbers = #tpu.dot_dimension_numbers<[1], [0], [0], [1], [0, 0, 1, 1], [], []>} : vector<8x8xbf16>, vector<8x64xbf16>, vector<8x64xf32> -> vector<8x64xf32>
    %87 = tpu.concatenate %26, %46, %66, %86 in 1 : vector<8x64xf32>, vector<8x64xf32>, vector<8x64xf32>, vector<8x64xf32> -> vector<8x256xf32>
    %88 = arith.truncf %87 : vector<8x256xf32> to vector<8x256xbf16>
    %c0_21 = arith.constant 0 : index
    %c0_22 = arith.constant 0 : index
    %89 = vector.load %arg3[%c0_21, %c0_22] : memref<256x256xbf16, #tpu.memory_space<vmem>>, vector<256x256xbf16>
    %cst_23 = arith.constant dense<0.000000e+00> : vector<8x256xf32>
    %90 = tpu.matmul %88, %89, %cst_23 {dimension_numbers = #tpu.dot_dimension_numbers<[1], [0], [0], [1], [0, 0, 1, 1], [], []>} : vector<8x256xbf16>, vector<256x256xbf16>, vector<8x256xf32> -> vector<8x256xf32>
    %c0_24 = arith.constant 0 : index
    %c0_25 = arith.constant 0 : index
    %91 = vector.load %arg4[%c0_24, %c0_25] : memref<1x256xf32, #tpu.memory_space<vmem>>, vector<1x256xf32>
    %92 = vector.broadcast %91 : vector<1x256xf32> to vector<8x256xf32>
    %93 = arith.addf %90, %92 : vector<8x256xf32>
    %c0_26 = arith.constant 0 : index
    %c0_27 = arith.constant 0 : index
    %94 = vector.load %arg5[%c0_26, %c0_27] : memref<8x256xbf16, #tpu.memory_space<vmem>>, vector<8x256xbf16>
    %95 = arith.extf %94 : vector<8x256xbf16> to vector<8x256xf32>
    %96 = arith.addf %93, %95 : vector<8x256xf32>
    %97 = arith.truncf %96 : vector<8x256xf32> to vector<8x256xbf16>
    %c0_28 = arith.constant 0 : index
    %c0_29 = arith.constant 0 : index
    %98 = vector.load %arg6[%c0_28, %c0_29] : memref<8x256xbf16, #tpu.memory_space<vmem>>, vector<8x256xbf16>
    tpu.vector_store %arg6[%c0_28, %c0_29], %97 {strides = array<i32>} : memref<8x256xbf16, #tpu.memory_space<vmem>>, vector<8x256xbf16>,
    return
  }
  func.func @transform_0(%arg0: i32) -> (i32, i32) {
    %c0_i32 = arith.constant 0 : i32
    %c0_i32_0 = arith.constant 0 : i32
    return %arg0, %c0_i32 : i32, i32
  }
  func.func @transform_1(%arg0: i32) -> (i32, i32, i32) {
    %c0_i32 = arith.constant 0 : i32
    %c0_i32_0 = arith.constant 0 : i32
    %c0_i32_1 = arith.constant 0 : i32
    return %arg0, %c0_i32, %c0_i32_0 : i32, i32, i32
  }
  func.func @transform_2(%arg0: i32) -> (i32, i32) {
    %c0_i32 = arith.constant 0 : i32
    %c0_i32_0 = arith.constant 0 : i32
    %c0_i32_1 = arith.constant 0 : i32
    return %c0_i32, %c0_i32_0 : i32, i32
  }
  func.func @transform_3(%arg0: i32) -> (i32, i32) {
    %c0_i32 = arith.constant 0 : i32
    %c0_i32_0 = arith.constant 0 : i32
    %c0_i32_1 = arith.constant 0 : i32
    return %c0_i32, %c0_i32_0 : i32, i32
  }
  func.func @transform_4(%arg0: i32) -> (i32, i32) {
    %c0_i32 = arith.constant 0 : i32
    %c0_i32_0 = arith.constant 0 : i32
    return %arg0, %c0_i32 : i32, i32
  }
  func.func @transform_5(%arg0: i32) -> (i32, i32) {
    %c0_i32 = arith.constant 0 : i32
    %c0_i32_0 = arith.constant 0 : i32
    return %arg0, %c0_i32 : i32, i32
  }
}

module attributes {stable_mosaic.version = 11 : i64} {
  func.func @_ln_qkv_kernel(%arg0: i32, %arg1: memref<16x256xbf16, #tpu.memory_space<vmem>>, %arg2: memref<1x256xf32, #tpu.memory_space<vmem>>, %arg3: memref<1x256xf32, #tpu.memory_space<vmem>>, %arg4: memref<256x768xbf16, #tpu.memory_space<vmem>>, %arg5: memref<1x768xf32, #tpu.memory_space<vmem>>, %arg6: memref<16x768xbf16, #tpu.memory_space<vmem>>) attributes {dimension_semantics = [#tpu.dimension_semantics<parallel>], iteration_bounds = array<i64: 1>, scalar_prefetch = 0 : i64, scratch_operands = 0 : i64, tpu.core_type = #tpu.core_type<tc>, window_params = [{transform_indices = @transform_0, window_bounds = array<i64: 16, 256>}, {pipeline_mode = #tpu.pipeline_mode<synchronous>, transform_indices = @transform_1, window_bounds = array<i64: 1, 256>}, {pipeline_mode = #tpu.pipeline_mode<synchronous>, transform_indices = @transform_2, window_bounds = array<i64: 1, 256>}, {pipeline_mode = #tpu.pipeline_mode<synchronous>, transform_indices = @transform_3, window_bounds = array<i64: 256, 768>}, {pipeline_mode = #tpu.pipeline_mode<synchronous>, transform_indices = @transform_4, window_bounds = array<i64: 1, 768>}, {transform_indices = @transform_5, window_bounds = array<i64: 16, 768>}]} {
    %c0 = arith.constant 0 : index
    %c0_0 = arith.constant 0 : index
    %0 = vector.load %arg1[%c0, %c0_0] : memref<16x256xbf16, #tpu.memory_space<vmem>>, vector<16x256xbf16>
    %1 = arith.extf %0 : vector<16x256xbf16> to vector<16x256xf32>
    %c0_1 = arith.constant 0 : index
    %c0_2 = arith.constant 0 : index
    %2 = vector.load %arg2[%c0_1, %c0_2] : memref<1x256xf32, #tpu.memory_space<vmem>>, vector<1x256xf32>
    %c0_3 = arith.constant 0 : index
    %c0_4 = arith.constant 0 : index
    %3 = vector.load %arg3[%c0_3, %c0_4] : memref<1x256xf32, #tpu.memory_space<vmem>>, vector<1x256xf32>
    %cst = arith.constant dense<0.000000e+00> : vector<16xf32>
    %4 = vector.multi_reduction <add>, %1, %cst [1] : vector<16x256xf32> to vector<16xf32>
    %5 = vector.shape_cast %4 : vector<16xf32> to vector<16x1xf32>
    %cst_5 = arith.constant 2.560000e+02 : f32
    %6 = vector.broadcast %cst_5 : f32 to vector<16x1xf32>
    %7 = arith.divf %5, %6 : vector<16x1xf32>
    %8 = vector.broadcast %7 : vector<16x1xf32> to vector<16x256xf32>
    %9 = arith.subf %1, %8 : vector<16x256xf32>
    %10 = arith.mulf %9, %9 : vector<16x256xf32>
    %cst_6 = arith.constant dense<0.000000e+00> : vector<16xf32>
    %11 = vector.multi_reduction <add>, %10, %cst_6 [1] : vector<16x256xf32> to vector<16xf32>
    %12 = vector.shape_cast %11 : vector<16xf32> to vector<16x1xf32>
    %cst_7 = arith.constant 2.560000e+02 : f32
    %13 = vector.broadcast %cst_7 : f32 to vector<16x1xf32>
    %14 = arith.divf %12, %13 : vector<16x1xf32>
    %15 = vector.broadcast %7 : vector<16x1xf32> to vector<16x256xf32>
    %16 = arith.subf %1, %15 : vector<16x256xf32>
    %cst_8 = arith.constant 9.99999996E-13 : f32
    %17 = vector.broadcast %cst_8 : f32 to vector<16x1xf32>
    %18 = arith.addf %14, %17 : vector<16x1xf32>
    %19 = math.rsqrt %18 : vector<16x1xf32>
    %20 = vector.broadcast %19 : vector<16x1xf32> to vector<16x256xf32>
    %21 = arith.mulf %16, %20 : vector<16x256xf32>
    %22 = vector.broadcast %2 : vector<1x256xf32> to vector<16x256xf32>
    %23 = arith.mulf %21, %22 : vector<16x256xf32>
    %24 = vector.broadcast %3 : vector<1x256xf32> to vector<16x256xf32>
    %25 = arith.addf %23, %24 : vector<16x256xf32>
    %26 = arith.truncf %25 : vector<16x256xf32> to vector<16x256xbf16>
    %c0_9 = arith.constant 0 : index
    %c0_10 = arith.constant 0 : index
    %27 = vector.load %arg4[%c0_9, %c0_10] : memref<256x768xbf16, #tpu.memory_space<vmem>>, vector<256x768xbf16>
    %cst_11 = arith.constant dense<0.000000e+00> : vector<16x768xf32>
    %28 = tpu.matmul %26, %27, %cst_11 {dimension_numbers = #tpu.dot_dimension_numbers<[1], [0], [0], [1], [0, 0, 1, 1], [], []>} : vector<16x256xbf16>, vector<256x768xbf16>, vector<16x768xf32> -> vector<16x768xf32>
    %c0_12 = arith.constant 0 : index
    %c0_13 = arith.constant 0 : index
    %29 = vector.load %arg5[%c0_12, %c0_13] : memref<1x768xf32, #tpu.memory_space<vmem>>, vector<1x768xf32>
    %30 = vector.broadcast %29 : vector<1x768xf32> to vector<16x768xf32>
    %31 = arith.addf %28, %30 : vector<16x768xf32>
    %32 = arith.truncf %31 : vector<16x768xf32> to vector<16x768xbf16>
    %c0_14 = arith.constant 0 : index
    %c0_15 = arith.constant 0 : index
    %33 = vector.load %arg6[%c0_14, %c0_15] : memref<16x768xbf16, #tpu.memory_space<vmem>>, vector<16x768xbf16>
    tpu.vector_store %arg6[%c0_14, %c0_15], %32 {strides = array<i32>} : memref<16x768xbf16, #tpu.memory_space<vmem>>, vector<16x768xbf16>,
    return
  }
  func.func @transform_0(%arg0: i32) -> (i32, i32) {
    %c0_i32 = arith.constant 0 : i32
    %c0_i32_0 = arith.constant 0 : i32
    return %arg0, %c0_i32 : i32, i32
  }
  func.func @transform_1(%arg0: i32) -> (i32, i32) {
    %c0_i32 = arith.constant 0 : i32
    %c0_i32_0 = arith.constant 0 : i32
    %c0_i32_1 = arith.constant 0 : i32
    return %c0_i32, %c0_i32_0 : i32, i32
  }
  func.func @transform_2(%arg0: i32) -> (i32, i32) {
    %c0_i32 = arith.constant 0 : i32
    %c0_i32_0 = arith.constant 0 : i32
    %c0_i32_1 = arith.constant 0 : i32
    return %c0_i32, %c0_i32_0 : i32, i32
  }
  func.func @transform_3(%arg0: i32) -> (i32, i32) {
    %c0_i32 = arith.constant 0 : i32
    %c0_i32_0 = arith.constant 0 : i32
    %c0_i32_1 = arith.constant 0 : i32
    return %c0_i32, %c0_i32_0 : i32, i32
  }
  func.func @transform_4(%arg0: i32) -> (i32, i32) {
    %c0_i32 = arith.constant 0 : i32
    %c0_i32_0 = arith.constant 0 : i32
    %c0_i32_1 = arith.constant 0 : i32
    return %c0_i32, %c0_i32_0 : i32, i32
  }
  func.func @transform_5(%arg0: i32) -> (i32, i32) {
    %c0_i32 = arith.constant 0 : i32
    %c0_i32_0 = arith.constant 0 : i32
    return %arg0, %c0_i32 : i32, i32
  }
}

module attributes {stable_mosaic.version = 11 : i64} {
  func.func @_ff_kernel(%arg0: i32, %arg1: memref<16x256xbf16, #tpu.memory_space<vmem>>, %arg2: memref<1x256xf32, #tpu.memory_space<vmem>>, %arg3: memref<1x256xf32, #tpu.memory_space<vmem>>, %arg4: memref<256x1024xbf16, #tpu.memory_space<vmem>>, %arg5: memref<1x1024xf32, #tpu.memory_space<vmem>>, %arg6: memref<1024x256xbf16, #tpu.memory_space<vmem>>, %arg7: memref<1x256xf32, #tpu.memory_space<vmem>>, %arg8: memref<16x256xbf16, #tpu.memory_space<vmem>>) attributes {dimension_semantics = [#tpu.dimension_semantics<parallel>], iteration_bounds = array<i64: 1>, scalar_prefetch = 0 : i64, scratch_operands = 0 : i64, tpu.core_type = #tpu.core_type<tc>, window_params = [{transform_indices = @transform_0, window_bounds = array<i64: 16, 256>}, {pipeline_mode = #tpu.pipeline_mode<synchronous>, transform_indices = @transform_1, window_bounds = array<i64: 1, 256>}, {pipeline_mode = #tpu.pipeline_mode<synchronous>, transform_indices = @transform_2, window_bounds = array<i64: 1, 256>}, {pipeline_mode = #tpu.pipeline_mode<synchronous>, transform_indices = @transform_3, window_bounds = array<i64: 256, 1024>}, {pipeline_mode = #tpu.pipeline_mode<synchronous>, transform_indices = @transform_4, window_bounds = array<i64: 1, 1024>}, {pipeline_mode = #tpu.pipeline_mode<synchronous>, transform_indices = @transform_5, window_bounds = array<i64: 1024, 256>}, {pipeline_mode = #tpu.pipeline_mode<synchronous>, transform_indices = @transform_6, window_bounds = array<i64: 1, 256>}, {transform_indices = @transform_7, window_bounds = array<i64: 16, 256>}]} {
    %c0 = arith.constant 0 : index
    %c0_0 = arith.constant 0 : index
    %0 = vector.load %arg1[%c0, %c0_0] : memref<16x256xbf16, #tpu.memory_space<vmem>>, vector<16x256xbf16>
    %1 = arith.extf %0 : vector<16x256xbf16> to vector<16x256xf32>
    %c0_1 = arith.constant 0 : index
    %c0_2 = arith.constant 0 : index
    %2 = vector.load %arg2[%c0_1, %c0_2] : memref<1x256xf32, #tpu.memory_space<vmem>>, vector<1x256xf32>
    %c0_3 = arith.constant 0 : index
    %c0_4 = arith.constant 0 : index
    %3 = vector.load %arg3[%c0_3, %c0_4] : memref<1x256xf32, #tpu.memory_space<vmem>>, vector<1x256xf32>
    %cst = arith.constant dense<0.000000e+00> : vector<16xf32>
    %4 = vector.multi_reduction <add>, %1, %cst [1] : vector<16x256xf32> to vector<16xf32>
    %5 = vector.shape_cast %4 : vector<16xf32> to vector<16x1xf32>
    %cst_5 = arith.constant 2.560000e+02 : f32
    %6 = vector.broadcast %cst_5 : f32 to vector<16x1xf32>
    %7 = arith.divf %5, %6 : vector<16x1xf32>
    %8 = vector.broadcast %7 : vector<16x1xf32> to vector<16x256xf32>
    %9 = arith.subf %1, %8 : vector<16x256xf32>
    %10 = arith.mulf %9, %9 : vector<16x256xf32>
    %cst_6 = arith.constant dense<0.000000e+00> : vector<16xf32>
    %11 = vector.multi_reduction <add>, %10, %cst_6 [1] : vector<16x256xf32> to vector<16xf32>
    %12 = vector.shape_cast %11 : vector<16xf32> to vector<16x1xf32>
    %cst_7 = arith.constant 2.560000e+02 : f32
    %13 = vector.broadcast %cst_7 : f32 to vector<16x1xf32>
    %14 = arith.divf %12, %13 : vector<16x1xf32>
    %15 = vector.broadcast %7 : vector<16x1xf32> to vector<16x256xf32>
    %16 = arith.subf %1, %15 : vector<16x256xf32>
    %cst_8 = arith.constant 9.99999996E-13 : f32
    %17 = vector.broadcast %cst_8 : f32 to vector<16x1xf32>
    %18 = arith.addf %14, %17 : vector<16x1xf32>
    %19 = math.rsqrt %18 : vector<16x1xf32>
    %20 = vector.broadcast %19 : vector<16x1xf32> to vector<16x256xf32>
    %21 = arith.mulf %16, %20 : vector<16x256xf32>
    %22 = vector.broadcast %2 : vector<1x256xf32> to vector<16x256xf32>
    %23 = arith.mulf %21, %22 : vector<16x256xf32>
    %24 = vector.broadcast %3 : vector<1x256xf32> to vector<16x256xf32>
    %25 = arith.addf %23, %24 : vector<16x256xf32>
    %26 = arith.truncf %25 : vector<16x256xf32> to vector<16x256xbf16>
    %c0_9 = arith.constant 0 : index
    %c0_10 = arith.constant 0 : index
    %27 = vector.load %arg4[%c0_9, %c0_10] : memref<256x1024xbf16, #tpu.memory_space<vmem>>, vector<256x1024xbf16>
    %cst_11 = arith.constant dense<0.000000e+00> : vector<16x1024xf32>
    %28 = tpu.matmul %26, %27, %cst_11 {dimension_numbers = #tpu.dot_dimension_numbers<[1], [0], [0], [1], [0, 0, 1, 1], [], []>} : vector<16x256xbf16>, vector<256x1024xbf16>, vector<16x1024xf32> -> vector<16x1024xf32>
    %c0_12 = arith.constant 0 : index
    %c0_13 = arith.constant 0 : index
    %29 = vector.load %arg5[%c0_12, %c0_13] : memref<1x1024xf32, #tpu.memory_space<vmem>>, vector<1x1024xf32>
    %30 = vector.broadcast %29 : vector<1x1024xf32> to vector<16x1024xf32>
    %31 = arith.addf %28, %30 : vector<16x1024xf32>
    %cst_14 = arith.constant 0.000000e+00 : f32
    %32 = vector.broadcast %cst_14 : f32 to vector<16x1024xf32>
    %33 = arith.maximumf %31, %32 : vector<16x1024xf32>
    %34 = arith.truncf %33 : vector<16x1024xf32> to vector<16x1024xbf16>
    %c0_15 = arith.constant 0 : index
    %c0_16 = arith.constant 0 : index
    %35 = vector.load %arg6[%c0_15, %c0_16] : memref<1024x256xbf16, #tpu.memory_space<vmem>>, vector<1024x256xbf16>
    %cst_17 = arith.constant dense<0.000000e+00> : vector<16x256xf32>
    %36 = tpu.matmul %34, %35, %cst_17 {dimension_numbers = #tpu.dot_dimension_numbers<[1], [0], [0], [1], [0, 0, 1, 1], [], []>} : vector<16x1024xbf16>, vector<1024x256xbf16>, vector<16x256xf32> -> vector<16x256xf32>
    %c0_18 = arith.constant 0 : index
    %c0_19 = arith.constant 0 : index
    %37 = vector.load %arg7[%c0_18, %c0_19] : memref<1x256xf32, #tpu.memory_space<vmem>>, vector<1x256xf32>
    %38 = vector.broadcast %37 : vector<1x256xf32> to vector<16x256xf32>
    %39 = arith.addf %36, %38 : vector<16x256xf32>
    %40 = arith.addf %39, %1 : vector<16x256xf32>
    %41 = arith.truncf %40 : vector<16x256xf32> to vector<16x256xbf16>
    %c0_20 = arith.constant 0 : index
    %c0_21 = arith.constant 0 : index
    %42 = vector.load %arg8[%c0_20, %c0_21] : memref<16x256xbf16, #tpu.memory_space<vmem>>, vector<16x256xbf16>
    tpu.vector_store %arg8[%c0_20, %c0_21], %41 {strides = array<i32>} : memref<16x256xbf16, #tpu.memory_space<vmem>>, vector<16x256xbf16>,
    return
  }
  func.func @transform_0(%arg0: i32) -> (i32, i32) {
    %c0_i32 = arith.constant 0 : i32
    %c0_i32_0 = arith.constant 0 : i32
    return %arg0, %c0_i32 : i32, i32
  }
  func.func @transform_1(%arg0: i32) -> (i32, i32) {
    %c0_i32 = arith.constant 0 : i32
    %c0_i32_0 = arith.constant 0 : i32
    %c0_i32_1 = arith.constant 0 : i32
    return %c0_i32, %c0_i32_0 : i32, i32
  }
  func.func @transform_2(%arg0: i32) -> (i32, i32) {
    %c0_i32 = arith.constant 0 : i32
    %c0_i32_0 = arith.constant 0 : i32
    %c0_i32_1 = arith.constant 0 : i32
    return %c0_i32, %c0_i32_0 : i32, i32
  }
  func.func @transform_3(%arg0: i32) -> (i32, i32) {
    %c0_i32 = arith.constant 0 : i32
    %c0_i32_0 = arith.constant 0 : i32
    %c0_i32_1 = arith.constant 0 : i32
    return %c0_i32, %c0_i32_0 : i32, i32
  }
  func.func @transform_4(%arg0: i32) -> (i32, i32) {
    %c0_i32 = arith.constant 0 : i32
    %c0_i32_0 = arith.constant 0 : i32
    %c0_i32_1 = arith.constant 0 : i32
    return %c0_i32, %c0_i32_0 : i32, i32
  }
  func.func @transform_5(%arg0: i32) -> (i32, i32) {
    %c0_i32 = arith.constant 0 : i32
    %c0_i32_0 = arith.constant 0 : i32
    %c0_i32_1 = arith.constant 0 : i32
    return %c0_i32, %c0_i32_0 : i32, i32
  }
  func.func @transform_6(%arg0: i32) -> (i32, i32) {
    %c0_i32 = arith.constant 0 : i32
    %c0_i32_0 = arith.constant 0 : i32
    %c0_i32_1 = arith.constant 0 : i32
    return %c0_i32, %c0_i32_0 : i32, i32
  }
  func.func @transform_7(%arg0: i32) -> (i32, i32) {
    %c0_i32 = arith.constant 0 : i32
    %c0_i32_0 = arith.constant 0 : i32
    return %arg0, %c0_i32 : i32, i32
  }
}

module attributes {stable_mosaic.version = 11 : i64} {
  func.func @_pool_head_kernel(%arg0: i32, %arg1: memref<8x256xbf16, #tpu.memory_space<vmem>>, %arg2: memref<1x256xf32, #tpu.memory_space<vmem>>, %arg3: memref<1x256xf32, #tpu.memory_space<vmem>>, %arg4: memref<256x128xf32, #tpu.memory_space<vmem>>, %arg5: memref<1x128xf32, #tpu.memory_space<vmem>>, %arg6: memref<128x128xf32, #tpu.memory_space<vmem>>, %arg7: memref<1x128xf32, #tpu.memory_space<vmem>>, %arg8: memref<1x1x128xf32, #tpu.memory_space<vmem>>, %arg9: memref<1x1x128xf32, #tpu.memory_space<vmem>>) attributes {dimension_semantics = [#tpu.dimension_semantics<parallel>], iteration_bounds = array<i64: 2>, scalar_prefetch = 0 : i64, scratch_operands = 0 : i64, tpu.core_type = #tpu.core_type<tc>, window_params = [{transform_indices = @transform_0, window_bounds = array<i64: 8, 256>}, {pipeline_mode = #tpu.pipeline_mode<synchronous>, transform_indices = @transform_1, window_bounds = array<i64: 1, 256>}, {pipeline_mode = #tpu.pipeline_mode<synchronous>, transform_indices = @transform_2, window_bounds = array<i64: 1, 256>}, {pipeline_mode = #tpu.pipeline_mode<synchronous>, transform_indices = @transform_3, window_bounds = array<i64: 256, 128>}, {pipeline_mode = #tpu.pipeline_mode<synchronous>, transform_indices = @transform_4, window_bounds = array<i64: 1, 128>}, {pipeline_mode = #tpu.pipeline_mode<synchronous>, transform_indices = @transform_5, window_bounds = array<i64: 128, 128>}, {pipeline_mode = #tpu.pipeline_mode<synchronous>, transform_indices = @transform_6, window_bounds = array<i64: 1, 128>}, {transform_indices = @transform_7, window_bounds = array<i64: 1, 1, 128>}, {transform_indices = @transform_8, window_bounds = array<i64: 1, 1, 128>}]} {
    %c0 = arith.constant 0 : index
    %c0_0 = arith.constant 0 : index
    %0 = vector.load %arg1[%c0, %c0_0] : memref<8x256xbf16, #tpu.memory_space<vmem>>, vector<8x256xbf16>
    %1 = arith.extf %0 : vector<8x256xbf16> to vector<8x256xf32>
    %c0_1 = arith.constant 0 : index
    %c0_2 = arith.constant 0 : index
    %2 = vector.load %arg2[%c0_1, %c0_2] : memref<1x256xf32, #tpu.memory_space<vmem>>, vector<1x256xf32>
    %c0_3 = arith.constant 0 : index
    %c0_4 = arith.constant 0 : index
    %3 = vector.load %arg3[%c0_3, %c0_4] : memref<1x256xf32, #tpu.memory_space<vmem>>, vector<1x256xf32>
    %cst = arith.constant dense<0.000000e+00> : vector<8xf32>
    %4 = vector.multi_reduction <add>, %1, %cst [1] : vector<8x256xf32> to vector<8xf32>
    %5 = vector.shape_cast %4 : vector<8xf32> to vector<8x1xf32>
    %cst_5 = arith.constant 2.560000e+02 : f32
    %6 = vector.broadcast %cst_5 : f32 to vector<8x1xf32>
    %7 = arith.divf %5, %6 : vector<8x1xf32>
    %8 = vector.broadcast %7 : vector<8x1xf32> to vector<8x256xf32>
    %9 = arith.subf %1, %8 : vector<8x256xf32>
    %10 = arith.mulf %9, %9 : vector<8x256xf32>
    %cst_6 = arith.constant dense<0.000000e+00> : vector<8xf32>
    %11 = vector.multi_reduction <add>, %10, %cst_6 [1] : vector<8x256xf32> to vector<8xf32>
    %12 = vector.shape_cast %11 : vector<8xf32> to vector<8x1xf32>
    %cst_7 = arith.constant 2.560000e+02 : f32
    %13 = vector.broadcast %cst_7 : f32 to vector<8x1xf32>
    %14 = arith.divf %12, %13 : vector<8x1xf32>
    %15 = vector.broadcast %7 : vector<8x1xf32> to vector<8x256xf32>
    %16 = arith.subf %1, %15 : vector<8x256xf32>
    %cst_8 = arith.constant 9.99999996E-13 : f32
    %17 = vector.broadcast %cst_8 : f32 to vector<8x1xf32>
    %18 = arith.addf %14, %17 : vector<8x1xf32>
    %19 = math.rsqrt %18 : vector<8x1xf32>
    %20 = vector.broadcast %19 : vector<8x1xf32> to vector<8x256xf32>
    %21 = arith.mulf %16, %20 : vector<8x256xf32>
    %22 = vector.broadcast %2 : vector<1x256xf32> to vector<8x256xf32>
    %23 = arith.mulf %21, %22 : vector<8x256xf32>
    %24 = vector.broadcast %3 : vector<1x256xf32> to vector<8x256xf32>
    %25 = arith.addf %23, %24 : vector<8x256xf32>
    %26 = tpu.iota {dimensions = array<i32: 0>} : vector<8x1xi32>
    %c8_i32 = arith.constant 8 : i32
    %27 = vector.broadcast %c8_i32 : i32 to vector<8x1xi32>
    %28 = arith.cmpi slt, %26, %27 : vector<8x1xi32>
    %29 = arith.extui %28 : vector<8x1xi1> to vector<8x1xi32>
    %30 = arith.sitofp %29 : vector<8x1xi32> to vector<8x1xf32>
    %31 = vector.broadcast %30 : vector<8x1xf32> to vector<8x256xf32>
    %32 = arith.mulf %25, %31 : vector<8x256xf32>
    %cst_9 = arith.constant dense<0.000000e+00> : vector<256xf32>
    %33 = vector.multi_reduction <add>, %32, %cst_9 [0] : vector<8x256xf32> to vector<256xf32>
    %34 = vector.shape_cast %33 : vector<256xf32> to vector<1x256xf32>
    %cst_10 = arith.constant 1.250000e-01 : f32
    %35 = vector.broadcast %cst_10 : f32 to vector<1x256xf32>
    %36 = arith.mulf %34, %35 : vector<1x256xf32>
    %c0_11 = arith.constant 0 : index
    %c0_12 = arith.constant 0 : index
    %37 = vector.load %arg4[%c0_11, %c0_12] : memref<256x128xf32, #tpu.memory_space<vmem>>, vector<256x128xf32>
    %cst_13 = arith.constant dense<0.000000e+00> : vector<1x128xf32>
    %38 = tpu.matmul %36, %37, %cst_13 {dimension_numbers = #tpu.dot_dimension_numbers<[1], [0], [0], [1], [0, 0, 1, 1], [], []>} : vector<1x256xf32>, vector<256x128xf32>, vector<1x128xf32> -> vector<1x128xf32>
    %c0_14 = arith.constant 0 : index
    %c0_15 = arith.constant 0 : index
    %39 = vector.load %arg5[%c0_14, %c0_15] : memref<1x128xf32, #tpu.memory_space<vmem>>, vector<1x128xf32>
    %40 = arith.addf %38, %39 : vector<1x128xf32>
    %c0_16 = arith.constant 0 : index
    %c0_17 = arith.constant 0 : index
    %41 = vector.load %arg6[%c0_16, %c0_17] : memref<128x128xf32, #tpu.memory_space<vmem>>, vector<128x128xf32>
    %cst_18 = arith.constant dense<0.000000e+00> : vector<1x128xf32>
    %42 = tpu.matmul %40, %41, %cst_18 {dimension_numbers = #tpu.dot_dimension_numbers<[1], [0], [0], [1], [0, 0, 1, 1], [], []>} : vector<1x128xf32>, vector<128x128xf32>, vector<1x128xf32> -> vector<1x128xf32>
    %c0_19 = arith.constant 0 : index
    %c0_20 = arith.constant 0 : index
    %43 = vector.load %arg7[%c0_19, %c0_20] : memref<1x128xf32, #tpu.memory_space<vmem>>, vector<1x128xf32>
    %44 = arith.addf %42, %43 : vector<1x128xf32>
    %c0_21 = arith.constant 0 : index
    %c0_22 = arith.constant 0 : index
    %c0_23 = arith.constant 0 : index
    %45 = vector.load %arg9[%c0_21, %c0_22, %c0_23] : memref<1x1x128xf32, #tpu.memory_space<vmem>>, vector<1x1x128xf32>
    %46 = vector.shape_cast %45 : vector<1x1x128xf32> to vector<1x128xf32>
    %47 = vector.shape_cast %40 : vector<1x128xf32> to vector<1x1x128xf32>
    tpu.vector_store %arg9[%c0_21, %c0_22, %c0_23], %47 {strides = array<i32>} : memref<1x1x128xf32, #tpu.memory_space<vmem>>, vector<1x1x128xf32>,
    %c0_24 = arith.constant 0 : index
    %c0_25 = arith.constant 0 : index
    %c0_26 = arith.constant 0 : index
    %48 = vector.load %arg8[%c0_24, %c0_25, %c0_26] : memref<1x1x128xf32, #tpu.memory_space<vmem>>, vector<1x1x128xf32>
    %49 = vector.shape_cast %48 : vector<1x1x128xf32> to vector<1x128xf32>
    %50 = vector.shape_cast %44 : vector<1x128xf32> to vector<1x1x128xf32>
    tpu.vector_store %arg8[%c0_24, %c0_25, %c0_26], %50 {strides = array<i32>} : memref<1x1x128xf32, #tpu.memory_space<vmem>>, vector<1x1x128xf32>,
    return
  }
  func.func @transform_0(%arg0: i32) -> (i32, i32) {
    %c0_i32 = arith.constant 0 : i32
    %c0_i32_0 = arith.constant 0 : i32
    return %arg0, %c0_i32 : i32, i32
  }
  func.func @transform_1(%arg0: i32) -> (i32, i32) {
    %c0_i32 = arith.constant 0 : i32
    %c0_i32_0 = arith.constant 0 : i32
    %c0_i32_1 = arith.constant 0 : i32
    return %c0_i32, %c0_i32_0 : i32, i32
  }
  func.func @transform_2(%arg0: i32) -> (i32, i32) {
    %c0_i32 = arith.constant 0 : i32
    %c0_i32_0 = arith.constant 0 : i32
    %c0_i32_1 = arith.constant 0 : i32
    return %c0_i32, %c0_i32_0 : i32, i32
  }
  func.func @transform_3(%arg0: i32) -> (i32, i32) {
    %c0_i32 = arith.constant 0 : i32
    %c0_i32_0 = arith.constant 0 : i32
    %c0_i32_1 = arith.constant 0 : i32
    return %c0_i32, %c0_i32_0 : i32, i32
  }
  func.func @transform_4(%arg0: i32) -> (i32, i32) {
    %c0_i32 = arith.constant 0 : i32
    %c0_i32_0 = arith.constant 0 : i32
    %c0_i32_1 = arith.constant 0 : i32
    return %c0_i32, %c0_i32_0 : i32, i32
  }
  func.func @transform_5(%arg0: i32) -> (i32, i32) {
    %c0_i32 = arith.constant 0 : i32
    %c0_i32_0 = arith.constant 0 : i32
    %c0_i32_1 = arith.constant 0 : i32
    return %c0_i32, %c0_i32_0 : i32, i32
  }
  func.func @transform_6(%arg0: i32) -> (i32, i32) {
    %c0_i32 = arith.constant 0 : i32
    %c0_i32_0 = arith.constant 0 : i32
    %c0_i32_1 = arith.constant 0 : i32
    return %c0_i32, %c0_i32_0 : i32, i32
  }
  func.func @transform_7(%arg0: i32) -> (i32, i32, i32) {
    %c0_i32 = arith.constant 0 : i32
    %c0_i32_0 = arith.constant 0 : i32
    %c0_i32_1 = arith.constant 0 : i32
    return %arg0, %c0_i32, %c0_i32_0 : i32, i32, i32
  }
  func.func @transform_8(%arg0: i32) -> (i32, i32, i32) {
    %c0_i32 = arith.constant 0 : i32
    %c0_i32_0 = arith.constant 0 : i32
    %c0_i32_1 = arith.constant 0 : i32
    return %arg0, %c0_i32, %c0_i32_0 : i32, i32, i32
  }
}

</mosaic_0001>

<llo_original>
// kernel: dialog_acts_predictor_forward.11
$region0: #{dialog_acts_predictor_forward.11}
  #allocation0 [shape = 'u32[]', space=smem, size = 0x4, offset = 0x4, fixed_abs, tag = 'smem constant byte address 0x4 - core index']
  #allocation1 [shape = 'u32[144,128]{1,0:T(1,128)}', space=vmem, size = 0x12000, scoped, tag = 'internal scratch']
  %s0 = inlined_call_operand.vmem [shape: bf16[2,8,32], index: 0, kind: input, shape index: {}]
  %s1 = inlined_call_operand.vmem [shape: bf16[32,256], index: 1, kind: input, shape index: {}]
  %s2 = inlined_call_operand.vmem [shape: f32[8,256], index: 2, kind: input, shape index: {}]
  %s3 = inlined_call_operand.vmem [shape: bf16[2,8,256], index: 3, kind: output, shape index: {}]
  %s4 = sld [smem:[#allocation0]]
  $region45: #{dialog_acts_predictor_forward.11} parent=0
    _
  %s6 = ssub.s32 1, %s4
  %s7 = scalar_select 0, %s6, %s4
  loop: start=0, step=1, limit=4
  $region2: #{dialog_acts_predictor_forward.11} parent=0 // loop_pre_header
    _
  $region3: #{dialog_acts_predictor_forward.11} parent=0 // loop_header
    %s9 = sphi 0, %s13
    %p10 = scmp.ge.s32.totalorder %s9, 4
    %s19 = sphi 0, %s21
    %s22 = sphi 0, %s19
    %s23 = sphi 0, %s22
    %s39 = sphi 0, %s23
    %s43 = sphi 0, %s43
    %s45 = sphi 0, %s43
    %s46 = sphi 0, %s45
    %s60 = sphi 0, %s46
    %s64 = sphi 0, %s64
    %s66 = sphi 0, %s64
    %s67 = sphi 0, %s66
    %s81 = sphi 0, %s67
    %s87 = sphi 0, %s89
    %s90 = sphi 0, %s87
    %s91 = sphi 0, %s90
    %s107 = sphi 0, %s91
  $region4: #{dialog_acts_predictor_forward.11} parent=0 // loop_header_branch
    %12 = sbr.rel (%p10) target = $region8
  $region5: #{dialog_acts_predictor_forward.11} parent=0 // loop_body
    %s14 = ssub.s32 %s9, 1
    %s15 = ssub.s32 %s9, 2
    %s16 = sadd.s32 %s9, 1
    %s17 = ssub.s32 %s9, %s16
    %p18 = scmp.eq.s32.totalorder %s17, 0
    %s20 = sadd.s32 %s19, 1
    %s21 = scalar_select %p18, %s19, %s20
    %p24 = pneg %p18
    %p25 = scmp.eq.s32.totalorder %s9, 1
    %p26 = por %p24, %p25
    %p27 = scmp.ne.s32.totalorder %s19, %s22
    %p28 = scmp.eq.s32.totalorder %s9, 0
    %p29 = por %p27, %p28
    %p30 = scmp.ne.s32.totalorder %s19, %s22
    %p31 = scmp.eq.s32.totalorder %s14, 1
    %p32 = por %p30, %p31
    %p33 = scmp.ne.s32.totalorder %s22, %s23
    %p34 = scmp.eq.s32.totalorder %s14, 0
    %p35 = por %p33, %p34
    %p36 = scmp.ne.s32.totalorder %s22, %s23
    %p37 = scmp.eq.s32.totalorder %s15, 1
    %p38 = por %p36, %p37
    %p40 = scmp.ne.s32.totalorder %s23, %s39
    %p41 = scmp.eq.s32.totalorder %s15, 0
    %p42 = por %p40, %p41
    %s44 = sadd.s32 %s43, 1
    %p47 = scmp.eq.s32.totalorder %s9, 1
    %p48 = scmp.ne.s32.totalorder %s43, %s45
    %p49 = scmp.eq.s32.totalorder %s9, 0
    %p50 = por %p48, %p49
    %p51 = scmp.ne.s32.totalorder %s43, %s45
    %p52 = scmp.eq.s32.totalorder %s14, 1
    %p53 = por %p51, %p52
    %p54 = scmp.ne.s32.totalorder %s45, %s46
    %p55 = scmp.eq.s32.totalorder %s14, 0
    %p56 = por %p54, %p55
    %p57 = scmp.ne.s32.totalorder %s45, %s46
    %p58 = scmp.eq.s32.totalorder %s15, 1
    %p59 = por %p57, %p58
    %p61 = scmp.ne.s32.totalorder %s46, %s60
    %p62 = scmp.eq.s32.totalorder %s15, 0
    %p63 = por %p61, %p62
    %s65 = sadd.s32 %s64, 1
    %p68 = scmp.eq.s32.totalorder %s9, 1
    %p69 = scmp.ne.s32.totalorder %s64, %s66
    %p70 = scmp.eq.s32.totalorder %s9, 0
    %p71 = por %p69, %p70
    %p72 = scmp.ne.s32.totalorder %s64, %s66
    %p73 = scmp.eq.s32.totalorder %s14, 1
    %p74 = por %p72, %p73
    %p75 = scmp.ne.s32.totalorder %s66, %s67
    %p76 = scmp.eq.s32.totalorder %s14, 0
    %p77 = por %p75, %p76
    %p78 = scmp.ne.s32.totalorder %s66, %s67
    %p79 = scmp.eq.s32.totalorder %s15, 1
    %p80 = por %p78, %p79
    %p82 = scmp.ne.s32.totalorder %s67, %s81
    %p83 = scmp.eq.s32.totalorder %s15, 0
    %p84 = por %p82, %p83
    %s85 = ssub.s32 %s9, %s16
    %p86 = scmp.eq.s32.totalorder %s85, 0
    %s88 = sadd.s32 %s87, 1
    %s89 = scalar_select %p86, %s87, %s88
    %p92 = pneg %p86
    %p93 = scmp.eq.s32.totalorder %s9, 1
    %p94 = por %p92, %p93
    %p95 = scmp.ne.s32.totalorder %s87, %s90
    %p96 = scmp.eq.s32.totalorder %s9, 0
    %p97 = por %p95, %p96
    %p98 = scmp.ne.s32.totalorder %s87, %s90
    %p99 = scmp.eq.s32.totalorder %s14, 1
    %p100 = por %p98, %p99
    %p101 = scmp.ne.s32.totalorder %s90, %s91
    %p102 = scmp.eq.s32.totalorder %s14, 0
    %p103 = por %p101, %p102
    %p104 = scmp.ne.s32.totalorder %s90, %s91
    %p105 = scmp.eq.s32.totalorder %s15, 1
    %p106 = por %p104, %p105
    %p108 = scmp.ne.s32.totalorder %s91, %s107
    %p109 = scmp.eq.s32.totalorder %s15, 0
    %p110 = por %p108, %p109
    %p111 = scmp.le.s32.totalorder 1, %s9
    %p112 = scmp.lt.s32.totalorder %s9, 3
    %p113 = pnand %p111, %p112
    %p114 = pneg %p113
    // Predicated region
    $region9: #{dialog_acts_predictor_forward.11} parent=5 // pred_check
      _
    $region10: #{dialog_acts_predictor_forward.11} parent=5 // pred_check_branch
      %116 = sbr.rel (%p113) target = $region12
    $region11: #{dialog_acts_predictor_forward.11} parent=5 // pred_region
      %s117 = ssub.s32 %s9, 1
      // Predicated region
      $region13: #{dialog_acts_predictor_forward.11} parent=11 // pred_check
        %p118 = pneg %p56
      $region14: #{dialog_acts_predictor_forward.11} parent=11 // pred_check_branch
        %120 = sbr.rel (%p118) target = $region16
      $region15: #{dialog_acts_predictor_forward.11} parent=11 // pred_region
        _
      $region16: #{dialog_acts_predictor_forward.11} parent=11 // pred_fallthru
        _
      // Predicated region
      $region17: #{dialog_acts_predictor_forward.11} parent=11 // pred_check
        %p121 = pneg %p77
      $region18: #{dialog_acts_predictor_forward.11} parent=11 // pred_check_branch
        %123 = sbr.rel (%p121) target = $region20
      $region19: #{dialog_acts_predictor_forward.11} parent=11 // pred_region
        _
      $region20: #{dialog_acts_predictor_forward.11} parent=11 // pred_fallthru
        _
    $region12: #{dialog_acts_predictor_forward.11} parent=5 // pred_fallthru
      _
    %p124 = scmp.lt.s32.totalorder %s9, 2
    // Predicated region
    $region21: #{dialog_acts_predictor_forward.11} parent=5 // pred_check
      %p125 = pneg %p124
    $region22: #{dialog_acts_predictor_forward.11} parent=5 // pred_check_branch
      %127 = sbr.rel (%p125) target = $region24
    $region23: #{dialog_acts_predictor_forward.11} parent=5 // pred_region
      // Predicated region
      $region25: #{dialog_acts_predictor_forward.11} parent=23 // pred_check
        %p128 = pneg %p29
      $region26: #{dialog_acts_predictor_forward.11} parent=23 // pred_check_branch
        %130 = sbr.rel (%p128) target = $region28
      $region27: #{dialog_acts_predictor_forward.11} parent=23 // pred_region
        %p131 = scmp.lt.s32.totalorder %s9, 1
        %s132 = scalar_select %p131, %s9, 1
        %s133 = smul.addr %s132, 4
        %s134 = scalar_lea.vmem %s0, %s133
      $region28: #{dialog_acts_predictor_forward.11} parent=23 // pred_fallthru
        _
    $region24: #{dialog_acts_predictor_forward.11} parent=5 // pred_fallthru
      _
    %p135 = scmp.le.s32.totalorder 1, %s9
    %p136 = scmp.lt.s32.totalorder %s9, 3
    %p137 = pnand %p135, %p136
    %p138 = pneg %p137
    // Predicated region
    $region29: #{dialog_acts_predictor_forward.11} parent=5 // pred_check
      _
    $region30: #{dialog_acts_predictor_forward.11} parent=5 // pred_check_branch
      %140 = sbr.rel (%p137) target = $region32
    $region31: #{dialog_acts_predictor_forward.11} parent=5 // pred_region
      %s141 = ssub.s32 %s9, 1
      %p142 = scmp.lt.s32.totalorder %s14, 1
      %s143 = scalar_select %p142, %s14, 1
      %s144 = smul.addr %s143, 4
      %s145 = scalar_lea.vmem %s0, %s144
      %p146 = pneg %p35
      %p147 = pneg %p32
      %p148 = pneg %p56
      %p149 = pneg %p53
      %p150 = pneg %p77
      %p151 = pneg %p74
      %p152 = pneg %p103
      %p153 = pneg %p100
      %p154 = scmp.lt.s32.totalorder %s14, 1
      %s155 = scalar_select %p154, %s14, 1
      %s156 = smul.addr %s155, 2
      %s157 = smul.addr %s156, 4
      %s158 = scalar_lea.vmem %s3, %s157
      %p159 = scmp.lt.s32.totalorder %s14, 1
      %s160 = scalar_select %p159, %s14, 1
      %s161 = smul.addr %s160, 4
      %s162 = scalar_lea.vmem %s0, %s161
      %p163 = scmp.lt.s32.totalorder %s14, 1
      %s164 = scalar_select %p163, %s14, 1
      %s165 = smul.addr %s164, 2
      %s166 = smul.addr %s165, 4
      %s167 = scalar_lea.vmem %s3, %s166
      %v169 = vld [vmem:[%s162] sm:$0xf]
      %v170 = vld [vmem:[%s1] sm:$0xff]
      %v171 = vld [vmem:[%s1 + $0x8] sm:$0xff]
      %v172 = vld [vmem:[%s1 + $0x10] sm:$0xff]
      %v173 = vld [vmem:[%s1 + $0x18] sm:$0xff]
      %v174 = vld [vmem:[%s2] sm:$0xff]
      %v175 = vld [vmem:[%s2 + $0x8] sm:$0xff]
      %v180 = vunpack.c.l.b16 %v170
      %v181 = vunpack.c.h.b16 %v170
      %v182 = vunpack.c.l.b16 %v171
      %v183 = vunpack.c.h.b16 %v171
      %v184 = vunpack.c.l.b16 %v172
      %v185 = vunpack.c.h.b16 %v172
      %v186 = vunpack.c.l.b16 %v173
      %v187 = vunpack.c.h.b16 %v173
      %v188 = vpack.c.b16 %v182, %v180
      %v189 = vpack.c.b16 %v183, %v181
      %v190 = vpack.c.b16 %v186, %v184
      %v191 = vpack.c.b16 %v187, %v185
      %vm196 = vcmask 261120
      %v198 = vsel %vm196, %v169, 0
      %200 = vmatprep.subr.bf16.mxu0 0
      %201 = vmatpush1.bf16.msra.mxu0 0
      %202 = vmatprep.subr.bf16.mxu0 0
      %203 = vmatpush1.bf16.msra.mxu0 0
      %204 = vmatprep.subr.bf16.mxu0 0
      %205 = vmatpush1.bf16.msra.mxu0 0
      %206 = vmatprep.subr.bf16.mxu0 0
      %207 = vmatpush1.bf16.msra.mxu0 0
      %208 = vmatprep.subr.bf16.mxu0 0
      %209 = vmatpush1.bf16.msra.mxu0 0
      %210 = vmatprep.subr.bf16.mxu0 0
      %211 = vmatpush1.bf16.msra.mxu0 0
      %212 = vmatprep.subr.bf16.mxu0 %v191
      %213 = vmatpush1.bf16.msra.mxu0 %v190
      %214 = vmatprep.subr.bf16.mxu0 %v189
      %215 = vmatpush1.bf16.msra.mxu0 %v188
      %216 = vmatprep.subr.bf16.mxu0 0
      %217 = vmatpush2.bf16.msra.mxu0 0
      %218 = vmatprep.subr.bf16.mxu0 0
      %219 = vmatpush2.bf16.msra.mxu0 0
      %220 = vmatprep.subr.bf16.mxu0 0
      %221 = vmatpush2.bf16.msra.mxu0 0
      %222 = vmatprep.subr.bf16.mxu0 0
      %223 = vmatpush2.bf16.msra.mxu0 0
      %224 = vmatprep.subr.bf16.mxu0 0
      %225 = vmatpush2.bf16.msra.mxu0 0
      %226 = vmatprep.subr.bf16.mxu0 0
      %227 = vmatpush2.bf16.msra.mxu0 0
      %228 = vmatprep.subr.bf16.mxu0 0
      %229 = vmatpush2.bf16.msra.mxu0 0
      %230 = vmatprep.subr.bf16.mxu0 0
      %231 = vmatpush2.bf16.msra.mxu0 0
      %232 = vmatprep.mubr.bf16.mxu0 0
      %233 = vmatmul.mubr.bf16.gmra.mxu0 %v198
      %v234 = vpop.f32.mrf.mxu0
      %v235 = vadd.f32 %v174, %v234
      %v236 = vpop.f32.mrf.mxu0
      %v237 = vadd.f32 %v175, %v236
      %v238 = vpop.f32.mrf.mxu0
      %v239 = vpop.f32.mrf.mxu0
      %240 = vdwg.mxu0
      %v241 = vpack.c.bf16 %v235, %v235
      %v242 = vpack.c.bf16 %v237, %v237
      %v245 = vunpack.c.l.b16 %v241
      %v246 = vunpack.c.l.b16 %v242
      %v247 = vpack.c.b16 %v246, %v245
      %249 = vst [vmem:[%s167] sm:$0xff] %v247
      %p250 = scmp.lt.s32.totalorder %s14, 1
      %s251 = scalar_select %p250, %s14, 1
      %s252 = smul.addr %s251, 2
      %s253 = smul.addr %s252, 4
      %s254 = scalar_lea.vmem %s3, %s253
      // Predicated region
      $region33: #{dialog_acts_predictor_forward.11} parent=31 // pred_check
        %p255 = pneg %p100
      $region34: #{dialog_acts_predictor_forward.11} parent=31 // pred_check_branch
        %257 = sbr.rel (%p255) target = $region36
      $region35: #{dialog_acts_predictor_forward.11} parent=31 // pred_region
        _
      $region36: #{dialog_acts_predictor_forward.11} parent=31 // pred_fallthru
        _
    $region32: #{dialog_acts_predictor_forward.11} parent=5 // pred_fallthru
      _
    %p258 = scmp.le.s32.totalorder 2, %s9
    // Predicated region
    $region37: #{dialog_acts_predictor_forward.11} parent=5 // pred_check
      %p259 = pneg %p258
    $region38: #{dialog_acts_predictor_forward.11} parent=5 // pred_check_branch
      %261 = sbr.rel (%p259) target = $region40
    $region39: #{dialog_acts_predictor_forward.11} parent=5 // pred_region
      %s262 = ssub.s32 %s9, 2
      // Predicated region
      $region41: #{dialog_acts_predictor_forward.11} parent=39 // pred_check
        %p263 = pneg %p106
      $region42: #{dialog_acts_predictor_forward.11} parent=39 // pred_check_branch
        %265 = sbr.rel (%p263) target = $region44
      $region43: #{dialog_acts_predictor_forward.11} parent=39 // pred_region
        %p266 = scmp.lt.s32.totalorder %s15, 1
        %s267 = scalar_select %p266, %s15, 1
        %s268 = smul.addr %s267, 2
        %s269 = smul.addr %s268, 4
        %s270 = scalar_lea.vmem %s3, %s269
      $region44: #{dialog_acts_predictor_forward.11} parent=39 // pred_fallthru
        _
    $region40: #{dialog_acts_predictor_forward.11} parent=5 // pred_fallthru
      _
  $region6: #{dialog_acts_predictor_forward.11} parent=0 // loop_footer
    %s13 = sadd.s32 1, %s9
  $region7: #{dialog_acts_predictor_forward.11} parent=0 // loop_footer_branch
    %8 = sbr.rel target = $region3
  $region8: #{dialog_acts_predictor_forward.11} parent=0 // loop_exit
    _

// kernel: dialog_acts_predictor_forward.13
$region0: #{dialog_acts_predictor_forward.13}
  #allocation0 [shape = 'u32[]', space=smem, size = 0x4, offset = 0x4, fixed_abs, tag = 'smem constant byte address 0x4 - core index']
  #allocation1 [shape = 'u32[144,128]{1,0:T(1,128)}', space=vmem, size = 0x12000, scoped, tag = 'internal scratch']
  %s0 = inlined_call_operand.vmem [shape: bf16[16,768], index: 0, kind: input, shape index: {}]
  %s1 = inlined_call_operand.vmem [shape: f32[2,1,8], index: 1, kind: input, shape index: {}]
  %s2 = inlined_call_operand.vmem [shape: bf16[256,256], index: 2, kind: input, shape index: {}]
  %s3 = inlined_call_operand.vmem [shape: f32[1,256], index: 3, kind: input, shape index: {}]
  %s4 = inlined_call_operand.vmem [shape: bf16[16,256], index: 4, kind: input, shape index: {}]
  %s5 = inlined_call_operand.vmem [shape: bf16[16,256], index: 5, kind: output, shape index: {}]
  %s6 = sld [smem:[#allocation0]]
  $region53: #{dialog_acts_predictor_forward.13} parent=0
    _
  %s8 = ssub.s32 1, %s6
  %s9 = scalar_select 0, %s8, %s6
  loop: start=0, step=1, limit=4
  $region2: #{dialog_acts_predictor_forward.13} parent=0 // loop_pre_header
    _
  $region3: #{dialog_acts_predictor_forward.13} parent=0 // loop_header
    %s11 = sphi 0, %s15
    %p12 = scmp.ge.s32.totalorder %s11, 4
    %s21 = sphi 0, %s23
    %s24 = sphi 0, %s21
    %s25 = sphi 0, %s24
    %s41 = sphi 0, %s25
    %s47 = sphi 0, %s49
    %s50 = sphi 0, %s47
    %s51 = sphi 0, %s50
    %s67 = sphi 0, %s51
    %s71 = sphi 0, %s71
    %s73 = sphi 0, %s71
    %s74 = sphi 0, %s73
    %s88 = sphi 0, %s74
    %s92 = sphi 0, %s92
    %s94 = sphi 0, %s92
    %s95 = sphi 0, %s94
    %s109 = sphi 0, %s95
    %s115 = sphi 0, %s117
    %s118 = sphi 0, %s115
    %s119 = sphi 0, %s118
    %s135 = sphi 0, %s119
    %s141 = sphi 0, %s143
    %s144 = sphi 0, %s141
    %s145 = sphi 0, %s144
    %s161 = sphi 0, %s145
  $region4: #{dialog_acts_predictor_forward.13} parent=0 // loop_header_branch
    %14 = sbr.rel (%p12) target = $region8
  $region5: #{dialog_acts_predictor_forward.13} parent=0 // loop_body
    %s16 = ssub.s32 %s11, 1
    %s17 = ssub.s32 %s11, 2
    %s18 = sadd.s32 %s11, 1
    %s19 = ssub.s32 %s11, %s18
    %p20 = scmp.eq.s32.totalorder %s19, 0
    %s22 = sadd.s32 %s21, 1
    %s23 = scalar_select %p20, %s21, %s22
    %p26 = pneg %p20
    %p27 = scmp.eq.s32.totalorder %s11, 1
    %p28 = por %p26, %p27
    %p29 = scmp.ne.s32.totalorder %s21, %s24
    %p30 = scmp.eq.s32.totalorder %s11, 0
    %p31 = por %p29, %p30
    %p32 = scmp.ne.s32.totalorder %s21, %s24
    %p33 = scmp.eq.s32.totalorder %s16, 1
    %p34 = por %p32, %p33
    %p35 = scmp.ne.s32.totalorder %s24, %s25
    %p36 = scmp.eq.s32.totalorder %s16, 0
    %p37 = por %p35, %p36
    %p38 = scmp.ne.s32.totalorder %s24, %s25
    %p39 = scmp.eq.s32.totalorder %s17, 1
    %p40 = por %p38, %p39
    %p42 = scmp.ne.s32.totalorder %s25, %s41
    %p43 = scmp.eq.s32.totalorder %s17, 0
    %p44 = por %p42, %p43
    %s45 = ssub.s32 %s11, %s18
    %p46 = scmp.eq.s32.totalorder %s45, 0
    %s48 = sadd.s32 %s47, 1
    %s49 = scalar_select %p46, %s47, %s48
    %p52 = pneg %p46
    %p53 = scmp.eq.s32.totalorder %s11, 1
    %p54 = por %p52, %p53
    %p55 = scmp.ne.s32.totalorder %s47, %s50
    %p56 = scmp.eq.s32.totalorder %s11, 0
    %p57 = por %p55, %p56
    %p58 = scmp.ne.s32.totalorder %s47, %s50
    %p59 = scmp.eq.s32.totalorder %s16, 1
    %p60 = por %p58, %p59
    %p61 = scmp.ne.s32.totalorder %s50, %s51
    %p62 = scmp.eq.s32.totalorder %s16, 0
    %p63 = por %p61, %p62
    %p64 = scmp.ne.s32.totalorder %s50, %s51
    %p65 = scmp.eq.s32.totalorder %s17, 1
    %p66 = por %p64, %p65
    %p68 = scmp.ne.s32.totalorder %s51, %s67
    %p69 = scmp.eq.s32.totalorder %s17, 0
    %p70 = por %p68, %p69
    %s72 = sadd.s32 %s71, 1
    %p75 = scmp.eq.s32.totalorder %s11, 1
    %p76 = scmp.ne.s32.totalorder %s71, %s73
    %p77 = scmp.eq.s32.totalorder %s11, 0
    %p78 = por %p76, %p77
    %p79 = scmp.ne.s32.totalorder %s71, %s73
    %p80 = scmp.eq.s32.totalorder %s16, 1
    %p81 = por %p79, %p80
    %p82 = scmp.ne.s32.totalorder %s73, %s74
    %p83 = scmp.eq.s32.totalorder %s16, 0
    %p84 = por %p82, %p83
    %p85 = scmp.ne.s32.totalorder %s73, %s74
    %p86 = scmp.eq.s32.totalorder %s17, 1
    %p87 = por %p85, %p86
    %p89 = scmp.ne.s32.totalorder %s74, %s88
    %p90 = scmp.eq.s32.totalorder %s17, 0
    %p91 = por %p89, %p90
    %s93 = sadd.s32 %s92, 1
    %p96 = scmp.eq.s32.totalorder %s11, 1
    %p97 = scmp.ne.s32.totalorder %s92, %s94
    %p98 = scmp.eq.s32.totalorder %s11, 0
    %p99 = por %p97, %p98
    %p100 = scmp.ne.s32.totalorder %s92, %s94
    %p101 = scmp.eq.s32.totalorder %s16, 1
    %p102 = por %p100, %p101
    %p103 = scmp.ne.s32.totalorder %s94, %s95
    %p104 = scmp.eq.s32.totalorder %s16, 0
    %p105 = por %p103, %p104
    %p106 = scmp.ne.s32.totalorder %s94, %s95
    %p107 = scmp.eq.s32.totalorder %s17, 1
    %p108 = por %p106, %p107
    %p110 = scmp.ne.s32.totalorder %s95, %s109
    %p111 = scmp.eq.s32.totalorder %s17, 0
    %p112 = por %p110, %p111
    %s113 = ssub.s32 %s11, %s18
    %p114 = scmp.eq.s32.totalorder %s113, 0
    %s116 = sadd.s32 %s115, 1
    %s117 = scalar_select %p114, %s115, %s116
    %p120 = pneg %p114
    %p121 = scmp.eq.s32.totalorder %s11, 1
    %p122 = por %p120, %p121
    %p123 = scmp.ne.s32.totalorder %s115, %s118
    %p124 = scmp.eq.s32.totalorder %s11, 0
    %p125 = por %p123, %p124
    %p126 = scmp.ne.s32.totalorder %s115, %s118
    %p127 = scmp.eq.s32.totalorder %s16, 1
    %p128 = por %p126, %p127
    %p129 = scmp.ne.s32.totalorder %s118, %s119
    %p130 = scmp.eq.s32.totalorder %s16, 0
    %p131 = por %p129, %p130
    %p132 = scmp.ne.s32.totalorder %s118, %s119
    %p133 = scmp.eq.s32.totalorder %s17, 1
    %p134 = por %p132, %p133
    %p136 = scmp.ne.s32.totalorder %s119, %s135
    %p137 = scmp.eq.s32.totalorder %s17, 0
    %p138 = por %p136, %p137
    %s139 = ssub.s32 %s11, %s18
    %p140 = scmp.eq.s32.totalorder %s139, 0
    %s142 = sadd.s32 %s141, 1
    %s143 = scalar_select %p140, %s141, %s142
    %p146 = pneg %p140
    %p147 = scmp.eq.s32.totalorder %s11, 1
    %p148 = por %p146, %p147
    %p149 = scmp.ne.s32.totalorder %s141, %s144
    %p150 = scmp.eq.s32.totalorder %s11, 0
    %p151 = por %p149, %p150
    %p152 = scmp.ne.s32.totalorder %s141, %s144
    %p153 = scmp.eq.s32.totalorder %s16, 1
    %p154 = por %p152, %p153
    %p155 = scmp.ne.s32.totalorder %s144, %s145
    %p156 = scmp.eq.s32.totalorder %s16, 0
    %p157 = por %p155, %p156
    %p158 = scmp.ne.s32.totalorder %s144, %s145
    %p159 = scmp.eq.s32.totalorder %s17, 1
    %p160 = por %p158, %p159
    %p162 = scmp.ne.s32.totalorder %s145, %s161
    %p163 = scmp.eq.s32.totalorder %s17, 0
    %p164 = por %p162, %p163
    %p165 = scmp.le.s32.totalorder 1, %s11
    %p166 = scmp.lt.s32.totalorder %s11, 3
    %p167 = pnand %p165, %p166
    %p168 = pneg %p167
    // Predicated region
    $region9: #{dialog_acts_predictor_forward.13} parent=5 // pred_check
      _
    $region10: #{dialog_acts_predictor_forward.13} parent=5 // pred_check_branch
      %170 = sbr.rel (%p167) target = $region12
    $region11: #{dialog_acts_predictor_forward.13} parent=5 // pred_region
      %s171 = ssub.s32 %s11, 1
      // Predicated region
      $region13: #{dialog_acts_predictor_forward.13} parent=11 // pred_check
        %p172 = pneg %p84
      $region14: #{dialog_acts_predictor_forward.13} parent=11 // pred_check_branch
        %174 = sbr.rel (%p172) target = $region16
      $region15: #{dialog_acts_predictor_forward.13} parent=11 // pred_region
        _
      $region16: #{dialog_acts_predictor_forward.13} parent=11 // pred_fallthru
        _
      // Predicated region
      $region17: #{dialog_acts_predictor_forward.13} parent=11 // pred_check
        %p175 = pneg %p105
      $region18: #{dialog_acts_predictor_forward.13} parent=11 // pred_check_branch
        %177 = sbr.rel (%p175) target = $region20
      $region19: #{dialog_acts_predictor_forward.13} parent=11 // pred_region
        _
      $region20: #{dialog_acts_predictor_forward.13} parent=11 // pred_fallthru
        _
    $region12: #{dialog_acts_predictor_forward.13} parent=5 // pred_fallthru
      _
    %p178 = scmp.lt.s32.totalorder %s11, 2
    // Predicated region
    $region21: #{dialog_acts_predictor_forward.13} parent=5 // pred_check
      %p179 = pneg %p178
    $region22: #{dialog_acts_predictor_forward.13} parent=5 // pred_check_branch
      %181 = sbr.rel (%p179) target = $region24
    $region23: #{dialog_acts_predictor_forward.13} parent=5 // pred_region
      // Predicated region
      $region25: #{dialog_acts_predictor_forward.13} parent=23 // pred_check
        %p182 = pneg %p31
      $region26: #{dialog_acts_predictor_forward.13} parent=23 // pred_check_branch
        %184 = sbr.rel (%p182) target = $region28
      $region27: #{dialog_acts_predictor_forward.13} parent=23 // pred_region
        %p185 = scmp.lt.s32.totalorder %s11, 1
        %s186 = scalar_select %p185, %s11, 1
        %s187 = smul.addr %s186, 6
        %s188 = smul.addr %s187, 4
        %s189 = scalar_lea.vmem %s0, %s188
      $region28: #{dialog_acts_predictor_forward.13} parent=23 // pred_fallthru
        _
      // Predicated region
      $region29: #{dialog_acts_predictor_forward.13} parent=23 // pred_check
        %p190 = pneg %p57
      $region30: #{dialog_acts_predictor_forward.13} parent=23 // pred_check_branch
        %192 = sbr.rel (%p190) target = $region32
      $region31: #{dialog_acts_predictor_forward.13} parent=23 // pred_region
        %p193 = scmp.lt.s32.totalorder %s11, 1
        %s194 = scalar_select %p193, %s11, 1
        %s195 = scalar_lea.vmem %s1, %s194
      $region32: #{dialog_acts_predictor_forward.13} parent=23 // pred_fallthru
        _
      // Predicated region
      $region33: #{dialog_acts_predictor_forward.13} parent=23 // pred_check
        %p196 = pneg %p125
      $region34: #{dialog_acts_predictor_forward.13} parent=23 // pred_check_branch
        %198 = sbr.rel (%p196) target = $region36
      $region35: #{dialog_acts_predictor_forward.13} parent=23 // pred_region
        %p199 = scmp.lt.s32.totalorder %s11, 1
        %s200 = scalar_select %p199, %s11, 1
        %s201 = smul.addr %s200, 2
        %s202 = smul.addr %s201, 4
        %s203 = scalar_lea.vmem %s4, %s202
      $region36: #{dialog_acts_predictor_forward.13} parent=23 // pred_fallthru
        _
    $region24: #{dialog_acts_predictor_forward.13} parent=5 // pred_fallthru
      _
    %p204 = scmp.le.s32.totalorder 1, %s11
    %p205 = scmp.lt.s32.totalorder %s11, 3
    %p206 = pnand %p204, %p205
    %p207 = pneg %p206
    // Predicated region
    $region37: #{dialog_acts_predictor_forward.13} parent=5 // pred_check
      _
    $region38: #{dialog_acts_predictor_forward.13} parent=5 // pred_check_branch
      %209 = sbr.rel (%p206) target = $region40
    $region39: #{dialog_acts_predictor_forward.13} parent=5 // pred_region
      %s210 = ssub.s32 %s11, 1
      %p211 = scmp.lt.s32.totalorder %s16, 1
      %s212 = scalar_select %p211, %s16, 1
      %s213 = smul.addr %s212, 6
      %s214 = smul.addr %s213, 4
      %s215 = scalar_lea.vmem %s0, %s214
      %p216 = pneg %p37
      %p217 = pneg %p34
      %p218 = scmp.lt.s32.totalorder %s16, 1
      %s219 = scalar_select %p218, %s16, 1
      %s220 = scalar_lea.vmem %s1, %s219
      %p221 = pneg %p63
      %p222 = pneg %p60
      %p223 = pneg %p84
      %p224 = pneg %p81
      %p225 = pneg %p105
      %p226 = pneg %p102
      %p227 = scmp.lt.s32.totalorder %s16, 1
      %s228 = scalar_select %p227, %s16, 1
      %s229 = smul.addr %s228, 2
      %s230 = smul.addr %s229, 4
      %s231 = scalar_lea.vmem %s4, %s230
      %p232 = pneg %p131
      %p233 = pneg %p128
      %p234 = pneg %p157
      %p235 = pneg %p154
      %p236 = scmp.lt.s32.totalorder %s16, 1
      %s237 = scalar_select %p236, %s16, 1
      %s238 = smul.addr %s237, 2
      %s239 = smul.addr %s238, 4
      %s240 = scalar_lea.vmem %s5, %s239
      %p241 = scmp.lt.s32.totalorder %s16, 1
      %s242 = scalar_select %p241, %s16, 1
      %s243 = smul.addr %s242, 6
      %s244 = smul.addr %s243, 4
      %s245 = scalar_lea.vmem %s0, %s244
      %p246 = scmp.lt.s32.totalorder %s16, 1
      %s247 = scalar_select %p246, %s16, 1
      %s248 = scalar_lea.vmem %s1, %s247
      %p249 = scmp.lt.s32.totalorder %s16, 1
      %s250 = scalar_select %p249, %s16, 1
      %s251 = smul.addr %s250, 2
      %s252 = smul.addr %s251, 4
      %s253 = scalar_lea.vmem %s4, %s252
      %p254 = scmp.lt.s32.totalorder %s16, 1
      %s255 = scalar_select %p254, %s16, 1
      %s256 = smul.addr %s255, 2
      %s257 = smul.addr %s256, 4
      %s258 = scalar_lea.vmem %s5, %s257
      %v260 = vld [vmem:[%s245] sm:$0xff]
      %v261 = vld [vmem:[%s245 + $0x8] sm:$0xff]
      %v262 = vld [vmem:[%s245 + $0x10] sm:$0xff]
      %v263 = vld [vmem:[%s248] sm:$0x1]
      %v264 = vsub.f32 %v263, 1.0
      %v265 = vmul.f32 %v264, 1e+30
      %v267 = vlaneseq
      %v268 = vshrl.u32 %v267, 7
      %v269 = vsub.s32 0, %v268
      %v270 = vrot.slane %v265, %v269
      %vm272 = vcmask 523264
      %v274 = vsel %vm272, %v260, 0
      %v277 = vsel %vm272, %v261, 0
      %279 = vmatprep.subr.bf16.mxu0 0
      %280 = vmatpush1.bf16.xpose.msra.mxu0 0
      %281 = vmatprep.subr.bf16.mxu0 0
      %282 = vmatpush1.bf16.xpose.msra.mxu0 0
      %283 = vmatprep.subr.bf16.mxu0 0
      %284 = vmatpush1.bf16.xpose.msra.mxu0 0
      %285 = vmatprep.subr.bf16.mxu0 0
      %286 = vmatpush1.bf16.xpose.msra.mxu0 0
      %287 = vmatprep.subr.bf16.mxu0 0
      %288 = vmatpush1.bf16.xpose.msra.mxu0 0
      %289 = vmatprep.subr.bf16.mxu0 0
      %290 = vmatpush1.bf16.xpose.msra.mxu0 0
      %291 = vmatprep.subr.bf16.mxu0 0
      %292 = vmatpush1.bf16.xpose.msra.mxu0 0
      %293 = vmatprep.subr.bf16.mxu0 0
      %294 = vmatpush1.bf16.xpose.msra.mxu0 %v277
      %295 = vmatprep.subr.bf16.mxu0 0
      %296 = vmatpush2.bf16.xpose.msra.mxu0 0
      %297 = vmatprep.subr.bf16.mxu0 0
      %298 = vmatpush2.bf16.xpose.msra.mxu0 0
      %299 = vmatprep.subr.bf16.mxu0 0
      %300 = vmatpush2.bf16.xpose.msra.mxu0 0
      %301 = vmatprep.subr.bf16.mxu0 0
      %302 = vmatpush2.bf16.xpose.msra.mxu0 0
      %303 = vmatprep.subr.bf16.mxu0 0
      %304 = vmatpush2.bf16.xpose.msra.mxu0 0
      %305 = vmatprep.subr.bf16.mxu0 0
      %306 = vmatpush2.bf16.xpose.msra.mxu0 0
      %307 = vmatprep.subr.bf16.mxu0 0
      %308 = vmatpush2.bf16.xpose.msra.mxu0 0
      %309 = vmatprep.subr.bf16.mxu0 0
      %310 = vmatpush2.bf16.xpose.msra.mxu0 0
      %311 = vmatprep.mubr.bf16.mxu0 0
      %312 = vmatmul.mubr.bf16.gmra.mxu0 %v274
      %v313 = vpop.f32.mrf.mxu0
      %v314 = vadd.f32 %v270, %v313
      %v315 = vpop.f32.mrf.mxu0
      %v316 = vpop.f32.mrf.mxu0
      %v317 = vpop.f32.mrf.mxu0
      %318 = vdwg.mxu0
      %vm319 = vcmask 64512
      %v320 = vsel %vm319, %v314, -inf
      %321 = vmax.xlane.f32.xlu0 %v320
      %v322 = vpop.xlane.xlu0 %321
      %v323 = vsub.f32 %v314, %v322
      %v324 = vmul.f32 %v323, 1.442695
      %v325 = vpow.pop %v324
      %v327 = vlaneseq
      %v328 = vshrl.u32 %v327, 7
      %v329 = vsub.s32 0, %v328
      %v330 = vrot.slane %v263, %v329
      %v332 = vmul.f32 %v325, %v330
      %v333 = vsel %vm319, %v332, 0.0
      %334 = vadd.xlane.f32.xlu0 %v333
      %v335 = vpop.xlane.xlu0 %334
      %v336 = vrcp.pop %v335
      %v337 = vmul.f32 %v332, %v336
      %v338 = vpack.c.bf16 %v337, %v337
      %v340 = vsel %vm319, %v338, 0
      %vm342 = vcmask 1043456
      %v344 = vsel %vm342, %v262, 0
      %346 = vmatprep.subr.bf16.mxu0 0
      %347 = vmatpush1.bf16.msra.mxu0 0
      %348 = vmatprep.subr.bf16.mxu0 0
      %349 = vmatpush1.bf16.msra.mxu0 0
      %350 = vmatprep.subr.bf16.mxu0 0
      %351 = vmatpush1.bf16.msra.mxu0 0
      %352 = vmatprep.subr.bf16.mxu0 0
      %353 = vmatpush1.bf16.msra.mxu0 0
      %354 = vmatprep.subr.bf16.mxu0 0
      %355 = vmatpush1.bf16.msra.mxu0 0
      %356 = vmatprep.subr.bf16.mxu0 0
      %357 = vmatpush1.bf16.msra.mxu0 0
      %358 = vmatprep.subr.bf16.mxu0 0
      %359 = vmatpush1.bf16.msra.mxu0 0
      %360 = vmatprep.subr.bf16.mxu0 0
      %361 = vmatpush1.bf16.msra.mxu0 %v344
      %362 = vmatprep.subr.bf16.mxu0 0
      %363 = vmatpush2.bf16.msra.mxu0 0
      %364 = vmatprep.subr.bf16.mxu0 0
      %365 = vmatpush2.bf16.msra.mxu0 0
      %366 = vmatprep.subr.bf16.mxu0 0
      %367 = vmatpush2.bf16.msra.mxu0 0
      %368 = vmatprep.subr.bf16.mxu0 0
      %369 = vmatpush2.bf16.msra.mxu0 0
      %370 = vmatprep.subr.bf16.mxu0 0
      %371 = vmatpush2.bf16.msra.mxu0 0
      %372 = vmatprep.subr.bf16.mxu0 0
      %373 = vmatpush2.bf16.msra.mxu0 0
      %374 = vmatprep.subr.bf16.mxu0 0
      %375 = vmatpush2.bf16.msra.mxu0 0
      %376 = vmatprep.subr.bf16.mxu0 0
      %377 = vmatpush2.bf16.msra.mxu0 0
      %378 = vmatprep.mubr.bf16.mxu0 0
      %379 = vmatmul.mubr.bf16.gmra.mxu0 %v340
      %v380 = vpop.f32.mrf.mxu0
      %v381 = vadd.f32 0.0, %v380
      %v382 = vpop.f32.mrf.mxu0
      %v383 = vpop.f32.mrf.mxu0
      %v384 = vpop.f32.mrf.mxu0
      %385 = vdwg.mxu0
      %v387 = vunpack.c.l.b16 %v260
      %v388 = vpack.c.b16 %v387, %v387
      %389 = vrot.lane.b32.xlu0 %v388, 64
      %v390 = vpop.permute.xlu0 %389
      %v392 = vunpack.c.l.b16 %v261
      %v393 = vpack.c.b16 %v392, %v392
      %394 = vrot.lane.b32.xlu0 %v393, 64
      %v395 = vpop.permute.xlu0 %394
      %v397 = vsel %vm272, %v390, 0
      %v400 = vsel %vm272, %v395, 0
      %402 = vmatprep.subr.bf16.mxu0 0
      %403 = vmatpush1.bf16.xpose.msra.mxu0 0
      %404 = vmatprep.subr.bf16.mxu0 0
      %405 = vmatpush1.bf16.xpose.msra.mxu0 0
      %406 = vmatprep.subr.bf16.mxu0 0
      %407 = vmatpush1.bf16.xpose.msra.mxu0 0
      %408 = vmatprep.subr.bf16.mxu0 0
      %409 = vmatpush1.bf16.xpose.msra.mxu0 0
      %410 = vmatprep.subr.bf16.mxu0 0
      %411 = vmatpush1.bf16.xpose.msra.mxu0 0
      %412 = vmatprep.subr.bf16.mxu0 0
      %413 = vmatpush1.bf16.xpose.msra.mxu0 0
      %414 = vmatprep.subr.bf16.mxu0 0
      %415 = vmatpush1.bf16.xpose.msra.mxu0 0
      %416 = vmatprep.subr.bf16.mxu0 0
      %417 = vmatpush1.bf16.xpose.msra.mxu0 %v400
      %418 = vmatprep.subr.bf16.mxu0 0
      %419 = vmatpush2.bf16.xpose.msra.mxu0 0
      %420 = vmatprep.subr.bf16.mxu0 0
      %421 = vmatpush2.bf16.xpose.msra.mxu0 0
      %422 = vmatprep.subr.bf16.mxu0 0
      %423 = vmatpush2.bf16.xpose.msra.mxu0 0
      %424 = vmatprep.subr.bf16.mxu0 0
      %425 = vmatpush2.bf16.xpose.msra.mxu0 0
      %426 = vmatprep.subr.bf16.mxu0 0
      %427 = vmatpush2.bf16.xpose.msra.mxu0 0
      %428 = vmatprep.subr.bf16.mxu0 0
      %429 = vmatpush2.bf16.xpose.msra.mxu0 0
      %430 = vmatprep.subr.bf16.mxu0 0
      %431 = vmatpush2.bf16.xpose.msra.mxu0 0
      %432 = vmatprep.subr.bf16.mxu0 0
      %433 = vmatpush2.bf16.xpose.msra.mxu0 0
      %434 = vmatprep.mubr.bf16.mxu0 0
      %435 = vmatmul.mubr.bf16.gmra.mxu0 %v397
      %v436 = vpop.f32.mrf.mxu0
      %v437 = vadd.f32 %v270, %v436
      %v438 = vpop.f32.mrf.mxu0
      %v439 = vpop.f32.mrf.mxu0
      %v440 = vpop.f32.mrf.mxu0
      %441 = vdwg.mxu0
      %v442 = vsel %vm319, %v437, -inf
      %443 = vmax.xlane.f32.xlu0 %v442
      %v444 = vpop.xlane.xlu0 %443
      %v445 = vsub.f32 %v437, %v444
      %v446 = vmul.f32 %v445, 1.442695
      %v447 = vpow.pop %v446
      %v448 = vmul.f32 %v447, %v330
      %v449 = vsel %vm319, %v448, 0.0
      %450 = vadd.xlane.f32.xlu0 %v449
      %v451 = vpop.xlane.xlu0 %450
      %v452 = vrcp.pop %v451
      %v453 = vmul.f32 %v448, %v452
      %v454 = vpack.c.bf16 %v453, %v453
      %v456 = vunpack.c.l.b16 %v262
      %v457 = vpack.c.b16 %v456, %v456
      %458 = vrot.lane.b32.xlu0 %v457, 64
      %v459 = vpop.permute.xlu0 %458
      %v461 = vsel %vm319, %v454, 0
      %v464 = vsel %vm342, %v459, 0
      %466 = vmatprep.subr.bf16.mxu0 0
      %467 = vmatpush1.bf16.msra.mxu0 0
      %468 = vmatprep.subr.bf16.mxu0 0
      %469 = vmatpush1.bf16.msra.mxu0 0
      %470 = vmatprep.subr.bf16.mxu0 0
      %471 = vmatpush1.bf16.msra.mxu0 0
      %472 = vmatprep.subr.bf16.mxu0 0
      %473 = vmatpush1.bf16.msra.mxu0 0
      %474 = vmatprep.subr.bf16.mxu0 0
      %475 = vmatpush1.bf16.msra.mxu0 0
      %476 = vmatprep.subr.bf16.mxu0 0
      %477 = vmatpush1.bf16.msra.mxu0 0
      %478 = vmatprep.subr.bf16.mxu0 0
      %479 = vmatpush1.bf16.msra.mxu0 0
      %480 = vmatprep.subr.bf16.mxu0 0
      %481 = vmatpush1.bf16.msra.mxu0 %v464
      %482 = vmatprep.subr.bf16.mxu0 0
      %483 = vmatpush2.bf16.msra.mxu0 0
      %484 = vmatprep.subr.bf16.mxu0 0
      %485 = vmatpush2.bf16.msra.mxu0 0
      %486 = vmatprep.subr.bf16.mxu0 0
      %487 = vmatpush2.bf16.msra.mxu0 0
      %488 = vmatprep.subr.bf16.mxu0 0
      %489 = vmatpush2.bf16.msra.mxu0 0
      %490 = vmatprep.subr.bf16.mxu0 0
      %491 = vmatpush2.bf16.msra.mxu0 0
      %492 = vmatprep.subr.bf16.mxu0 0
      %493 = vmatpush2.bf16.msra.mxu0 0
      %494 = vmatprep.subr.bf16.mxu0 0
      %495 = vmatpush2.bf16.msra.mxu0 0
      %496 = vmatprep.subr.bf16.mxu0 0
      %497 = vmatpush2.bf16.msra.mxu0 0
      %498 = vmatprep.mubr.bf16.mxu0 0
      %499 = vmatmul.mubr.bf16.gmra.mxu0 %v461
      %v500 = vpop.f32.mrf.mxu0
      %v501 = vadd.f32 0.0, %v500
      %v502 = vpop.f32.mrf.mxu0
      %v503 = vpop.f32.mrf.mxu0
      %v504 = vpop.f32.mrf.mxu0
      %505 = vdwg.mxu0
      %v506 = vunpack.c.h.b16 %v260
      %v507 = vpack.c.b16 %v506, %v506
      %v508 = vunpack.c.h.b16 %v261
      %v509 = vpack.c.b16 %v508, %v508
      %v511 = vsel %vm272, %v507, 0
      %v514 = vsel %vm272, %v509, 0
      %516 = vmatprep.subr.bf16.mxu0 0
      %517 = vmatpush1.bf16.xpose.msra.mxu0 0
      %518 = vmatprep.subr.bf16.mxu0 0
      %519 = vmatpush1.bf16.xpose.msra.mxu0 0
      %520 = vmatprep.subr.bf16.mxu0 0
      %521 = vmatpush1.bf16.xpose.msra.mxu0 0
      %522 = vmatprep.subr.bf16.mxu0 0
      %523 = vmatpush1.bf16.xpose.msra.mxu0 0
      %524 = vmatprep.subr.bf16.mxu0 0
      %525 = vmatpush1.bf16.xpose.msra.mxu0 0
      %526 = vmatprep.subr.bf16.mxu0 0
      %527 = vmatpush1.bf16.xpose.msra.mxu0 0
      %528 = vmatprep.subr.bf16.mxu0 0
      %529 = vmatpush1.bf16.xpose.msra.mxu0 0
      %530 = vmatprep.subr.bf16.mxu0 0
      %531 = vmatpush1.bf16.xpose.msra.mxu0 %v514
      %532 = vmatprep.subr.bf16.mxu0 0
      %533 = vmatpush2.bf16.xpose.msra.mxu0 0
      %534 = vmatprep.subr.bf16.mxu0 0
      %535 = vmatpush2.bf16.xpose.msra.mxu0 0
      %536 = vmatprep.subr.bf16.mxu0 0
      %537 = vmatpush2.bf16.xpose.msra.mxu0 0
      %538 = vmatprep.subr.bf16.mxu0 0
      %539 = vmatpush2.bf16.xpose.msra.mxu0 0
      %540 = vmatprep.subr.bf16.mxu0 0
      %541 = vmatpush2.bf16.xpose.msra.mxu0 0
      %542 = vmatprep.subr.bf16.mxu0 0
      %543 = vmatpush2.bf16.xpose.msra.mxu0 0
      %544 = vmatprep.subr.bf16.mxu0 0
      %545 = vmatpush2.bf16.xpose.msra.mxu0 0
      %546 = vmatprep.subr.bf16.mxu0 0
      %547 = vmatpush2.bf16.xpose.msra.mxu0 0
      %548 = vmatprep.mubr.bf16.mxu0 0
      %549 = vmatmul.mubr.bf16.gmra.mxu0 %v511
      %v550 = vpop.f32.mrf.mxu0
      %v551 = vadd.f32 %v270, %v550
      %v552 = vpop.f32.mrf.mxu0
      %v553 = vpop.f32.mrf.mxu0
      %v554 = vpop.f32.mrf.mxu0
      %555 = vdwg.mxu0
      %v556 = vsel %vm319, %v551, -inf
      %557 = vmax.xlane.f32.xlu0 %v556
      %v558 = vpop.xlane.xlu0 %557
      %v559 = vsub.f32 %v551, %v558
      %v560 = vmul.f32 %v559, 1.442695
      %v561 = vpow.pop %v560
      %v562 = vmul.f32 %v561, %v330
      %v563 = vsel %vm319, %v562, 0.0
      %564 = vadd.xlane.f32.xlu0 %v563
      %v565 = vpop.xlane.xlu0 %564
      %v566 = vrcp.pop %v565
      %v567 = vmul.f32 %v562, %v566
      %v568 = vpack.c.bf16 %v567, %v567
      %v569 = vunpack.c.h.b16 %v262
      %v570 = vpack.c.b16 %v569, %v569
      %v572 = vsel %vm319, %v568, 0
      %v575 = vsel %vm342, %v570, 0
      %577 = vmatprep.subr.bf16.mxu0 0
      %578 = vmatpush1.bf16.msra.mxu0 0
      %579 = vmatprep.subr.bf16.mxu0 0
      %580 = vmatpush1.bf16.msra.mxu0 0
      %581 = vmatprep.subr.bf16.mxu0 0
      %582 = vmatpush1.bf16.msra.mxu0 0
      %583 = vmatprep.subr.bf16.mxu0 0
      %584 = vmatpush1.bf16.msra.mxu0 0
      %585 = vmatprep.subr.bf16.mxu0 0
      %586 = vmatpush1.bf16.msra.mxu0 0
      %587 = vmatprep.subr.bf16.mxu0 0
      %588 = vmatpush1.bf16.msra.mxu0 0
      %589 = vmatprep.subr.bf16.mxu0 0
      %590 = vmatpush1.bf16.msra.mxu0 0
      %591 = vmatprep.subr.bf16.mxu0 0
      %592 = vmatpush1.bf16.msra.mxu0 %v575
      %593 = vmatprep.subr.bf16.mxu0 0
      %594 = vmatpush2.bf16.msra.mxu0 0
      %595 = vmatprep.subr.bf16.mxu0 0
      %596 = vmatpush2.bf16.msra.mxu0 0
      %597 = vmatprep.subr.bf16.mxu0 0
      %598 = vmatpush2.bf16.msra.mxu0 0
      %599 = vmatprep.subr.bf16.mxu0 0
      %600 = vmatpush2.bf16.msra.mxu0 0
      %601 = vmatprep.subr.bf16.mxu0 0
      %602 = vmatpush2.bf16.msra.mxu0 0
      %603 = vmatprep.subr.bf16.mxu0 0
      %604 = vmatpush2.bf16.msra.mxu0 0
      %605 = vmatprep.subr.bf16.mxu0 0
      %606 = vmatpush2.bf16.msra.mxu0 0
      %607 = vmatprep.subr.bf16.mxu0 0
      %608 = vmatpush2.bf16.msra.mxu0 0
      %609 = vmatprep.mubr.bf16.mxu0 0
      %610 = vmatmul.mubr.bf16.gmra.mxu0 %v572
      %v611 = vpop.f32.mrf.mxu0
      %v612 = vadd.f32 0.0, %v611
      %v613 = vpop.f32.mrf.mxu0
      %v614 = vpop.f32.mrf.mxu0
      %v615 = vpop.f32.mrf.mxu0
      %616 = vdwg.mxu0
      %617 = vrot.lane.b32.xlu0 %v507, 64
      %v618 = vpop.permute.xlu0 %617
      %619 = vrot.lane.b32.xlu0 %v509, 64
      %v620 = vpop.permute.xlu0 %619
      %v622 = vsel %vm272, %v618, 0
      %v625 = vsel %vm272, %v620, 0
      %627 = vmatprep.subr.bf16.mxu0 0
      %628 = vmatpush1.bf16.xpose.msra.mxu0 0
      %629 = vmatprep.subr.bf16.mxu0 0
      %630 = vmatpush1.bf16.xpose.msra.mxu0 0
      %631 = vmatprep.subr.bf16.mxu0 0
      %632 = vmatpush1.bf16.xpose.msra.mxu0 0
      %633 = vmatprep.subr.bf16.mxu0 0
      %634 = vmatpush1.bf16.xpose.msra.mxu0 0
      %635 = vmatprep.subr.bf16.mxu0 0
      %636 = vmatpush1.bf16.xpose.msra.mxu0 0
      %637 = vmatprep.subr.bf16.mxu0 0
      %638 = vmatpush1.bf16.xpose.msra.mxu0 0
      %639 = vmatprep.subr.bf16.mxu0 0
      %640 = vmatpush1.bf16.xpose.msra.mxu0 0
      %641 = vmatprep.subr.bf16.mxu0 0
      %642 = vmatpush1.bf16.xpose.msra.mxu0 %v625
      %643 = vmatprep.subr.bf16.mxu0 0
      %644 = vmatpush2.bf16.xpose.msra.mxu0 0
      %645 = vmatprep.subr.bf16.mxu0 0
      %646 = vmatpush2.bf16.xpose.msra.mxu0 0
      %647 = vmatprep.subr.bf16.mxu0 0
      %648 = vmatpush2.bf16.xpose.msra.mxu0 0
      %649 = vmatprep.subr.bf16.mxu0 0
      %650 = vmatpush2.bf16.xpose.msra.mxu0 0
      %651 = vmatprep.subr.bf16.mxu0 0
      %652 = vmatpush2.bf16.xpose.msra.mxu0 0
      %653 = vmatprep.subr.bf16.mxu0 0
      %654 = vmatpush2.bf16.xpose.msra.mxu0 0
      %655 = vmatprep.subr.bf16.mxu0 0
      %656 = vmatpush2.bf16.xpose.msra.mxu0 0
      %657 = vmatprep.subr.bf16.mxu0 0
      %658 = vmatpush2.bf16.xpose.msra.mxu0 0
      %659 = vmatprep.mubr.bf16.mxu0 0
      %660 = vmatmul.mubr.bf16.gmra.mxu0 %v622
      %v661 = vpop.f32.mrf.mxu0
      %v662 = vadd.f32 %v270, %v661
      %v663 = vpop.f32.mrf.mxu0
      %v664 = vpop.f32.mrf.mxu0
      %v665 = vpop.f32.mrf.mxu0
      %666 = vdwg.mxu0
      %v667 = vsel %vm319, %v662, -inf
      %668 = vmax.xlane.f32.xlu0 %v667
      %v669 = vpop.xlane.xlu0 %668
      %v670 = vsub.f32 %v662, %v669
      %v671 = vmul.f32 %v670, 1.442695
      %v672 = vpow.pop %v671
      %v673 = vmul.f32 %v672, %v330
      %v674 = vsel %vm319, %v673, 0.0
      %675 = vadd.xlane.f32.xlu0 %v674
      %v676 = vpop.xlane.xlu0 %675
      %v677 = vrcp.pop %v676
      %v678 = vmul.f32 %v673, %v677
      %v679 = vpack.c.bf16 %v678, %v678
      %680 = vrot.lane.b32.xlu0 %v570, 64
      %v681 = vpop.permute.xlu0 %680
      %v683 = vsel %vm319, %v679, 0
      %v686 = vsel %vm342, %v681, 0
      %688 = vmatprep.subr.bf16.mxu0 0
      %689 = vmatpush1.bf16.msra.mxu0 0
      %690 = vmatprep.subr.bf16.mxu0 0
      %691 = vmatpush1.bf16.msra.mxu0 0
      %692 = vmatprep.subr.bf16.mxu0 0
      %693 = vmatpush1.bf16.msra.mxu0 0
      %694 = vmatprep.subr.bf16.mxu0 0
      %695 = vmatpush1.bf16.msra.mxu0 0
      %696 = vmatprep.subr.bf16.mxu0 0
      %697 = vmatpush1.bf16.msra.mxu0 0
      %698 = vmatprep.subr.bf16.mxu0 0
      %699 = vmatpush1.bf16.msra.mxu0 0
      %700 = vmatprep.subr.bf16.mxu0 0
      %701 = vmatpush1.bf16.msra.mxu0 0
      %702 = vmatprep.subr.bf16.mxu0 0
      %703 = vmatpush1.bf16.msra.mxu0 %v686
      %704 = vmatprep.subr.bf16.mxu0 0
      %705 = vmatpush2.bf16.msra.mxu0 0
      %706 = vmatprep.subr.bf16.mxu0 0
      %707 = vmatpush2.bf16.msra.mxu0 0
      %708 = vmatprep.subr.bf16.mxu0 0
      %709 = vmatpush2.bf16.msra.mxu0 0
      %710 = vmatprep.subr.bf16.mxu0 0
      %711 = vmatpush2.bf16.msra.mxu0 0
      %712 = vmatprep.subr.bf16.mxu0 0
      %713 = vmatpush2.bf16.msra.mxu0 0
      %714 = vmatprep.subr.bf16.mxu0 0
      %715 = vmatpush2.bf16.msra.mxu0 0
      %716 = vmatprep.subr.bf16.mxu0 0
      %717 = vmatpush2.bf16.msra.mxu0 0
      %718 = vmatprep.subr.bf16.mxu0 0
      %719 = vmatpush2.bf16.msra.mxu0 0
      %720 = vmatprep.mubr.bf16.mxu0 0
      %721 = vmatmul.mubr.bf16.gmra.mxu0 %v683
      %v722 = vpop.f32.mrf.mxu0
      %v723 = vadd.f32 0.0, %v722
      %v724 = vpop.f32.mrf.mxu0
      %v725 = vpop.f32.mrf.mxu0
      %v726 = vpop.f32.mrf.mxu0
      %727 = vdwg.mxu0
      %729 = vrot.lane.b32.xlu0 %v501, 64
      %v730 = vpop.permute.xlu0 %729
      %733 = vrot.lane.b32.xlu0 %v723, 64
      %v734 = vpop.permute.xlu0 %733
      %v736 = vsel %vm272, %v381, %v730
      %v737 = vsel %vm272, %v612, %v734
      %v738 = vpack.c.bf16 %v736, %v736
      %v739 = vpack.c.bf16 %v737, %v737
      %v740 = vld [vmem:[%s2] sm:$0xff]
      %v741 = vld [vmem:[%s2 + $0x8] sm:$0xff]
      %v742 = vld [vmem:[%s2 + $0x10] sm:$0xff]
      %v743 = vld [vmem:[%s2 + $0x18] sm:$0xff]
      %v744 = vld [vmem:[%s2 + $0x20] sm:$0xff]
      %v745 = vld [vmem:[%s2 + $0x28] sm:$0xff]
      %v746 = vld [vmem:[%s2 + $0x30] sm:$0xff]
      %v747 = vld [vmem:[%s2 + $0x38] sm:$0xff]
      %v748 = vld [vmem:[%s2 + $0x40] sm:$0xff]
      %v749 = vld [vmem:[%s2 + $0x48] sm:$0xff]
      %v750 = vld [vmem:[%s2 + $0x50] sm:$0xff]
      %v751 = vld [vmem:[%s2 + $0x58] sm:$0xff]
      %v752 = vld [vmem:[%s2 + $0x60] sm:$0xff]
      %v753 = vld [vmem:[%s2 + $0x68] sm:$0xff]
      %v754 = vld [vmem:[%s2 + $0x70] sm:$0xff]
      %v755 = vld [vmem:[%s2 + $0x78] sm:$0xff]
      %v756 = vld [vmem:[%s2 + $0x80] sm:$0xff]
      %v757 = vld [vmem:[%s2 + $0x88] sm:$0xff]
      %v758 = vld [vmem:[%s2 + $0x90] sm:$0xff]
      %v759 = vld [vmem:[%s2 + $0x98] sm:$0xff]
      %v760 = vld [vmem:[%s2 + $0xa0] sm:$0xff]
      %v761 = vld [vmem:[%s2 + $0xa8] sm:$0xff]
      %v762 = vld [vmem:[%s2 + $0xb0] sm:$0xff]
      %v763 = vld [vmem:[%s2 + $0xb8] sm:$0xff]
      %v764 = vld [vmem:[%s2 + $0xc0] sm:$0xff]
      %v765 = vld [vmem:[%s2 + $0xc8] sm:$0xff]
      %v766 = vld [vmem:[%s2 + $0xd0] sm:$0xff]
      %v767 = vld [vmem:[%s2 + $0xd8] sm:$0xff]
      %v768 = vld [vmem:[%s2 + $0xe0] sm:$0xff]
      %v769 = vld [vmem:[%s2 + $0xe8] sm:$0xff]
      %v770 = vld [vmem:[%s2 + $0xf0] sm:$0xff]
      %v771 = vld [vmem:[%s2 + $0xf8] sm:$0xff]
      %v772 = vld [vmem:[%s3] sm:$0x3]
      %v774 = vlaneseq
      %v775 = vshrl.u32 %v774, 7
      %v776 = vsub.s32 0, %v775
      %v777 = vrot.slane %v772, %v776
      %v778 = vlaneseq
      %v779 = vshrl.u32 %v778, 7
      %v780 = vsub.s32 1, %v779
      %v781 = vrot.slane %v772, %v780
      %v816 = vunpack.c.l.b16 %v740
      %v817 = vunpack.c.h.b16 %v740
      %v818 = vunpack.c.l.b16 %v741
      %v819 = vunpack.c.h.b16 %v741
      %v820 = vunpack.c.l.b16 %v742
      %v821 = vunpack.c.h.b16 %v742
      %v822 = vunpack.c.l.b16 %v743
      %v823 = vunpack.c.h.b16 %v743
      %v824 = vunpack.c.l.b16 %v744
      %v825 = vunpack.c.h.b16 %v744
      %v826 = vunpack.c.l.b16 %v745
      %v827 = vunpack.c.h.b16 %v745
      %v828 = vunpack.c.l.b16 %v746
      %v829 = vunpack.c.h.b16 %v746
      %v830 = vunpack.c.l.b16 %v747
      %v831 = vunpack.c.h.b16 %v747
      %v832 = vunpack.c.l.b16 %v748
      %v833 = vunpack.c.h.b16 %v748
      %v834 = vunpack.c.l.b16 %v749
      %v835 = vunpack.c.h.b16 %v749
      %v836 = vunpack.c.l.b16 %v750
      %v837 = vunpack.c.h.b16 %v750
      %v838 = vunpack.c.l.b16 %v751
      %v839 = vunpack.c.h.b16 %v751
      %v840 = vunpack.c.l.b16 %v752
      %v841 = vunpack.c.h.b16 %v752
      %v842 = vunpack.c.l.b16 %v753
      %v843 = vunpack.c.h.b16 %v753
      %v844 = vunpack.c.l.b16 %v754
      %v845 = vunpack.c.h.b16 %v754
      %v846 = vunpack.c.l.b16 %v755
      %v847 = vunpack.c.h.b16 %v755
      %v848 = vunpack.c.l.b16 %v756
      %v849 = vunpack.c.h.b16 %v756
      %v850 = vunpack.c.l.b16 %v757
      %v851 = vunpack.c.h.b16 %v757
      %v852 = vunpack.c.l.b16 %v758
      %v853 = vunpack.c.h.b16 %v758
      %v854 = vunpack.c.l.b16 %v759
      %v855 = vunpack.c.h.b16 %v759
      %v856 = vunpack.c.l.b16 %v760
      %v857 = vunpack.c.h.b16 %v760
      %v858 = vunpack.c.l.b16 %v761
      %v859 = vunpack.c.h.b16 %v761
      %v860 = vunpack.c.l.b16 %v762
      %v861 = vunpack.c.h.b16 %v762
      %v862 = vunpack.c.l.b16 %v763
      %v863 = vunpack.c.h.b16 %v763
      %v864 = vunpack.c.l.b16 %v764
      %v865 = vunpack.c.h.b16 %v764
      %v866 = vunpack.c.l.b16 %v765
      %v867 = vunpack.c.h.b16 %v765
      %v868 = vunpack.c.l.b16 %v766
      %v869 = vunpack.c.h.b16 %v766
      %v870 = vunpack.c.l.b16 %v767
      %v871 = vunpack.c.h.b16 %v767
      %v872 = vunpack.c.l.b16 %v768
      %v873 = vunpack.c.h.b16 %v768
      %v874 = vunpack.c.l.b16 %v769
      %v875 = vunpack.c.h.b16 %v769
      %v876 = vunpack.c.l.b16 %v770
      %v877 = vunpack.c.h.b16 %v770
      %v878 = vunpack.c.l.b16 %v771
      %v879 = vunpack.c.h.b16 %v771
      %v880 = vpack.c.b16 %v818, %v816
      %v881 = vpack.c.b16 %v819, %v817
      %v882 = vpack.c.b16 %v822, %v820
      %v883 = vpack.c.b16 %v823, %v821
      %v884 = vpack.c.b16 %v826, %v824
      %v885 = vpack.c.b16 %v827, %v825
      %v886 = vpack.c.b16 %v830, %v828
      %v887 = vpack.c.b16 %v831, %v829
      %v888 = vpack.c.b16 %v834, %v832
      %v889 = vpack.c.b16 %v835, %v833
      %v890 = vpack.c.b16 %v838, %v836
      %v891 = vpack.c.b16 %v839, %v837
      %v892 = vpack.c.b16 %v842, %v840
      %v893 = vpack.c.b16 %v843, %v841
      %v894 = vpack.c.b16 %v846, %v844
      %v895 = vpack.c.b16 %v847, %v845
      %v896 = vpack.c.b16 %v850, %v848
      %v897 = vpack.c.b16 %v851, %v849
      %v898 = vpack.c.b16 %v854, %v852
      %v899 = vpack.c.b16 %v855, %v853
      %v900 = vpack.c.b16 %v858, %v856
      %v901 = vpack.c.b16 %v859, %v857
      %v902 = vpack.c.b16 %v862, %v860
      %v903 = vpack.c.b16 %v863, %v861
      %v904 = vpack.c.b16 %v866, %v864
      %v905 = vpack.c.b16 %v867, %v865
      %v906 = vpack.c.b16 %v870, %v868
      %v907 = vpack.c.b16 %v871, %v869
      %v908 = vpack.c.b16 %v874, %v872
      %v909 = vpack.c.b16 %v875, %v873
      %v910 = vpack.c.b16 %v878, %v876
      %v911 = vpack.c.b16 %v879, %v877
      %944 = vmatprep.subr.bf16.mxu0 %v895
      %945 = vmatpush1.bf16.msra.mxu0 %v894
      %946 = vmatprep.subr.bf16.mxu0 %v893
      %947 = vmatpush1.bf16.msra.mxu0 %v892
      %948 = vmatprep.subr.bf16.mxu0 %v891
      %949 = vmatpush1.bf16.msra.mxu0 %v890
      %950 = vmatprep.subr.bf16.mxu0 %v889
      %951 = vmatpush1.bf16.msra.mxu0 %v888
      %952 = vmatprep.subr.bf16.mxu0 %v887
      %953 = vmatpush1.bf16.msra.mxu0 %v886
      %954 = vmatprep.subr.bf16.mxu0 %v885
      %955 = vmatpush1.bf16.msra.mxu0 %v884
      %956 = vmatprep.subr.bf16.mxu0 %v883
      %957 = vmatpush1.bf16.msra.mxu0 %v882
      %958 = vmatprep.subr.bf16.mxu0 %v881
      %959 = vmatpush1.bf16.msra.mxu0 %v880
      %960 = vmatprep.subr.bf16.mxu0 %v911
      %961 = vmatpush2.bf16.msra.mxu0 %v910
      %962 = vmatprep.subr.bf16.mxu0 %v909
      %963 = vmatpush2.bf16.msra.mxu0 %v908
      %964 = vmatprep.subr.bf16.mxu0 %v907
      %965 = vmatpush2.bf16.msra.mxu0 %v906
      %966 = vmatprep.subr.bf16.mxu0 %v905
      %967 = vmatpush2.bf16.msra.mxu0 %v904
      %968 = vmatprep.subr.bf16.mxu0 %v903
      %969 = vmatpush2.bf16.msra.mxu0 %v902
      %970 = vmatprep.subr.bf16.mxu0 %v901
      %971 = vmatpush2.bf16.msra.mxu0 %v900
      %972 = vmatprep.subr.bf16.mxu0 %v899
      %973 = vmatpush2.bf16.msra.mxu0 %v898
      %974 = vmatprep.subr.bf16.mxu0 %v897
      %975 = vmatpush2.bf16.msra.mxu0 %v896
      %976 = vmatprep.mubr.bf16.mxu0 %v739
      %977 = vmatmul.mubr.bf16.gmra.mxu0 %v738
      %v978 = vpop.f32.mrf.mxu0
      %v979 = vadd.f32 %v777, %v978
      %v980 = vpop.f32.mrf.mxu0
      %v981 = vadd.f32 %v781, %v980
      %v982 = vpop.f32.mrf.mxu0
      %v983 = vpop.f32.mrf.mxu0
      %984 = vdwg.mxu0
      %v985 = vld [vmem:[%s253] sm:$0xff]
      %v986 = vunpack.c.l.bf16 %v985
      %v987 = vunpack.c.h.bf16 %v985
      %v988 = vadd.f32 %v979, %v986
      %v989 = vadd.f32 %v981, %v987
      %v990 = vpack.c.bf16 %v988, %v988
      %v991 = vpack.c.bf16 %v989, %v989
      %v994 = vunpack.c.l.b16 %v990
      %v995 = vunpack.c.l.b16 %v991
      %v996 = vpack.c.b16 %v995, %v994
      %998 = vst [vmem:[%s258] sm:$0xff] %v996
      %p999 = scmp.lt.s32.totalorder %s16, 1
      %s1000 = scalar_select %p999, %s16, 1
      %s1001 = smul.addr %s1000, 2
      %s1002 = smul.addr %s1001, 4
      %s1003 = scalar_lea.vmem %s5, %s1002
      // Predicated region
      $region41: #{dialog_acts_predictor_forward.13} parent=39 // pred_check
        %p1004 = pneg %p154
      $region42: #{dialog_acts_predictor_forward.13} parent=39 // pred_check_branch
        %1006 = sbr.rel (%p1004) target = $region44
      $region43: #{dialog_acts_predictor_forward.13} parent=39 // pred_region
        _
      $region44: #{dialog_acts_predictor_forward.13} parent=39 // pred_fallthru
        _
    $region40: #{dialog_acts_predictor_forward.13} parent=5 // pred_fallthru
      _
    %p1007 = scmp.le.s32.totalorder 2, %s11
    // Predicated region
    $region45: #{dialog_acts_predictor_forward.13} parent=5 // pred_check
      %p1008 = pneg %p1007
    $region46: #{dialog_acts_predictor_forward.13} parent=5 // pred_check_branch
      %1010 = sbr.rel (%p1008) target = $region48
    $region47: #{dialog_acts_predictor_forward.13} parent=5 // pred_region
      %s1011 = ssub.s32 %s11, 2
      // Predicated region
      $region49: #{dialog_acts_predictor_forward.13} parent=47 // pred_check
        %p1012 = pneg %p160
      $region50: #{dialog_acts_predictor_forward.13} parent=47 // pred_check_branch
        %1014 = sbr.rel (%p1012) target = $region52
      $region51: #{dialog_acts_predictor_forward.13} parent=47 // pred_region
        %p1015 = scmp.lt.s32.totalorder %s17, 1
        %s1016 = scalar_select %p1015, %s17, 1
        %s1017 = smul.addr %s1016, 2
        %s1018 = smul.addr %s1017, 4
        %s1019 = scalar_lea.vmem %s5, %s1018
      $region52: #{dialog_acts_predictor_forward.13} parent=47 // pred_fallthru
        _
    $region48: #{dialog_acts_predictor_forward.13} parent=5 // pred_fallthru
      _
  $region6: #{dialog_acts_predictor_forward.13} parent=0 // loop_footer
    %s15 = sadd.s32 1, %s11
  $region7: #{dialog_acts_predictor_forward.13} parent=0 // loop_footer_branch
    %10 = sbr.rel target = $region3
  $region8: #{dialog_acts_predictor_forward.13} parent=0 // loop_exit
    _

// kernel: dialog_acts_predictor_forward.12
$region0: #{dialog_acts_predictor_forward.12}
  #allocation0 [shape = 'u32[]', space=smem, size = 0x4, offset = 0x4, fixed_abs, tag = 'smem constant byte address 0x4 - core index']
  #allocation1 [shape = 'u32[144,128]{1,0:T(1,128)}', space=vmem, size = 0x12000, scoped, tag = 'internal scratch']
  %s0 = inlined_call_operand.vmem [shape: bf16[16,256], index: 0, kind: input, shape index: {}]
  %s1 = inlined_call_operand.vmem [shape: f32[1,256], index: 1, kind: input, shape index: {}]
  %s2 = inlined_call_operand.vmem [shape: f32[1,256], index: 2, kind: input, shape index: {}]
  %s3 = inlined_call_operand.vmem [shape: bf16[256,768], index: 3, kind: input, shape index: {}]
  %s4 = inlined_call_operand.vmem [shape: f32[1,768], index: 4, kind: input, shape index: {}]
  %s5 = inlined_call_operand.vmem [shape: bf16[16,768], index: 5, kind: output, shape index: {}]
  %s6 = sld [smem:[#allocation0]]
  $region30: #{dialog_acts_predictor_forward.12} parent=0
    _
  %s8 = ssub.s32 1, %s6
  %s9 = scalar_select 0, %s8, %s6
  // Predicated region
  $region2: #{dialog_acts_predictor_forward.12} parent=0 // pred_check
    _
  $region3: #{dialog_acts_predictor_forward.12} parent=0 // pred_check_branch
    %11 = sbr.rel (0) target = $region5
  $region4: #{dialog_acts_predictor_forward.12} parent=0 // pred_region
    _
  $region5: #{dialog_acts_predictor_forward.12} parent=0 // pred_fallthru
    _
  // Predicated region
  $region6: #{dialog_acts_predictor_forward.12} parent=0 // pred_check
    _
  $region7: #{dialog_acts_predictor_forward.12} parent=0 // pred_check_branch
    %13 = sbr.rel (0) target = $region9
  $region8: #{dialog_acts_predictor_forward.12} parent=0 // pred_region
    _
  $region9: #{dialog_acts_predictor_forward.12} parent=0 // pred_fallthru
    _
  // Predicated region
  $region10: #{dialog_acts_predictor_forward.12} parent=0 // pred_check
    _
  $region11: #{dialog_acts_predictor_forward.12} parent=0 // pred_check_branch
    %15 = sbr.rel (0) target = $region13
  $region12: #{dialog_acts_predictor_forward.12} parent=0 // pred_region
    _
  $region13: #{dialog_acts_predictor_forward.12} parent=0 // pred_fallthru
    _
  // Predicated region
  $region14: #{dialog_acts_predictor_forward.12} parent=0 // pred_check
    _
  $region15: #{dialog_acts_predictor_forward.12} parent=0 // pred_check_branch
    %17 = sbr.rel (0) target = $region17
  $region16: #{dialog_acts_predictor_forward.12} parent=0 // pred_region
    _
  $region17: #{dialog_acts_predictor_forward.12} parent=0 // pred_fallthru
    _
  // Predicated region
  $region18: #{dialog_acts_predictor_forward.12} parent=0 // pred_check
    _
  $region19: #{dialog_acts_predictor_forward.12} parent=0 // pred_check_branch
    %19 = sbr.rel (0) target = $region21
  $region20: #{dialog_acts_predictor_forward.12} parent=0 // pred_region
    _
  $region21: #{dialog_acts_predictor_forward.12} parent=0 // pred_fallthru
    _
  %v20 = vld [vmem:[%s0] sm:$0xff]
  %v21 = vld [vmem:[%s0 + $0x8] sm:$0xff]
  %v22 = vunpack.c.l.bf16 %v20
  %v23 = vunpack.c.h.bf16 %v20
  %v24 = vunpack.c.l.bf16 %v21
  %v25 = vunpack.c.h.bf16 %v21
  %v26 = vld [vmem:[%s1] sm:$0x3]
  %v27 = vld [vmem:[%s2] sm:$0x3]
  %v28 = vadd.f32 %v22, %v23
  %29 = vadd.xlane.f32.xlu0 %v28
  %v30 = vpop.xlane.xlu0 %29
  %v31 = vadd.f32 %v24, %v25
  %32 = vadd.xlane.f32.xlu0 %v31
  %v33 = vpop.xlane.xlu0 %32
  %v34 = vrcp.pop 256.0
  %v35 = vmul.f32 %v30, %v34
  %v36 = vmul.f32 %v33, %v34
  %v37 = vsub.f32 %v22, %v35
  %v38 = vsub.f32 %v23, %v35
  %v39 = vsub.f32 %v24, %v36
  %v40 = vsub.f32 %v25, %v36
  %v41 = vmul.f32 %v37, %v37
  %v42 = vmul.f32 %v38, %v38
  %v43 = vmul.f32 %v39, %v39
  %v44 = vmul.f32 %v40, %v40
  %v45 = vadd.f32 %v41, %v42
  %46 = vadd.xlane.f32.xlu0 %v45
  %v47 = vpop.xlane.xlu0 %46
  %v48 = vadd.f32 %v43, %v44
  %49 = vadd.xlane.f32.xlu0 %v48
  %v50 = vpop.xlane.xlu0 %49
  %v51 = vmul.f32 %v47, %v34
  %v52 = vmul.f32 %v50, %v34
  %v53 = vadd.f32 %v51, 1e-12
  %v54 = vadd.f32 %v52, 1e-12
  %v55 = vrsqrt.pop %v53
  %v56 = vrsqrt.pop %v54
  %v57 = vmul.f32 %v37, %v55
  %v58 = vmul.f32 %v38, %v55
  %v59 = vmul.f32 %v39, %v56
  %v60 = vmul.f32 %v40, %v56
  %v62 = vlaneseq
  %v63 = vshrl.u32 %v62, 7
  %v64 = vsub.s32 0, %v63
  %v65 = vrot.slane %v26, %v64
  %v66 = vlaneseq
  %v67 = vshrl.u32 %v66, 7
  %v68 = vsub.s32 1, %v67
  %v69 = vrot.slane %v26, %v68
  %v72 = vmul.f32 %v57, %v65
  %v73 = vmul.f32 %v58, %v69
  %v74 = vmul.f32 %v59, %v65
  %v75 = vmul.f32 %v60, %v69
  %v77 = vlaneseq
  %v78 = vshrl.u32 %v77, 7
  %v79 = vsub.s32 0, %v78
  %v80 = vrot.slane %v27, %v79
  %v81 = vlaneseq
  %v82 = vshrl.u32 %v81, 7
  %v83 = vsub.s32 1, %v82
  %v84 = vrot.slane %v27, %v83
  %v87 = vadd.f32 %v72, %v80
  %v88 = vadd.f32 %v73, %v84
  %v89 = vadd.f32 %v74, %v80
  %v90 = vadd.f32 %v75, %v84
  %v91 = vpack.c.bf16 %v89, %v87
  %v92 = vpack.c.bf16 %v90, %v88
  %v93 = vld [vmem:[%s3] sm:$0xff]
  %v94 = vld [vmem:[%s3 + $0x8] sm:$0xff]
  %v95 = vld [vmem:[%s3 + $0x10] sm:$0xff]
  %v96 = vld [vmem:[%s3 + $0x18] sm:$0xff]
  %v97 = vld [vmem:[%s3 + $0x20] sm:$0xff]
  %v98 = vld [vmem:[%s3 + $0x28] sm:$0xff]
  %v99 = vld [vmem:[%s3 + $0x30] sm:$0xff]
  %v100 = vld [vmem:[%s3 + $0x38] sm:$0xff]
  %v101 = vld [vmem:[%s3 + $0x40] sm:$0xff]
  %v102 = vld [vmem:[%s3 + $0x48] sm:$0xff]
  %v103 = vld [vmem:[%s3 + $0x50] sm:$0xff]
  %v104 = vld [vmem:[%s3 + $0x58] sm:$0xff]
  %v105 = vld [vmem:[%s3 + $0x60] sm:$0xff]
  %v106 = vld [vmem:[%s3 + $0x68] sm:$0xff]
  %v107 = vld [vmem:[%s3 + $0x70] sm:$0xff]
  %v108 = vld [vmem:[%s3 + $0x78] sm:$0xff]
  %v109 = vld [vmem:[%s3 + $0x80] sm:$0xff]
  %v110 = vld [vmem:[%s3 + $0x88] sm:$0xff]
  %v111 = vld [vmem:[%s3 + $0x90] sm:$0xff]
  %v112 = vld [vmem:[%s3 + $0x98] sm:$0xff]
  %v113 = vld [vmem:[%s3 + $0xa0] sm:$0xff]
  %v114 = vld [vmem:[%s3 + $0xa8] sm:$0xff]
  %v115 = vld [vmem:[%s3 + $0xb0] sm:$0xff]
  %v116 = vld [vmem:[%s3 + $0xb8] sm:$0xff]
  %v117 = vld [vmem:[%s3 + $0xc0] sm:$0xff]
  %v118 = vld [vmem:[%s3 + $0xc8] sm:$0xff]
  %v119 = vld [vmem:[%s3 + $0xd0] sm:$0xff]
  %v120 = vld [vmem:[%s3 + $0xd8] sm:$0xff]
  %v121 = vld [vmem:[%s3 + $0xe0] sm:$0xff]
  %v122 = vld [vmem:[%s3 + $0xe8] sm:$0xff]
  %v123 = vld [vmem:[%s3 + $0xf0] sm:$0xff]
  %v124 = vld [vmem:[%s3 + $0xf8] sm:$0xff]
  %v125 = vld [vmem:[%s3 + $0x100] sm:$0xff]
  %v126 = vld [vmem:[%s3 + $0x108] sm:$0xff]
  %v127 = vld [vmem:[%s3 + $0x110] sm:$0xff]
  %v128 = vld [vmem:[%s3 + $0x118] sm:$0xff]
  %v129 = vld [vmem:[%s3 + $0x120] sm:$0xff]
  %v130 = vld [vmem:[%s3 + $0x128] sm:$0xff]
  %v131 = vld [vmem:[%s3 + $0x130] sm:$0xff]
  %v132 = vld [vmem:[%s3 + $0x138] sm:$0xff]
  %v133 = vld [vmem:[%s3 + $0x140] sm:$0xff]
  %v134 = vld [vmem:[%s3 + $0x148] sm:$0xff]
  %v135 = vld [vmem:[%s3 + $0x150] sm:$0xff]
  %v136 = vld [vmem:[%s3 + $0x158] sm:$0xff]
  %v137 = vld [vmem:[%s3 + $0x160] sm:$0xff]
  %v138 = vld [vmem:[%s3 + $0x168] sm:$0xff]
  %v139 = vld [vmem:[%s3 + $0x170] sm:$0xff]
  %v140 = vld [vmem:[%s3 + $0x178] sm:$0xff]
  %v141 = vld [vmem:[%s3 + $0x180] sm:$0xff]
  %v142 = vld [vmem:[%s3 + $0x188] sm:$0xff]
  %v143 = vld [vmem:[%s3 + $0x190] sm:$0xff]
  %v144 = vld [vmem:[%s3 + $0x198] sm:$0xff]
  %v145 = vld [vmem:[%s3 + $0x1a0] sm:$0xff]
  %v146 = vld [vmem:[%s3 + $0x1a8] sm:$0xff]
  %v147 = vld [vmem:[%s3 + $0x1b0] sm:$0xff]
  %v148 = vld [vmem:[%s3 + $0x1b8] sm:$0xff]
  %v149 = vld [vmem:[%s3 + $0x1c0] sm:$0xff]
  %v150 = vld [vmem:[%s3 + $0x1c8] sm:$0xff]
  %v151 = vld [vmem:[%s3 + $0x1d0] sm:$0xff]
  %v152 = vld [vmem:[%s3 + $0x1d8] sm:$0xff]
  %v153 = vld [vmem:[%s3 + $0x1e0] sm:$0xff]
  %v154 = vld [vmem:[%s3 + $0x1e8] sm:$0xff]
  %v155 = vld [vmem:[%s3 + $0x1f0] sm:$0xff]
  %v156 = vld [vmem:[%s3 + $0x1f8] sm:$0xff]
  %v157 = vld [vmem:[%s3 + $0x200] sm:$0xff]
  %v158 = vld [vmem:[%s3 + $0x208] sm:$0xff]
  %v159 = vld [vmem:[%s3 + $0x210] sm:$0xff]
  %v160 = vld [vmem:[%s3 + $0x218] sm:$0xff]
  %v161 = vld [vmem:[%s3 + $0x220] sm:$0xff]
  %v162 = vld [vmem:[%s3 + $0x228] sm:$0xff]
  %v163 = vld [vmem:[%s3 + $0x230] sm:$0xff]
  %v164 = vld [vmem:[%s3 + $0x238] sm:$0xff]
  %v165 = vld [vmem:[%s3 + $0x240] sm:$0xff]
  %v166 = vld [vmem:[%s3 + $0x248] sm:$0xff]
  %v167 = vld [vmem:[%s3 + $0x250] sm:$0xff]
  %v168 = vld [vmem:[%s3 + $0x258] sm:$0xff]
  %v169 = vld [vmem:[%s3 + $0x260] sm:$0xff]
  %v170 = vld [vmem:[%s3 + $0x268] sm:$0xff]
  %v171 = vld [vmem:[%s3 + $0x270] sm:$0xff]
  %v172 = vld [vmem:[%s3 + $0x278] sm:$0xff]
  %v173 = vld [vmem:[%s3 + $0x280] sm:$0xff]
  %v174 = vld [vmem:[%s3 + $0x288] sm:$0xff]
  %v175 = vld [vmem:[%s3 + $0x290] sm:$0xff]
  %v176 = vld [vmem:[%s3 + $0x298] sm:$0xff]
  %v177 = vld [vmem:[%s3 + $0x2a0] sm:$0xff]
  %v178 = vld [vmem:[%s3 + $0x2a8] sm:$0xff]
  %v179 = vld [vmem:[%s3 + $0x2b0] sm:$0xff]
  %v180 = vld [vmem:[%s3 + $0x2b8] sm:$0xff]
  %v181 = vld [vmem:[%s3 + $0x2c0] sm:$0xff]
  %v182 = vld [vmem:[%s3 + $0x2c8] sm:$0xff]
  %v183 = vld [vmem:[%s3 + $0x2d0] sm:$0xff]
  %v184 = vld [vmem:[%s3 + $0x2d8] sm:$0xff]
  %v185 = vld [vmem:[%s3 + $0x2e0] sm:$0xff]
  %v186 = vld [vmem:[%s3 + $0x2e8] sm:$0xff]
  %v187 = vld [vmem:[%s3 + $0x2f0] sm:$0xff]
  %v188 = vld [vmem:[%s3 + $0x2f8] sm:$0xff]
  %v189 = vld [vmem:[%s4] sm:$0x3f]
  %v191 = vlaneseq
  %v192 = vshrl.u32 %v191, 7
  %v193 = vsub.s32 0, %v192
  %v194 = vrot.slane %v189, %v193
  %v195 = vlaneseq
  %v196 = vshrl.u32 %v195, 7
  %v197 = vsub.s32 1, %v196
  %v198 = vrot.slane %v189, %v197
  %v199 = vlaneseq
  %v200 = vshrl.u32 %v199, 7
  %v201 = vsub.s32 2, %v200
  %v202 = vrot.slane %v189, %v201
  %v203 = vlaneseq
  %v204 = vshrl.u32 %v203, 7
  %v205 = vsub.s32 3, %v204
  %v206 = vrot.slane %v189, %v205
  %v207 = vlaneseq
  %v208 = vshrl.u32 %v207, 7
  %v209 = vsub.s32 4, %v208
  %v210 = vrot.slane %v189, %v209
  %v211 = vlaneseq
  %v212 = vshrl.u32 %v211, 7
  %v213 = vsub.s32 5, %v212
  %v214 = vrot.slane %v189, %v213
  %v317 = vunpack.c.l.b16 %v93
  %v318 = vunpack.c.h.b16 %v93
  %v319 = vunpack.c.l.b16 %v94
  %v320 = vunpack.c.h.b16 %v94
  %v321 = vunpack.c.l.b16 %v95
  %v322 = vunpack.c.h.b16 %v95
  %v323 = vunpack.c.l.b16 %v96
  %v324 = vunpack.c.h.b16 %v96
  %v325 = vunpack.c.l.b16 %v97
  %v326 = vunpack.c.h.b16 %v97
  %v327 = vunpack.c.l.b16 %v98
  %v328 = vunpack.c.h.b16 %v98
  %v329 = vunpack.c.l.b16 %v99
  %v330 = vunpack.c.h.b16 %v99
  %v331 = vunpack.c.l.b16 %v100
  %v332 = vunpack.c.h.b16 %v100
  %v333 = vunpack.c.l.b16 %v101
  %v334 = vunpack.c.h.b16 %v101
  %v335 = vunpack.c.l.b16 %v102
  %v336 = vunpack.c.h.b16 %v102
  %v337 = vunpack.c.l.b16 %v103
  %v338 = vunpack.c.h.b16 %v103
  %v339 = vunpack.c.l.b16 %v104
  %v340 = vunpack.c.h.b16 %v104
  %v341 = vunpack.c.l.b16 %v105
  %v342 = vunpack.c.h.b16 %v105
  %v343 = vunpack.c.l.b16 %v106
  %v344 = vunpack.c.h.b16 %v106
  %v345 = vunpack.c.l.b16 %v107
  %v346 = vunpack.c.h.b16 %v107
  %v347 = vunpack.c.l.b16 %v108
  %v348 = vunpack.c.h.b16 %v108
  %v349 = vunpack.c.l.b16 %v109
  %v350 = vunpack.c.h.b16 %v109
  %v351 = vunpack.c.l.b16 %v110
  %v352 = vunpack.c.h.b16 %v110
  %v353 = vunpack.c.l.b16 %v111
  %v354 = vunpack.c.h.b16 %v111
  %v355 = vunpack.c.l.b16 %v112
  %v356 = vunpack.c.h.b16 %v112
  %v357 = vunpack.c.l.b16 %v113
  %v358 = vunpack.c.h.b16 %v113
  %v359 = vunpack.c.l.b16 %v114
  %v360 = vunpack.c.h.b16 %v114
  %v361 = vunpack.c.l.b16 %v115
  %v362 = vunpack.c.h.b16 %v115
  %v363 = vunpack.c.l.b16 %v116
  %v364 = vunpack.c.h.b16 %v116
  %v365 = vunpack.c.l.b16 %v117
  %v366 = vunpack.c.h.b16 %v117
  %v367 = vunpack.c.l.b16 %v118
  %v368 = vunpack.c.h.b16 %v118
  %v369 = vunpack.c.l.b16 %v119
  %v370 = vunpack.c.h.b16 %v119
  %v371 = vunpack.c.l.b16 %v120
  %v372 = vunpack.c.h.b16 %v120
  %v373 = vunpack.c.l.b16 %v121
  %v374 = vunpack.c.h.b16 %v121
  %v375 = vunpack.c.l.b16 %v122
  %v376 = vunpack.c.h.b16 %v122
  %v377 = vunpack.c.l.b16 %v123
  %v378 = vunpack.c.h.b16 %v123
  %v379 = vunpack.c.l.b16 %v124
  %v380 = vunpack.c.h.b16 %v124
  %v381 = vunpack.c.l.b16 %v125
  %v382 = vunpack.c.h.b16 %v125
  %v383 = vunpack.c.l.b16 %v126
  %v384 = vunpack.c.h.b16 %v126
  %v385 = vunpack.c.l.b16 %v127
  %v386 = vunpack.c.h.b16 %v127
  %v387 = vunpack.c.l.b16 %v128
  %v388 = vunpack.c.h.b16 %v128
  %v389 = vunpack.c.l.b16 %v129
  %v390 = vunpack.c.h.b16 %v129
  %v391 = vunpack.c.l.b16 %v130
  %v392 = vunpack.c.h.b16 %v130
  %v393 = vunpack.c.l.b16 %v131
  %v394 = vunpack.c.h.b16 %v131
  %v395 = vunpack.c.l.b16 %v132
  %v396 = vunpack.c.h.b16 %v132
  %v397 = vunpack.c.l.b16 %v133
  %v398 = vunpack.c.h.b16 %v133
  %v399 = vunpack.c.l.b16 %v134
  %v400 = vunpack.c.h.b16 %v134
  %v401 = vunpack.c.l.b16 %v135
  %v402 = vunpack.c.h.b16 %v135
  %v403 = vunpack.c.l.b16 %v136
  %v404 = vunpack.c.h.b16 %v136
  %v405 = vunpack.c.l.b16 %v137
  %v406 = vunpack.c.h.b16 %v137
  %v407 = vunpack.c.l.b16 %v138
  %v408 = vunpack.c.h.b16 %v138
  %v409 = vunpack.c.l.b16 %v139
  %v410 = vunpack.c.h.b16 %v139
  %v411 = vunpack.c.l.b16 %v140
  %v412 = vunpack.c.h.b16 %v140
  %v413 = vunpack.c.l.b16 %v141
  %v414 = vunpack.c.h.b16 %v141
  %v415 = vunpack.c.l.b16 %v142
  %v416 = vunpack.c.h.b16 %v142
  %v417 = vunpack.c.l.b16 %v143
  %v418 = vunpack.c.h.b16 %v143
  %v419 = vunpack.c.l.b16 %v144
  %v420 = vunpack.c.h.b16 %v144
  %v421 = vunpack.c.l.b16 %v145
  %v422 = vunpack.c.h.b16 %v145
  %v423 = vunpack.c.l.b16 %v146
  %v424 = vunpack.c.h.b16 %v146
  %v425 = vunpack.c.l.b16 %v147
  %v426 = vunpack.c.h.b16 %v147
  %v427 = vunpack.c.l.b16 %v148
  %v428 = vunpack.c.h.b16 %v148
  %v429 = vunpack.c.l.b16 %v149
  %v430 = vunpack.c.h.b16 %v149
  %v431 = vunpack.c.l.b16 %v150
  %v432 = vunpack.c.h.b16 %v150
  %v433 = vunpack.c.l.b16 %v151
  %v434 = vunpack.c.h.b16 %v151
  %v435 = vunpack.c.l.b16 %v152
  %v436 = vunpack.c.h.b16 %v152
  %v437 = vunpack.c.l.b16 %v153
  %v438 = vunpack.c.h.b16 %v153
  %v439 = vunpack.c.l.b16 %v154
  %v440 = vunpack.c.h.b16 %v154
  %v441 = vunpack.c.l.b16 %v155
  %v442 = vunpack.c.h.b16 %v155
  %v443 = vunpack.c.l.b16 %v156
  %v444 = vunpack.c.h.b16 %v156
  %v445 = vunpack.c.l.b16 %v157
  %v446 = vunpack.c.h.b16 %v157
  %v447 = vunpack.c.l.b16 %v158
  %v448 = vunpack.c.h.b16 %v158
  %v449 = vunpack.c.l.b16 %v159
  %v450 = vunpack.c.h.b16 %v159
  %v451 = vunpack.c.l.b16 %v160
  %v452 = vunpack.c.h.b16 %v160
  %v453 = vunpack.c.l.b16 %v161
  %v454 = vunpack.c.h.b16 %v161
  %v455 = vunpack.c.l.b16 %v162
  %v456 = vunpack.c.h.b16 %v162
  %v457 = vunpack.c.l.b16 %v163
  %v458 = vunpack.c.h.b16 %v163
  %v459 = vunpack.c.l.b16 %v164
  %v460 = vunpack.c.h.b16 %v164
  %v461 = vunpack.c.l.b16 %v165
  %v462 = vunpack.c.h.b16 %v165
  %v463 = vunpack.c.l.b16 %v166
  %v464 = vunpack.c.h.b16 %v166
  %v465 = vunpack.c.l.b16 %v167
  %v466 = vunpack.c.h.b16 %v167
  %v467 = vunpack.c.l.b16 %v168
  %v468 = vunpack.c.h.b16 %v168
  %v469 = vunpack.c.l.b16 %v169
  %v470 = vunpack.c.h.b16 %v169
  %v471 = vunpack.c.l.b16 %v170
  %v472 = vunpack.c.h.b16 %v170
  %v473 = vunpack.c.l.b16 %v171
  %v474 = vunpack.c.h.b16 %v171
  %v475 = vunpack.c.l.b16 %v172
  %v476 = vunpack.c.h.b16 %v172
  %v477 = vunpack.c.l.b16 %v173
  %v478 = vunpack.c.h.b16 %v173
  %v479 = vunpack.c.l.b16 %v174
  %v480 = vunpack.c.h.b16 %v174
  %v481 = vunpack.c.l.b16 %v175
  %v482 = vunpack.c.h.b16 %v175
  %v483 = vunpack.c.l.b16 %v176
  %v484 = vunpack.c.h.b16 %v176
  %v485 = vunpack.c.l.b16 %v177
  %v486 = vunpack.c.h.b16 %v177
  %v487 = vunpack.c.l.b16 %v178
  %v488 = vunpack.c.h.b16 %v178
  %v489 = vunpack.c.l.b16 %v179
  %v490 = vunpack.c.h.b16 %v179
  %v491 = vunpack.c.l.b16 %v180
  %v492 = vunpack.c.h.b16 %v180
  %v493 = vunpack.c.l.b16 %v181
  %v494 = vunpack.c.h.b16 %v181
  %v495 = vunpack.c.l.b16 %v182
  %v496 = vunpack.c.h.b16 %v182
  %v497 = vunpack.c.l.b16 %v183
  %v498 = vunpack.c.h.b16 %v183
  %v499 = vunpack.c.l.b16 %v184
  %v500 = vunpack.c.h.b16 %v184
  %v501 = vunpack.c.l.b16 %v185
  %v502 = vunpack.c.h.b16 %v185
  %v503 = vunpack.c.l.b16 %v186
  %v504 = vunpack.c.h.b16 %v186
  %v505 = vunpack.c.l.b16 %v187
  %v506 = vunpack.c.h.b16 %v187
  %v507 = vunpack.c.l.b16 %v188
  %v508 = vunpack.c.h.b16 %v188
  %v509 = vpack.c.b16 %v323, %v317
  %v510 = vpack.c.b16 %v324, %v318
  %v511 = vpack.c.b16 %v325, %v319
  %v512 = vpack.c.b16 %v326, %v320
  %v513 = vpack.c.b16 %v327, %v321
  %v514 = vpack.c.b16 %v328, %v322
  %v515 = vpack.c.b16 %v335, %v329
  %v516 = vpack.c.b16 %v336, %v330
  %v517 = vpack.c.b16 %v337, %v331
  %v518 = vpack.c.b16 %v338, %v332
  %v519 = vpack.c.b16 %v339, %v333
  %v520 = vpack.c.b16 %v340, %v334
  %v521 = vpack.c.b16 %v347, %v341
  %v522 = vpack.c.b16 %v348, %v342
  %v523 = vpack.c.b16 %v349, %v343
  %v524 = vpack.c.b16 %v350, %v344
  %v525 = vpack.c.b16 %v351, %v345
  %v526 = vpack.c.b16 %v352, %v346
  %v527 = vpack.c.b16 %v359, %v353
  %v528 = vpack.c.b16 %v360, %v354
  %v529 = vpack.c.b16 %v361, %v355
  %v530 = vpack.c.b16 %v362, %v356
  %v531 = vpack.c.b16 %v363, %v357
  %v532 = vpack.c.b16 %v364, %v358
  %v533 = vpack.c.b16 %v371, %v365
  %v534 = vpack.c.b16 %v372, %v366
  %v535 = vpack.c.b16 %v373, %v367
  %v536 = vpack.c.b16 %v374, %v368
  %v537 = vpack.c.b16 %v375, %v369
  %v538 = vpack.c.b16 %v376, %v370
  %v539 = vpack.c.b16 %v383, %v377
  %v540 = vpack.c.b16 %v384, %v378
  %v541 = vpack.c.b16 %v385, %v379
  %v542 = vpack.c.b16 %v386, %v380
  %v543 = vpack.c.b16 %v387, %v381
  %v544 = vpack.c.b16 %v388, %v382
  %v545 = vpack.c.b16 %v395, %v389
  %v546 = vpack.c.b16 %v396, %v390
  %v547 = vpack.c.b16 %v397, %v391
  %v548 = vpack.c.b16 %v398, %v392
  %v549 = vpack.c.b16 %v399, %v393
  %v550 = vpack.c.b16 %v400, %v394
  %v551 = vpack.c.b16 %v407, %v401
  %v552 = vpack.c.b16 %v408, %v402
  %v553 = vpack.c.b16 %v409, %v403
  %v554 = vpack.c.b16 %v410, %v404
  %v555 = vpack.c.b16 %v411, %v405
  %v556 = vpack.c.b16 %v412, %v406
  %v557 = vpack.c.b16 %v419, %v413
  %v558 = vpack.c.b16 %v420, %v414
  %v559 = vpack.c.b16 %v421, %v415
  %v560 = vpack.c.b16 %v422, %v416
  %v561 = vpack.c.b16 %v423, %v417
  %v562 = vpack.c.b16 %v424, %v418
  %v563 = vpack.c.b16 %v431, %v425
  %v564 = vpack.c.b16 %v432, %v426
  %v565 = vpack.c.b16 %v433, %v427
  %v566 = vpack.c.b16 %v434, %v428
  %v567 = vpack.c.b16 %v435, %v429
  %v568 = vpack.c.b16 %v436, %v430
  %v569 = vpack.c.b16 %v443, %v437
  %v570 = vpack.c.b16 %v444, %v438
  %v571 = vpack.c.b16 %v445, %v439
  %v572 = vpack.c.b16 %v446, %v440
  %v573 = vpack.c.b16 %v447, %v441
  %v574 = vpack.c.b16 %v448, %v442
  %v575 = vpack.c.b16 %v455, %v449
  %v576 = vpack.c.b16 %v456, %v450
  %v577 = vpack.c.b16 %v457, %v451
  %v578 = vpack.c.b16 %v458, %v452
  %v579 = vpack.c.b16 %v459, %v453
  %v580 = vpack.c.b16 %v460, %v454
  %v581 = vpack.c.b16 %v467, %v461
  %v582 = vpack.c.b16 %v468, %v462
  %v583 = vpack.c.b16 %v469, %v463
  %v584 = vpack.c.b16 %v470, %v464
  %v585 = vpack.c.b16 %v471, %v465
  %v586 = vpack.c.b16 %v472, %v466
  %v587 = vpack.c.b16 %v479, %v473
  %v588 = vpack.c.b16 %v480, %v474
  %v589 = vpack.c.b16 %v481, %v475
  %v590 = vpack.c.b16 %v482, %v476
  %v591 = vpack.c.b16 %v483, %v477
  %v592 = vpack.c.b16 %v484, %v478
  %v593 = vpack.c.b16 %v491, %v485
  %v594 = vpack.c.b16 %v492, %v486
  %v595 = vpack.c.b16 %v493, %v487
  %v596 = vpack.c.b16 %v494, %v488
  %v597 = vpack.c.b16 %v495, %v489
  %v598 = vpack.c.b16 %v496, %v490
  %v599 = vpack.c.b16 %v503, %v497
  %v600 = vpack.c.b16 %v504, %v498
  %v601 = vpack.c.b16 %v505, %v499
  %v602 = vpack.c.b16 %v506, %v500
  %v603 = vpack.c.b16 %v507, %v501
  %v604 = vpack.c.b16 %v508, %v502
  %701 = vmatprep.subr.bf16.mxu0 %v552
  %702 = vmatpush1.bf16.msra.mxu0 %v551
  %703 = vmatprep.subr.bf16.mxu0 %v546
  %704 = vmatpush1.bf16.msra.mxu0 %v545
  %705 = vmatprep.subr.bf16.mxu0 %v540
  %706 = vmatpush1.bf16.msra.mxu0 %v539
  %707 = vmatprep.subr.bf16.mxu0 %v534
  %708 = vmatpush1.bf16.msra.mxu0 %v533
  %709 = vmatprep.subr.bf16.mxu0 %v528
  %710 = vmatpush1.bf16.msra.mxu0 %v527
  %711 = vmatprep.subr.bf16.mxu0 %v522
  %712 = vmatpush1.bf16.msra.mxu0 %v521
  %713 = vmatprep.subr.bf16.mxu0 %v516
  %714 = vmatpush1.bf16.msra.mxu0 %v515
  %715 = vmatprep.subr.bf16.mxu0 %v510
  %716 = vmatpush1.bf16.msra.mxu0 %v509
  %717 = vmatprep.subr.bf16.mxu0 %v600
  %718 = vmatpush2.bf16.msra.mxu0 %v599
  %719 = vmatprep.subr.bf16.mxu0 %v594
  %720 = vmatpush2.bf16.msra.mxu0 %v593
  %721 = vmatprep.subr.bf16.mxu0 %v588
  %722 = vmatpush2.bf16.msra.mxu0 %v587
  %723 = vmatprep.subr.bf16.mxu0 %v582
  %724 = vmatpush2.bf16.msra.mxu0 %v581
  %725 = vmatprep.subr.bf16.mxu0 %v576
  %726 = vmatpush2.bf16.msra.mxu0 %v575
  %727 = vmatprep.subr.bf16.mxu0 %v570
  %728 = vmatpush2.bf16.msra.mxu0 %v569
  %729 = vmatprep.subr.bf16.mxu0 %v564
  %730 = vmatpush2.bf16.msra.mxu0 %v563
  %731 = vmatprep.subr.bf16.mxu0 %v558
  %732 = vmatpush2.bf16.msra.mxu0 %v557
  %733 = vmatprep.mubr.bf16.mxu0 %v92
  %734 = vmatmul.mubr.bf16.gmra.mxu0 %v91
  %v735 = vpop.f32.mrf.mxu0
  %v736 = vadd.f32 %v194, %v735
  %v737 = vpop.f32.mrf.mxu0
  %v738 = vadd.f32 %v198, %v737
  %v739 = vpop.f32.mrf.mxu0
  %v740 = vadd.f32 %v194, %v739
  %v741 = vpop.f32.mrf.mxu0
  %v742 = vadd.f32 %v198, %v741
  %743 = vdwg.mxu0
  %744 = vmatprep.subr.bf16.mxu0 %v554
  %745 = vmatpush1.bf16.msra.mxu0 %v553
  %746 = vmatprep.subr.bf16.mxu0 %v548
  %747 = vmatpush1.bf16.msra.mxu0 %v547
  %748 = vmatprep.subr.bf16.mxu0 %v542
  %749 = vmatpush1.bf16.msra.mxu0 %v541
  %750 = vmatprep.subr.bf16.mxu0 %v536
  %751 = vmatpush1.bf16.msra.mxu0 %v535
  %752 = vmatprep.subr.bf16.mxu0 %v530
  %753 = vmatpush1.bf16.msra.mxu0 %v529
  %754 = vmatprep.subr.bf16.mxu0 %v524
  %755 = vmatpush1.bf16.msra.mxu0 %v523
  %756 = vmatprep.subr.bf16.mxu0 %v518
  %757 = vmatpush1.bf16.msra.mxu0 %v517
  %758 = vmatprep.subr.bf16.mxu0 %v512
  %759 = vmatpush1.bf16.msra.mxu0 %v511
  %760 = vmatprep.subr.bf16.mxu0 %v602
  %761 = vmatpush2.bf16.msra.mxu0 %v601
  %762 = vmatprep.subr.bf16.mxu0 %v596
  %763 = vmatpush2.bf16.msra.mxu0 %v595
  %764 = vmatprep.subr.bf16.mxu0 %v590
  %765 = vmatpush2.bf16.msra.mxu0 %v589
  %766 = vmatprep.subr.bf16.mxu0 %v584
  %767 = vmatpush2.bf16.msra.mxu0 %v583
  %768 = vmatprep.subr.bf16.mxu0 %v578
  %769 = vmatpush2.bf16.msra.mxu0 %v577
  %770 = vmatprep.subr.bf16.mxu0 %v572
  %771 = vmatpush2.bf16.msra.mxu0 %v571
  %772 = vmatprep.subr.bf16.mxu0 %v566
  %773 = vmatpush2.bf16.msra.mxu0 %v565
  %774 = vmatprep.subr.bf16.mxu0 %v560
  %775 = vmatpush2.bf16.msra.mxu0 %v559
  %776 = vmatprep.mubr.bf16.mxu0 %v92
  %777 = vmatmul.mubr.bf16.gmra.mxu0 %v91
  %v778 = vpop.f32.mrf.mxu0
  %v779 = vadd.f32 %v202, %v778
  %v780 = vpop.f32.mrf.mxu0
  %v781 = vadd.f32 %v206, %v780
  %v782 = vpop.f32.mrf.mxu0
  %v783 = vadd.f32 %v202, %v782
  %v784 = vpop.f32.mrf.mxu0
  %v785 = vadd.f32 %v206, %v784
  %786 = vdwg.mxu0
  %787 = vmatprep.subr.bf16.mxu0 %v556
  %788 = vmatpush1.bf16.msra.mxu0 %v555
  %789 = vmatprep.subr.bf16.mxu0 %v550
  %790 = vmatpush1.bf16.msra.mxu0 %v549
  %791 = vmatprep.subr.bf16.mxu0 %v544
  %792 = vmatpush1.bf16.msra.mxu0 %v543
  %793 = vmatprep.subr.bf16.mxu0 %v538
  %794 = vmatpush1.bf16.msra.mxu0 %v537
  %795 = vmatprep.subr.bf16.mxu0 %v532
  %796 = vmatpush1.bf16.msra.mxu0 %v531
  %797 = vmatprep.subr.bf16.mxu0 %v526
  %798 = vmatpush1.bf16.msra.mxu0 %v525
  %799 = vmatprep.subr.bf16.mxu0 %v520
  %800 = vmatpush1.bf16.msra.mxu0 %v519
  %801 = vmatprep.subr.bf16.mxu0 %v514
  %802 = vmatpush1.bf16.msra.mxu0 %v513
  %803 = vmatprep.subr.bf16.mxu0 %v604
  %804 = vmatpush2.bf16.msra.mxu0 %v603
  %805 = vmatprep.subr.bf16.mxu0 %v598
  %806 = vmatpush2.bf16.msra.mxu0 %v597
  %807 = vmatprep.subr.bf16.mxu0 %v592
  %808 = vmatpush2.bf16.msra.mxu0 %v591
  %809 = vmatprep.subr.bf16.mxu0 %v586
  %810 = vmatpush2.bf16.msra.mxu0 %v585
  %811 = vmatprep.subr.bf16.mxu0 %v580
  %812 = vmatpush2.bf16.msra.mxu0 %v579
  %813 = vmatprep.subr.bf16.mxu0 %v574
  %814 = vmatpush2.bf16.msra.mxu0 %v573
  %815 = vmatprep.subr.bf16.mxu0 %v568
  %816 = vmatpush2.bf16.msra.mxu0 %v567
  %817 = vmatprep.subr.bf16.mxu0 %v562
  %818 = vmatpush2.bf16.msra.mxu0 %v561
  %819 = vmatprep.mubr.bf16.mxu0 %v92
  %820 = vmatmul.mubr.bf16.gmra.mxu0 %v91
  %v821 = vpop.f32.mrf.mxu0
  %v822 = vadd.f32 %v210, %v821
  %v823 = vpop.f32.mrf.mxu0
  %v824 = vadd.f32 %v214, %v823
  %v825 = vpop.f32.mrf.mxu0
  %v826 = vadd.f32 %v210, %v825
  %v827 = vpop.f32.mrf.mxu0
  %v828 = vadd.f32 %v214, %v827
  %829 = vdwg.mxu0
  %v830 = vpack.c.bf16 %v740, %v736
  %v831 = vpack.c.bf16 %v742, %v738
  %v832 = vpack.c.bf16 %v783, %v779
  %v833 = vpack.c.bf16 %v785, %v781
  %v834 = vpack.c.bf16 %v826, %v822
  %v835 = vpack.c.bf16 %v828, %v824
  %v842 = vunpack.c.l.b16 %v830
  %v843 = vunpack.c.l.b16 %v831
  %v844 = vunpack.c.l.b16 %v832
  %v845 = vunpack.c.l.b16 %v833
  %v846 = vunpack.c.l.b16 %v834
  %v847 = vunpack.c.l.b16 %v835
  %v848 = vunpack.c.h.b16 %v830
  %v849 = vunpack.c.h.b16 %v831
  %v850 = vunpack.c.h.b16 %v832
  %v851 = vunpack.c.h.b16 %v833
  %v852 = vunpack.c.h.b16 %v834
  %v853 = vunpack.c.h.b16 %v835
  %v854 = vpack.c.b16 %v843, %v842
  %v855 = vpack.c.b16 %v845, %v844
  %v856 = vpack.c.b16 %v847, %v846
  %v857 = vpack.c.b16 %v849, %v848
  %v858 = vpack.c.b16 %v851, %v850
  %v859 = vpack.c.b16 %v853, %v852
  %866 = vst [vmem:[%s5] sm:$0xff] %v854
  %867 = vst [vmem:[%s5 + $0x8] sm:$0xff] %v855
  %868 = vst [vmem:[%s5 + $0x10] sm:$0xff] %v856
  %869 = vst [vmem:[%s5 + $0x18] sm:$0xff] %v857
  %870 = vst [vmem:[%s5 + $0x20] sm:$0xff] %v858
  %871 = vst [vmem:[%s5 + $0x28] sm:$0xff] %v859
  // Predicated region
  $region22: #{dialog_acts_predictor_forward.12} parent=0 // pred_check
    _
  $region23: #{dialog_acts_predictor_forward.12} parent=0 // pred_check_branch
    %873 = sbr.rel (0) target = $region25
  $region24: #{dialog_acts_predictor_forward.12} parent=0 // pred_region
    _
  $region25: #{dialog_acts_predictor_forward.12} parent=0 // pred_fallthru
    _
  // Predicated region
  $region26: #{dialog_acts_predictor_forward.12} parent=0 // pred_check
    _
  $region27: #{dialog_acts_predictor_forward.12} parent=0 // pred_check_branch
    %875 = sbr.rel (0) target = $region29
  $region28: #{dialog_acts_predictor_forward.12} parent=0 // pred_region
    _
  $region29: #{dialog_acts_predictor_forward.12} parent=0 // pred_fallthru
    _

// kernel: dialog_acts_predictor_forward.21
$region0: #{dialog_acts_predictor_forward.21}
  #allocation0 [shape = 'u32[]', space=smem, size = 0x4, offset = 0x4, fixed_abs, tag = 'smem constant byte address 0x4 - core index']
  #allocation1 [shape = 'u32[144,128]{1,0:T(1,128)}', space=vmem, size = 0x12000, scoped, tag = 'internal scratch']
  %s0 = inlined_call_operand.vmem [shape: bf16[16,256], index: 0, kind: input, shape index: {}]
  %s1 = inlined_call_operand.vmem [shape: f32[1,256], index: 1, kind: input, shape index: {}]
  %s2 = inlined_call_operand.vmem [shape: f32[1,256], index: 2, kind: input, shape index: {}]
  %s3 = inlined_call_operand.vmem [shape: f32[256,128], index: 3, kind: input, shape index: {}]
  %s4 = inlined_call_operand.vmem [shape: f32[1,128], index: 4, kind: input, shape index: {}]
  %s5 = inlined_call_operand.vmem [shape: f32[128,128], index: 5, kind: input, shape index: {}]
  %s6 = inlined_call_operand.vmem [shape: f32[1,128], index: 6, kind: input, shape index: {}]
  %s7 = inlined_call_operand.hbm [shape: f32[2,1,128], index: 7, kind: output, shape index: {0}]
  %s8 = inlined_call_operand.hbm [shape: f32[2,1,128], index: 8, kind: output, shape index: {1}]
  %9 = xla_tuple %s7, %s8
  %s10 = sld [smem:[#allocation0]]
  $region69: #{dialog_acts_predictor_forward.21} parent=0
    _
  %s12 = ssub.s32 1, %s10
  %s13 = scalar_select 0, %s12, %s10
  $region1: #{dialog_acts_predictor_forward.21} parent=0
    #allocation2 [shape = 'u8[1024]{0}', space=vmem, size = 0x400, scoped, tag = 'output window, operand 0']
    #allocation3 [shape = 's32[2]{0}', space=sflag, size = 0x8, scoped, tag = 'scoped memory for dialog_acts_predictor_forward.21']
    #allocation4 [shape = 'u8[1024]{0}', space=vmem, size = 0x400, scoped, tag = 'output window, operand 1']
    #allocation5 [shape = 's32[2]{0}', space=sflag, size = 0x8, scoped, tag = 'scoped memory for dialog_acts_predictor_forward.21']
    %14 = vsyncpa [#allocation3], 0
    %s15 = scalar_lea.sflag [#allocation3], 1
    %16 = vsyncpa %s15, 0
    %17 = vsyncpa [#allocation5], 0
    %s18 = scalar_lea.sflag [#allocation5], 1
    %19 = vsyncpa %s18, 0
    loop: start=0, step=1, limit=4
    $region2: #{dialog_acts_predictor_forward.21} parent=1 // loop_pre_header
      _
    $region3: #{dialog_acts_predictor_forward.21} parent=1 // loop_header
      %s21 = sphi 0, %s25
      %p22 = scmp.ge.s32.totalorder %s21, 4
      %s31 = sphi 0, %s33
      %s34 = sphi 0, %s31
      %s35 = sphi 0, %s34
      %s51 = sphi 0, %s35
      %s55 = sphi 0, %s55
      %s57 = sphi 0, %s55
      %s58 = sphi 0, %s57
      %s72 = sphi 0, %s58
      %s76 = sphi 0, %s76
      %s78 = sphi 0, %s76
      %s79 = sphi 0, %s78
      %s93 = sphi 0, %s79
      %s97 = sphi 0, %s97
      %s99 = sphi 0, %s97
      %s100 = sphi 0, %s99
      %s114 = sphi 0, %s100
      %s118 = sphi 0, %s118
      %s120 = sphi 0, %s118
      %s121 = sphi 0, %s120
      %s135 = sphi 0, %s121
      %s139 = sphi 0, %s139
      %s141 = sphi 0, %s139
      %s142 = sphi 0, %s141
      %s156 = sphi 0, %s142
      %s160 = sphi 0, %s160
      %s162 = sphi 0, %s160
      %s163 = sphi 0, %s162
      %s177 = sphi 0, %s163
      %s183 = sphi 0, %s185
      %s186 = sphi 0, %s183
      %s187 = sphi 0, %s186
      %s203 = sphi 0, %s187
      %s209 = sphi 0, %s211
      %s212 = sphi 0, %s209
      %s213 = sphi 0, %s212
      %s229 = sphi 0, %s213
    $region4: #{dialog_acts_predictor_forward.21} parent=1 // loop_header_branch
      %24 = sbr.rel (%p22) target = $region8
    $region5: #{dialog_acts_predictor_forward.21} parent=1 // loop_body
      %s26 = ssub.s32 %s21, 1
      %s27 = ssub.s32 %s21, 2
      %s28 = sadd.s32 %s21, 1
      %s29 = ssub.s32 %s21, %s28
      %p30 = scmp.eq.s32.totalorder %s29, 0
      %s32 = sadd.s32 %s31, 1
      %s33 = scalar_select %p30, %s31, %s32
      %p36 = pneg %p30
      %p37 = scmp.eq.s32.totalorder %s21, 1
      %p38 = por %p36, %p37
      %p39 = scmp.ne.s32.totalorder %s31, %s34
      %p40 = scmp.eq.s32.totalorder %s21, 0
      %p41 = por %p39, %p40
      %p42 = scmp.ne.s32.totalorder %s31, %s34
      %p43 = scmp.eq.s32.totalorder %s26, 1
      %p44 = por %p42, %p43
      %p45 = scmp.ne.s32.totalorder %s34, %s35
      %p46 = scmp.eq.s32.totalorder %s26, 0
      %p47 = por %p45, %p46
      %p48 = scmp.ne.s32.totalorder %s34, %s35
      %p49 = scmp.eq.s32.totalorder %s27, 1
      %p50 = por %p48, %p49
      %p52 = scmp.ne.s32.totalorder %s35, %s51
      %p53 = scmp.eq.s32.totalorder %s27, 0
      %p54 = por %p52, %p53
      %s56 = sadd.s32 %s55, 1
      %p59 = scmp.eq.s32.totalorder %s21, 1
      %p60 = scmp.ne.s32.totalorder %s55, %s57
      %p61 = scmp.eq.s32.totalorder %s21, 0
      %p62 = por %p60, %p61
      %p63 = scmp.ne.s32.totalorder %s55, %s57
      %p64 = scmp.eq.s32.totalorder %s26, 1
      %p65 = por %p63, %p64
      %p66 = scmp.ne.s32.totalorder %s57, %s58
      %p67 = scmp.eq.s32.totalorder %s26, 0
      %p68 = por %p66, %p67
      %p69 = scmp.ne.s32.totalorder %s57, %s58
      %p70 = scmp.eq.s32.totalorder %s27, 1
      %p71 = por %p69, %p70
      %p73 = scmp.ne.s32.totalorder %s58, %s72
      %p74 = scmp.eq.s32.totalorder %s27, 0
      %p75 = por %p73, %p74
      %s77 = sadd.s32 %s76, 1
      %p80 = scmp.eq.s32.totalorder %s21, 1
      %p81 = scmp.ne.s32.totalorder %s76, %s78
      %p82 = scmp.eq.s32.totalorder %s21, 0
      %p83 = por %p81, %p82
      %p84 = scmp.ne.s32.totalorder %s76, %s78
      %p85 = scmp.eq.s32.totalorder %s26, 1
      %p86 = por %p84, %p85
      %p87 = scmp.ne.s32.totalorder %s78, %s79
      %p88 = scmp.eq.s32.totalorder %s26, 0
      %p89 = por %p87, %p88
      %p90 = scmp.ne.s32.totalorder %s78, %s79
      %p91 = scmp.eq.s32.totalorder %s27, 1
      %p92 = por %p90, %p91
      %p94 = scmp.ne.s32.totalorder %s79, %s93
      %p95 = scmp.eq.s32.totalorder %s27, 0
      %p96 = por %p94, %p95
      %s98 = sadd.s32 %s97, 1
      %p101 = scmp.eq.s32.totalorder %s21, 1
      %p102 = scmp.ne.s32.totalorder %s97, %s99
      %p103 = scmp.eq.s32.totalorder %s21, 0
      %p104 = por %p102, %p103
      %p105 = scmp.ne.s32.totalorder %s97, %s99
      %p106 = scmp.eq.s32.totalorder %s26, 1
      %p107 = por %p105, %p106
      %p108 = scmp.ne.s32.totalorder %s99, %s100
      %p109 = scmp.eq.s32.totalorder %s26, 0
      %p110 = por %p108, %p109
      %p111 = scmp.ne.s32.totalorder %s99, %s100
      %p112 = scmp.eq.s32.totalorder %s27, 1
      %p113 = por %p111, %p112
      %p115 = scmp.ne.s32.totalorder %s100, %s114
      %p116 = scmp.eq.s32.totalorder %s27, 0
      %p117 = por %p115, %p116
      %s119 = sadd.s32 %s118, 1
      %p122 = scmp.eq.s32.totalorder %s21, 1
      %p123 = scmp.ne.s32.totalorder %s118, %s120
      %p124 = scmp.eq.s32.totalorder %s21, 0
      %p125 = por %p123, %p124
      %p126 = scmp.ne.s32.totalorder %s118, %s120
      %p127 = scmp.eq.s32.totalorder %s26, 1
      %p128 = por %p126, %p127
      %p129 = scmp.ne.s32.totalorder %s120, %s121
      %p130 = scmp.eq.s32.totalorder %s26, 0
      %p131 = por %p129, %p130
      %p132 = scmp.ne.s32.totalorder %s120, %s121
      %p133 = scmp.eq.s32.totalorder %s27, 1
      %p134 = por %p132, %p133
      %p136 = scmp.ne.s32.totalorder %s121, %s135
      %p137 = scmp.eq.s32.totalorder %s27, 0
      %p138 = por %p136, %p137
      %s140 = sadd.s32 %s139, 1
      %p143 = scmp.eq.s32.totalorder %s21, 1
      %p144 = scmp.ne.s32.totalorder %s139, %s141
      %p145 = scmp.eq.s32.totalorder %s21, 0
      %p146 = por %p144, %p145
      %p147 = scmp.ne.s32.totalorder %s139, %s141
      %p148 = scmp.eq.s32.totalorder %s26, 1
      %p149 = por %p147, %p148
      %p150 = scmp.ne.s32.totalorder %s141, %s142
      %p151 = scmp.eq.s32.totalorder %s26, 0
      %p152 = por %p150, %p151
      %p153 = scmp.ne.s32.totalorder %s141, %s142
      %p154 = scmp.eq.s32.totalorder %s27, 1
      %p155 = por %p153, %p154
      %p157 = scmp.ne.s32.totalorder %s142, %s156
      %p158 = scmp.eq.s32.totalorder %s27, 0
      %p159 = por %p157, %p158
      %s161 = sadd.s32 %s160, 1
      %p164 = scmp.eq.s32.totalorder %s21, 1
      %p165 = scmp.ne.s32.totalorder %s160, %s162
      %p166 = scmp.eq.s32.totalorder %s21, 0
      %p167 = por %p165, %p166
      %p168 = scmp.ne.s32.totalorder %s160, %s162
      %p169 = scmp.eq.s32.totalorder %s26, 1
      %p170 = por %p168, %p169
      %p171 = scmp.ne.s32.totalorder %s162, %s163
      %p172 = scmp.eq.s32.totalorder %s26, 0
      %p173 = por %p171, %p172
      %p174 = scmp.ne.s32.totalorder %s162, %s163
      %p175 = scmp.eq.s32.totalorder %s27, 1
      %p176 = por %p174, %p175
      %p178 = scmp.ne.s32.totalorder %s163, %s177
      %p179 = scmp.eq.s32.totalorder %s27, 0
      %p180 = por %p178, %p179
      %s181 = ssub.s32 %s21, %s28
      %p182 = scmp.eq.s32.totalorder %s181, 0
      %s184 = sadd.s32 %s183, 1
      %s185 = scalar_select %p182, %s183, %s184
      %p188 = pneg %p182
      %p189 = scmp.eq.s32.totalorder %s21, 1
      %p190 = por %p188, %p189
      %p191 = scmp.ne.s32.totalorder %s183, %s186
      %p192 = scmp.eq.s32.totalorder %s21, 0
      %p193 = por %p191, %p192
      %p194 = scmp.ne.s32.totalorder %s183, %s186
      %p195 = scmp.eq.s32.totalorder %s26, 1
      %p196 = por %p194, %p195
      %p197 = scmp.ne.s32.totalorder %s186, %s187
      %p198 = scmp.eq.s32.totalorder %s26, 0
      %p199 = por %p197, %p198
      %p200 = scmp.ne.s32.totalorder %s186, %s187
      %p201 = scmp.eq.s32.totalorder %s27, 1
      %p202 = por %p200, %p201
      %p204 = scmp.ne.s32.totalorder %s187, %s203
      %p205 = scmp.eq.s32.totalorder %s27, 0
      %p206 = por %p204, %p205
      %s207 = ssub.s32 %s21, %s28
      %p208 = scmp.eq.s32.totalorder %s207, 0
      %s210 = sadd.s32 %s209, 1
      %s211 = scalar_select %p208, %s209, %s210
      %p214 = pneg %p208
      %p215 = scmp.eq.s32.totalorder %s21, 1
      %p216 = por %p214, %p215
      %p217 = scmp.ne.s32.totalorder %s209, %s212
      %p218 = scmp.eq.s32.totalorder %s21, 0
      %p219 = por %p217, %p218
      %p220 = scmp.ne.s32.totalorder %s209, %s212
      %p221 = scmp.eq.s32.totalorder %s26, 1
      %p222 = por %p220, %p221
      %p223 = scmp.ne.s32.totalorder %s212, %s213
      %p224 = scmp.eq.s32.totalorder %s26, 0
      %p225 = por %p223, %p224
      %p226 = scmp.ne.s32.totalorder %s212, %s213
      %p227 = scmp.eq.s32.totalorder %s27, 1
      %p228 = por %p226, %p227
      %p230 = scmp.ne.s32.totalorder %s213, %s229
      %p231 = scmp.eq.s32.totalorder %s27, 0
      %p232 = por %p230, %p231
      %p233 = scmp.le.s32.totalorder 1, %s21
      %p234 = scmp.lt.s32.totalorder %s21, 3
      %p235 = pnand %p233, %p234
      %p236 = pneg %p235
      // Predicated region
      $region9: #{dialog_acts_predictor_forward.21} parent=5 // pred_check
        _
      $region10: #{dialog_acts_predictor_forward.21} parent=5 // pred_check_branch
        %238 = sbr.rel (%p235) target = $region12
      $region11: #{dialog_acts_predictor_forward.21} parent=5 // pred_region
        %s239 = ssub.s32 %s21, 1
        // Predicated region
        $region13: #{dialog_acts_predictor_forward.21} parent=11 // pred_check
          %p240 = pneg %p68
        $region14: #{dialog_acts_predictor_forward.21} parent=11 // pred_check_branch
          %242 = sbr.rel (%p240) target = $region16
        $region15: #{dialog_acts_predictor_forward.21} parent=11 // pred_region
          _
        $region16: #{dialog_acts_predictor_forward.21} parent=11 // pred_fallthru
          _
        // Predicated region
        $region17: #{dialog_acts_predictor_forward.21} parent=11 // pred_check
          %p243 = pneg %p89
        $region18: #{dialog_acts_predictor_forward.21} parent=11 // pred_check_branch
          %245 = sbr.rel (%p243) target = $region20
        $region19: #{dialog_acts_predictor_forward.21} parent=11 // pred_region
          _
        $region20: #{dialog_acts_predictor_forward.21} parent=11 // pred_fallthru
          _
        // Predicated region
        $region21: #{dialog_acts_predictor_forward.21} parent=11 // pred_check
          %p246 = pneg %p110
        $region22: #{dialog_acts_predictor_forward.21} parent=11 // pred_check_branch
          %248 = sbr.rel (%p246) target = $region24
        $region23: #{dialog_acts_predictor_forward.21} parent=11 // pred_region
          _
        $region24: #{dialog_acts_predictor_forward.21} parent=11 // pred_fallthru
          _
        // Predicated region
        $region25: #{dialog_acts_predictor_forward.21} parent=11 // pred_check
          %p249 = pneg %p131
        $region26: #{dialog_acts_predictor_forward.21} parent=11 // pred_check_branch
          %251 = sbr.rel (%p249) target = $region28
        $region27: #{dialog_acts_predictor_forward.21} parent=11 // pred_region
          _
        $region28: #{dialog_acts_predictor_forward.21} parent=11 // pred_fallthru
          _
        // Predicated region
        $region29: #{dialog_acts_predictor_forward.21} parent=11 // pred_check
          %p252 = pneg %p152
        $region30: #{dialog_acts_predictor_forward.21} parent=11 // pred_check_branch
          %254 = sbr.rel (%p252) target = $region32
        $region31: #{dialog_acts_predictor_forward.21} parent=11 // pred_region
          _
        $region32: #{dialog_acts_predictor_forward.21} parent=11 // pred_fallthru
          _
        // Predicated region
        $region33: #{dialog_acts_predictor_forward.21} parent=11 // pred_check
          %p255 = pneg %p173
        $region34: #{dialog_acts_predictor_forward.21} parent=11 // pred_check_branch
          %257 = sbr.rel (%p255) target = $region36
        $region35: #{dialog_acts_predictor_forward.21} parent=11 // pred_region
          _
        $region36: #{dialog_acts_predictor_forward.21} parent=11 // pred_fallthru
          _
      $region12: #{dialog_acts_predictor_forward.21} parent=5 // pred_fallthru
        _
      %p258 = scmp.lt.s32.totalorder %s21, 2
      // Predicated region
      $region37: #{dialog_acts_predictor_forward.21} parent=5 // pred_check
        %p259 = pneg %p258
      $region38: #{dialog_acts_predictor_forward.21} parent=5 // pred_check_branch
        %261 = sbr.rel (%p259) target = $region40
      $region39: #{dialog_acts_predictor_forward.21} parent=5 // pred_region
        // Predicated region
        $region41: #{dialog_acts_predictor_forward.21} parent=39 // pred_check
          %p262 = pneg %p41
        $region42: #{dialog_acts_predictor_forward.21} parent=39 // pred_check_branch
          %264 = sbr.rel (%p262) target = $region44
        $region43: #{dialog_acts_predictor_forward.21} parent=39 // pred_region
          %p265 = scmp.lt.s32.totalorder %s21, 1
          %s266 = scalar_select %p265, %s21, 1
          %s267 = smul.addr %s266, 2
          %s268 = smul.addr %s267, 4
          %s269 = scalar_lea.vmem %s0, %s268
        $region44: #{dialog_acts_predictor_forward.21} parent=39 // pred_fallthru
          _
      $region40: #{dialog_acts_predictor_forward.21} parent=5 // pred_fallthru
        _
      %p270 = scmp.le.s32.totalorder 1, %s21
      %p271 = scmp.lt.s32.totalorder %s21, 3
      %p272 = pnand %p270, %p271
      %p273 = pneg %p272
      // Predicated region
      $region45: #{dialog_acts_predictor_forward.21} parent=5 // pred_check
        _
      $region46: #{dialog_acts_predictor_forward.21} parent=5 // pred_check_branch
        %275 = sbr.rel (%p272) target = $region48
      $region47: #{dialog_acts_predictor_forward.21} parent=5 // pred_region
        %s276 = ssub.s32 %s21, 1
        %p277 = scmp.lt.s32.totalorder %s26, 1
        %s278 = scalar_select %p277, %s26, 1
        %s279 = smul.addr %s278, 2
        %s280 = smul.addr %s279, 4
        %s281 = scalar_lea.vmem %s0, %s280
        %p282 = pneg %p47
        %p283 = pneg %p44
        %p284 = pneg %p68
        %p285 = pneg %p65
        %p286 = pneg %p89
        %p287 = pneg %p86
        %p288 = pneg %p110
        %p289 = pneg %p107
        %p290 = pneg %p131
        %p291 = pneg %p128
        %p292 = pneg %p152
        %p293 = pneg %p149
        %p294 = pneg %p173
        %p295 = pneg %p170
        %p296 = pneg %p199
        %p297 = pneg %p196
        %s298 = sand.u32 %s186, 1
        %s299 = scalar_lea.sflag [#allocation3], %s298
        %s300 = sand.u32 %s186, 1
        %s301 = scalar_lea.vmem [#allocation2], %s300
        %p302 = pneg %p225
        %p303 = pneg %p222
        %s304 = sand.u32 %s212, 1
        %s305 = scalar_lea.sflag [#allocation5], %s304
        %s306 = sand.u32 %s212, 1
        %s307 = scalar_lea.vmem [#allocation4], %s306
        %p308 = scmp.lt.s32.totalorder %s26, 1
        %s309 = scalar_select %p308, %s26, 1
        %s310 = smul.addr %s309, 2
        %s311 = smul.addr %s310, 4
        %s312 = scalar_lea.vmem %s0, %s311
        %v313 = vld [vmem:[%s312] sm:$0xff]
        %v314 = vunpack.c.l.bf16 %v313
        %v315 = vunpack.c.h.bf16 %v313
        %v316 = vld [vmem:[%s1] sm:$0x3]
        %v317 = vld [vmem:[%s2] sm:$0x3]
        %v318 = vadd.f32 %v314, %v315
        %319 = vadd.xlane.f32.xlu0 %v318
        %v320 = vpop.xlane.xlu0 %319
        %v321 = vrcp.pop 256.0
        %v322 = vmul.f32 %v320, %v321
        %v323 = vsub.f32 %v314, %v322
        %v324 = vsub.f32 %v315, %v322
        %v325 = vmul.f32 %v323, %v323
        %v326 = vmul.f32 %v324, %v324
        %v327 = vadd.f32 %v325, %v326
        %328 = vadd.xlane.f32.xlu0 %v327
        %v329 = vpop.xlane.xlu0 %328
        %v330 = vmul.f32 %v329, %v321
        %v331 = vadd.f32 %v330, 1e-12
        %v332 = vrsqrt.pop %v331
        %v333 = vmul.f32 %v323, %v332
        %v334 = vmul.f32 %v324, %v332
        %v336 = vlaneseq
        %v337 = vshrl.u32 %v336, 7
        %v338 = vsub.s32 0, %v337
        %v339 = vrot.slane %v316, %v338
        %v340 = vlaneseq
        %v341 = vshrl.u32 %v340, 7
        %v342 = vsub.s32 1, %v341
        %v343 = vrot.slane %v316, %v342
        %v346 = vmul.f32 %v333, %v339
        %v347 = vmul.f32 %v334, %v343
        %v349 = vlaneseq
        %v350 = vshrl.u32 %v349, 7
        %v351 = vsub.s32 0, %v350
        %v352 = vrot.slane %v317, %v351
        %v353 = vlaneseq
        %v354 = vshrl.u32 %v353, 7
        %v355 = vsub.s32 1, %v354
        %v356 = vrot.slane %v317, %v355
        %v359 = vadd.f32 %v346, %v352
        %v360 = vadd.f32 %v347, %v356
        %v361 = vlaneseq
        %v362 = vshrl.u32 %v361, 7
        %vm363 = vcmp.lt.s32.totalorder %v362, 8
        %v364 = vsel %vm363, 1, 0
        %v365 = vcvt.s32.f32 %v364
        %v366 = vmul.f32 %v359, %v365
        %v367 = vmul.f32 %v360, %v365
        %v368 = vrot.slane %v366, 4
        %v369 = vadd.f32 %v366, %v368
        %v370 = vrot.slane %v369, 2
        %v371 = vadd.f32 %v369, %v370
        %v372 = vrot.slane %v371, 1
        %v373 = vadd.f32 %v371, %v372
        %v374 = vrot.slane %v367, 4
        %v375 = vadd.f32 %v367, %v374
        %v376 = vrot.slane %v375, 2
        %v377 = vadd.f32 %v375, %v376
        %v378 = vrot.slane %v377, 1
        %v379 = vadd.f32 %v377, %v378
        %v380 = vmul.f32 %v373, 0.125
        %v381 = vmul.f32 %v379, 0.125
        %v382 = vld [vmem:[%s3] sm:$0xff]
        %v383 = vld [vmem:[%s3 + $0x8] sm:$0xff]
        %v384 = vld [vmem:[%s3 + $0x10] sm:$0xff]
        %v385 = vld [vmem:[%s3 + $0x18] sm:$0xff]
        %v386 = vld [vmem:[%s3 + $0x20] sm:$0xff]
        %v387 = vld [vmem:[%s3 + $0x28] sm:$0xff]
        %v388 = vld [vmem:[%s3 + $0x30] sm:$0xff]
        %v389 = vld [vmem:[%s3 + $0x38] sm:$0xff]
        %v390 = vld [vmem:[%s3 + $0x40] sm:$0xff]
        %v391 = vld [vmem:[%s3 + $0x48] sm:$0xff]
        %v392 = vld [vmem:[%s3 + $0x50] sm:$0xff]
        %v393 = vld [vmem:[%s3 + $0x58] sm:$0xff]
        %v394 = vld [vmem:[%s3 + $0x60] sm:$0xff]
        %v395 = vld [vmem:[%s3 + $0x68] sm:$0xff]
        %v396 = vld [vmem:[%s3 + $0x70] sm:$0xff]
        %v397 = vld [vmem:[%s3 + $0x78] sm:$0xff]
        %v398 = vld [vmem:[%s3 + $0x80] sm:$0xff]
        %v399 = vld [vmem:[%s3 + $0x88] sm:$0xff]
        %v400 = vld [vmem:[%s3 + $0x90] sm:$0xff]
        %v401 = vld [vmem:[%s3 + $0x98] sm:$0xff]
        %v402 = vld [vmem:[%s3 + $0xa0] sm:$0xff]
        %v403 = vld [vmem:[%s3 + $0xa8] sm:$0xff]
        %v404 = vld [vmem:[%s3 + $0xb0] sm:$0xff]
        %v405 = vld [vmem:[%s3 + $0xb8] sm:$0xff]
        %v406 = vld [vmem:[%s3 + $0xc0] sm:$0xff]
        %v407 = vld [vmem:[%s3 + $0xc8] sm:$0xff]
        %v408 = vld [vmem:[%s3 + $0xd0] sm:$0xff]
        %v409 = vld [vmem:[%s3 + $0xd8] sm:$0xff]
        %v410 = vld [vmem:[%s3 + $0xe0] sm:$0xff]
        %v411 = vld [vmem:[%s3 + $0xe8] sm:$0xff]
        %v412 = vld [vmem:[%s3 + $0xf0] sm:$0xff]
        %v413 = vld [vmem:[%s3 + $0xf8] sm:$0xff]
        %v414 = vld [vmem:[%s4] sm:$0x1]
        %415 = vmatprep.subr.mxu0 0.0
        %416 = vmatpush1.msra.mxu0 %v397
        %417 = vmatprep.subr.mxu0 0.0
        %418 = vmatpush1.msra.mxu0 %v396
        %419 = vmatprep.subr.mxu0 0.0
        %420 = vmatpush1.msra.mxu0 %v395
        %421 = vmatprep.subr.mxu0 0.0
        %422 = vmatpush1.msra.mxu0 %v394
        %423 = vmatprep.subr.mxu0 0.0
        %424 = vmatpush1.msra.mxu0 %v393
        %425 = vmatprep.subr.mxu0 0.0
        %426 = vmatpush1.msra.mxu0 %v392
        %427 = vmatprep.subr.mxu0 0.0
        %428 = vmatpush1.msra.mxu0 %v391
        %429 = vmatprep.subr.mxu0 0.0
        %430 = vmatpush1.msra.mxu0 %v390
        %431 = vmatprep.subr.mxu0 0.0
        %432 = vmatpush1.msra.mxu0 %v389
        %433 = vmatprep.subr.mxu0 0.0
        %434 = vmatpush1.msra.mxu0 %v388
        %435 = vmatprep.subr.mxu0 0.0
        %436 = vmatpush1.msra.mxu0 %v387
        %437 = vmatprep.subr.mxu0 0.0
        %438 = vmatpush1.msra.mxu0 %v386
        %439 = vmatprep.subr.mxu0 0.0
        %440 = vmatpush1.msra.mxu0 %v385
        %441 = vmatprep.subr.mxu0 0.0
        %442 = vmatpush1.msra.mxu0 %v384
        %443 = vmatprep.subr.mxu0 0.0
        %444 = vmatpush1.msra.mxu0 %v383
        %445 = vmatprep.subr.mxu0 0.0
        %446 = vmatpush1.msra.mxu0 %v382
        %447 = vmatprep.subr.mxu0 0.0
        %448 = vmatpush2.msra.mxu0 %v413
        %449 = vmatprep.subr.mxu0 0.0
        %450 = vmatpush2.msra.mxu0 %v412
        %451 = vmatprep.subr.mxu0 0.0
        %452 = vmatpush2.msra.mxu0 %v411
        %453 = vmatprep.subr.mxu0 0.0
        %454 = vmatpush2.msra.mxu0 %v410
        %455 = vmatprep.subr.mxu0 0.0
        %456 = vmatpush2.msra.mxu0 %v409
        %457 = vmatprep.subr.mxu0 0.0
        %458 = vmatpush2.msra.mxu0 %v408
        %459 = vmatprep.subr.mxu0 0.0
        %460 = vmatpush2.msra.mxu0 %v407
        %461 = vmatprep.subr.mxu0 0.0
        %462 = vmatpush2.msra.mxu0 %v406
        %463 = vmatprep.subr.mxu0 0.0
        %464 = vmatpush2.msra.mxu0 %v405
        %465 = vmatprep.subr.mxu0 0.0
        %466 = vmatpush2.msra.mxu0 %v404
        %467 = vmatprep.subr.mxu0 0.0
        %468 = vmatpush2.msra.mxu0 %v403
        %469 = vmatprep.subr.mxu0 0.0
        %470 = vmatpush2.msra.mxu0 %v402
        %471 = vmatprep.subr.mxu0 0.0
        %472 = vmatpush2.msra.mxu0 %v401
        %473 = vmatprep.subr.mxu0 0.0
        %474 = vmatpush2.msra.mxu0 %v400
        %475 = vmatprep.subr.mxu0 0.0
        %476 = vmatpush2.msra.mxu0 %v399
        %477 = vmatprep.subr.mxu0 0.0
        %478 = vmatpush2.msra.mxu0 %v398
        %479 = vmatprep.mubr.f32.mxu0 %v381
        %480 = vmatmul.mubr.f32.gmra.mxu0 %v380
        %v481 = vpop.f32.mrf.mxu0
        %v482 = vadd.f32 %v414, %v481
        %v483 = vpop.f32.mrf.mxu0
        %484 = vdwg.mxu0
        %v485 = vld [vmem:[%s5] sm:$0xff]
        %v486 = vld [vmem:[%s5 + $0x8] sm:$0xff]
        %v487 = vld [vmem:[%s5 + $0x10] sm:$0xff]
        %v488 = vld [vmem:[%s5 + $0x18] sm:$0xff]
        %v489 = vld [vmem:[%s5 + $0x20] sm:$0xff]
        %v490 = vld [vmem:[%s5 + $0x28] sm:$0xff]
        %v491 = vld [vmem:[%s5 + $0x30] sm:$0xff]
        %v492 = vld [vmem:[%s5 + $0x38] sm:$0xff]
        %v493 = vld [vmem:[%s5 + $0x40] sm:$0xff]
        %v494 = vld [vmem:[%s5 + $0x48] sm:$0xff]
        %v495 = vld [vmem:[%s5 + $0x50] sm:$0xff]
        %v496 = vld [vmem:[%s5 + $0x58] sm:$0xff]
        %v497 = vld [vmem:[%s5 + $0x60] sm:$0xff]
        %v498 = vld [vmem:[%s5 + $0x68] sm:$0xff]
        %v499 = vld [vmem:[%s5 + $0x70] sm:$0xff]
        %v500 = vld [vmem:[%s5 + $0x78] sm:$0xff]
        %v501 = vld [vmem:[%s6] sm:$0x1]
        %502 = vmatprep.subr.mxu0 0.0
        %503 = vmatpush1.msra.mxu0 %v500
        %504 = vmatprep.subr.mxu0 0.0
        %505 = vmatpush1.msra.mxu0 %v499
        %506 = vmatprep.subr.mxu0 0.0
        %507 = vmatpush1.msra.mxu0 %v498
        %508 = vmatprep.subr.mxu0 0.0
        %509 = vmatpush1.msra.mxu0 %v497
        %510 = vmatprep.subr.mxu0 0.0
        %511 = vmatpush1.msra.mxu0 %v496
        %512 = vmatprep.subr.mxu0 0.0
        %513 = vmatpush1.msra.mxu0 %v495
        %514 = vmatprep.subr.mxu0 0.0
        %515 = vmatpush1.msra.mxu0 %v494
        %516 = vmatprep.subr.mxu0 0.0
        %517 = vmatpush1.msra.mxu0 %v493
        %518 = vmatprep.subr.mxu0 0.0
        %519 = vmatpush1.msra.mxu0 %v492
        %520 = vmatprep.subr.mxu0 0.0
        %521 = vmatpush1.msra.mxu0 %v491
        %522 = vmatprep.subr.mxu0 0.0
        %523 = vmatpush1.msra.mxu0 %v490
        %524 = vmatprep.subr.mxu0 0.0
        %525 = vmatpush1.msra.mxu0 %v489
        %526 = vmatprep.subr.mxu0 0.0
        %527 = vmatpush1.msra.mxu0 %v488
        %528 = vmatprep.subr.mxu0 0.0
        %529 = vmatpush1.msra.mxu0 %v487
        %530 = vmatprep.subr.mxu0 0.0
        %531 = vmatpush1.msra.mxu0 %v486
        %532 = vmatprep.subr.mxu0 0.0
        %533 = vmatpush1.msra.mxu0 %v485
        %534 = vmatprep.subr.mxu0 0.0
        %535 = vmatpush2.msra.mxu0 0.0
        %536 = vmatprep.subr.mxu0 0.0
        %537 = vmatpush2.msra.mxu0 0.0
        %538 = vmatprep.subr.mxu0 0.0
        %539 = vmatpush2.msra.mxu0 0.0
        %540 = vmatprep.subr.mxu0 0.0
        %541 = vmatpush2.msra.mxu0 0.0
        %542 = vmatprep.subr.mxu0 0.0
        %543 = vmatpush2.msra.mxu0 0.0
        %544 = vmatprep.subr.mxu0 0.0
        %545 = vmatpush2.msra.mxu0 0.0
        %546 = vmatprep.subr.mxu0 0.0
        %547 = vmatpush2.msra.mxu0 0.0
        %548 = vmatprep.subr.mxu0 0.0
        %549 = vmatpush2.msra.mxu0 0.0
        %550 = vmatprep.subr.mxu0 0.0
        %551 = vmatpush2.msra.mxu0 0.0
        %552 = vmatprep.subr.mxu0 0.0
        %553 = vmatpush2.msra.mxu0 0.0
        %554 = vmatprep.subr.mxu0 0.0
        %555 = vmatpush2.msra.mxu0 0.0
        %556 = vmatprep.subr.mxu0 0.0
        %557 = vmatpush2.msra.mxu0 0.0
        %558 = vmatprep.subr.mxu0 0.0
        %559 = vmatpush2.msra.mxu0 0.0
        %560 = vmatprep.subr.mxu0 0.0
        %561 = vmatpush2.msra.mxu0 0.0
        %562 = vmatprep.subr.mxu0 0.0
        %563 = vmatpush2.msra.mxu0 0.0
        %564 = vmatprep.subr.mxu0 0.0
        %565 = vmatpush2.msra.mxu0 0.0
        %566 = vmatprep.mubr.f32.mxu0 0.0
        %567 = vmatmul.mubr.f32.gmra.mxu0 %v482
        %v568 = vpop.f32.mrf.mxu0
        %v569 = vadd.f32 %v501, %v568
        %v570 = vpop.f32.mrf.mxu0
        %571 = vdwg.mxu0
        %572 = vst [vmem:[%s307] sm:$0x1] %v482
        %573 = vst [vmem:[%s301] sm:$0x1] %v569
        %s574 = sand.u32 %s186, 1
        %s575 = scalar_lea.sflag [#allocation3], %s574
        %s576 = sand.u32 %s186, 1
        %s577 = scalar_lea.vmem [#allocation2], %s576
        %s578 = sand.u32 %s212, 1
        %s579 = scalar_lea.sflag [#allocation5], %s578
        %s580 = sand.u32 %s212, 1
        %s581 = scalar_lea.vmem [#allocation4], %s580
        // Predicated region
        $region49: #{dialog_acts_predictor_forward.21} parent=47 // pred_check
          %p582 = pneg %p196
        $region50: #{dialog_acts_predictor_forward.21} parent=47 // pred_check_branch
          %584 = sbr.rel (%p582) target = $region52
        $region51: #{dialog_acts_predictor_forward.21} parent=47 // pred_region
          %s586 = ssub.s32 16, 16
          %587 = vsyncadd %s575, %s586
          %s588 = smul.addr %s26, 16
          %s589 = scalar_lea.hbm %s7, %s588
          %s591 = sshll.u32 %s577, 4
          %s592 = int_to_ptr.vmem [resolvable:$true] %s591
          %594 = dma.vmem_to_hbm [thread:$0]  %s592, 16, %s589, %s575
        $region52: #{dialog_acts_predictor_forward.21} parent=47 // pred_fallthru
          _
        // Predicated region
        $region53: #{dialog_acts_predictor_forward.21} parent=47 // pred_check
          %p595 = pneg %p222
        $region54: #{dialog_acts_predictor_forward.21} parent=47 // pred_check_branch
          %597 = sbr.rel (%p595) target = $region56
        $region55: #{dialog_acts_predictor_forward.21} parent=47 // pred_region
          %s599 = ssub.s32 16, 16
          %600 = vsyncadd %s579, %s599
          %s601 = smul.addr %s26, 16
          %s602 = scalar_lea.hbm %s8, %s601
          %s604 = sshll.u32 %s581, 4
          %s605 = int_to_ptr.vmem [resolvable:$true] %s604
          %607 = dma.vmem_to_hbm [thread:$0]  %s605, 16, %s602, %s579
        $region56: #{dialog_acts_predictor_forward.21} parent=47 // pred_fallthru
          _
      $region48: #{dialog_acts_predictor_forward.21} parent=5 // pred_fallthru
        _
      %p608 = scmp.le.s32.totalorder 2, %s21
      // Predicated region
      $region57: #{dialog_acts_predictor_forward.21} parent=5 // pred_check
        %p609 = pneg %p608
      $region58: #{dialog_acts_predictor_forward.21} parent=5 // pred_check_branch
        %611 = sbr.rel (%p609) target = $region60
      $region59: #{dialog_acts_predictor_forward.21} parent=5 // pred_region
        %s612 = ssub.s32 %s21, 2
        // Predicated region
        $region61: #{dialog_acts_predictor_forward.21} parent=59 // pred_check
          %p613 = pneg %p202
        $region62: #{dialog_acts_predictor_forward.21} parent=59 // pred_check_branch
          %615 = sbr.rel (%p613) target = $region64
        $region63: #{dialog_acts_predictor_forward.21} parent=59 // pred_region
          %s616 = sand.u32 %s187, 1
          %s617 = scalar_lea.sflag [#allocation3], %s616
          %s618 = sand.u32 %s187, 1
          %s619 = scalar_lea.vmem [#allocation2], %s618
          %620 = dma.done %s617, 16
        $region64: #{dialog_acts_predictor_forward.21} parent=59 // pred_fallthru
          _
        // Predicated region
        $region65: #{dialog_acts_predictor_forward.21} parent=59 // pred_check
          %p621 = pneg %p228
        $region66: #{dialog_acts_predictor_forward.21} parent=59 // pred_check_branch
          %623 = sbr.rel (%p621) target = $region68
        $region67: #{dialog_acts_predictor_forward.21} parent=59 // pred_region
          %s624 = sand.u32 %s213, 1
          %s625 = scalar_lea.sflag [#allocation5], %s624
          %s626 = sand.u32 %s213, 1
          %s627 = scalar_lea.vmem [#allocation4], %s626
          %628 = dma.done %s625, 16
        $region68: #{dialog_acts_predictor_forward.21} parent=59 // pred_fallthru
          _
      $region60: #{dialog_acts_predictor_forward.21} parent=5 // pred_fallthru
        _
    $region6: #{dialog_acts_predictor_forward.21} parent=1 // loop_footer
      %s25 = sadd.s32 1, %s21
    $region7: #{dialog_acts_predictor_forward.21} parent=1 // loop_footer_branch
      %20 = sbr.rel target = $region3
    $region8: #{dialog_acts_predictor_forward.21} parent=1 // loop_exit
      _
    %629 = vsyncpa [#allocation3], 1
    %s630 = scalar_lea.sflag [#allocation3], 1
    %631 = vsyncpa %s630, 1
    %632 = vsyncpa [#allocation5], 1
    %s633 = scalar_lea.sflag [#allocation5], 1
    %634 = vsyncpa %s633, 1

// kernel: dialog_acts_predictor_forward.14
$region0: #{dialog_acts_predictor_forward.14}
  #allocation0 [shape = 'u32[]', space=smem, size = 0x4, offset = 0x4, fixed_abs, tag = 'smem constant byte address 0x4 - core index']
  #allocation1 [shape = 'u32[144,128]{1,0:T(1,128)}', space=vmem, size = 0x12000, scoped, tag = 'internal scratch']
  %s0 = inlined_call_operand.vmem [shape: bf16[16,256], index: 0, kind: input, shape index: {}]
  %s1 = inlined_call_operand.vmem [shape: f32[1,256], index: 1, kind: input, shape index: {}]
  %s2 = inlined_call_operand.vmem [shape: f32[1,256], index: 2, kind: input, shape index: {}]
  %s3 = inlined_call_operand.vmem [shape: bf16[256,1024], index: 3, kind: input, shape index: {}]
  %s4 = inlined_call_operand.vmem [shape: f32[1,1024], index: 4, kind: input, shape index: {}]
  %s5 = inlined_call_operand.vmem [shape: bf16[1024,256], index: 5, kind: input, shape index: {}]
  %s6 = inlined_call_operand.vmem [shape: f32[1,256], index: 6, kind: input, shape index: {}]
  %s7 = inlined_call_operand.vmem [shape: bf16[16,256], index: 7, kind: output, shape index: {}]
  %s8 = sld [smem:[#allocation0]]
  $region38: #{dialog_acts_predictor_forward.14} parent=0
    _
  %s10 = ssub.s32 1, %s8
  %s11 = scalar_select 0, %s10, %s8
  // Predicated region
  $region2: #{dialog_acts_predictor_forward.14} parent=0 // pred_check
    _
  $region3: #{dialog_acts_predictor_forward.14} parent=0 // pred_check_branch
    %13 = sbr.rel (0) target = $region5
  $region4: #{dialog_acts_predictor_forward.14} parent=0 // pred_region
    _
  $region5: #{dialog_acts_predictor_forward.14} parent=0 // pred_fallthru
    _
  // Predicated region
  $region6: #{dialog_acts_predictor_forward.14} parent=0 // pred_check
    _
  $region7: #{dialog_acts_predictor_forward.14} parent=0 // pred_check_branch
    %15 = sbr.rel (0) target = $region9
  $region8: #{dialog_acts_predictor_forward.14} parent=0 // pred_region
    _
  $region9: #{dialog_acts_predictor_forward.14} parent=0 // pred_fallthru
    _
  // Predicated region
  $region10: #{dialog_acts_predictor_forward.14} parent=0 // pred_check
    _
  $region11: #{dialog_acts_predictor_forward.14} parent=0 // pred_check_branch
    %17 = sbr.rel (0) target = $region13
  $region12: #{dialog_acts_predictor_forward.14} parent=0 // pred_region
    _
  $region13: #{dialog_acts_predictor_forward.14} parent=0 // pred_fallthru
    _
  // Predicated region
  $region14: #{dialog_acts_predictor_forward.14} parent=0 // pred_check
    _
  $region15: #{dialog_acts_predictor_forward.14} parent=0 // pred_check_branch
    %19 = sbr.rel (0) target = $region17
  $region16: #{dialog_acts_predictor_forward.14} parent=0 // pred_region
    _
  $region17: #{dialog_acts_predictor_forward.14} parent=0 // pred_fallthru
    _
  // Predicated region
  $region18: #{dialog_acts_predictor_forward.14} parent=0 // pred_check
    _
  $region19: #{dialog_acts_predictor_forward.14} parent=0 // pred_check_branch
    %21 = sbr.rel (0) target = $region21
  $region20: #{dialog_acts_predictor_forward.14} parent=0 // pred_region
    _
  $region21: #{dialog_acts_predictor_forward.14} parent=0 // pred_fallthru
    _
  // Predicated region
  $region22: #{dialog_acts_predictor_forward.14} parent=0 // pred_check
    _
  $region23: #{dialog_acts_predictor_forward.14} parent=0 // pred_check_branch
    %23 = sbr.rel (0) target = $region25
  $region24: #{dialog_acts_predictor_forward.14} parent=0 // pred_region
    _
  $region25: #{dialog_acts_predictor_forward.14} parent=0 // pred_fallthru
    _
  // Predicated region
  $region26: #{dialog_acts_predictor_forward.14} parent=0 // pred_check
    _
  $region27: #{dialog_acts_predictor_forward.14} parent=0 // pred_check_branch
    %25 = sbr.rel (0) target = $region29
  $region28: #{dialog_acts_predictor_forward.14} parent=0 // pred_region
    _
  $region29: #{dialog_acts_predictor_forward.14} parent=0 // pred_fallthru
    _
  %v26 = vld [vmem:[%s0] sm:$0xff]
  %v27 = vld [vmem:[%s0 + $0x8] sm:$0xff]
  %v28 = vunpack.c.l.bf16 %v26
  %v29 = vunpack.c.h.bf16 %v26
  %v30 = vunpack.c.l.bf16 %v27
  %v31 = vunpack.c.h.bf16 %v27
  %v32 = vld [vmem:[%s1] sm:$0x3]
  %v33 = vld [vmem:[%s2] sm:$0x3]
  %v34 = vadd.f32 %v28, %v29
  %35 = vadd.xlane.f32.xlu0 %v34
  %v36 = vpop.xlane.xlu0 %35
  %v37 = vadd.f32 %v30, %v31
  %38 = vadd.xlane.f32.xlu0 %v37
  %v39 = vpop.xlane.xlu0 %38
  %v40 = vrcp.pop 256.0
  %v41 = vmul.f32 %v36, %v40
  %v42 = vmul.f32 %v39, %v40
  %v43 = vsub.f32 %v28, %v41
  %v44 = vsub.f32 %v29, %v41
  %v45 = vsub.f32 %v30, %v42
  %v46 = vsub.f32 %v31, %v42
  %v47 = vmul.f32 %v43, %v43
  %v48 = vmul.f32 %v44, %v44
  %v49 = vmul.f32 %v45, %v45
  %v50 = vmul.f32 %v46, %v46
  %v51 = vadd.f32 %v47, %v48
  %52 = vadd.xlane.f32.xlu0 %v51
  %v53 = vpop.xlane.xlu0 %52
  %v54 = vadd.f32 %v49, %v50
  %55 = vadd.xlane.f32.xlu0 %v54
  %v56 = vpop.xlane.xlu0 %55
  %v57 = vmul.f32 %v53, %v40
  %v58 = vmul.f32 %v56, %v40
  %v59 = vadd.f32 %v57, 1e-12
  %v60 = vadd.f32 %v58, 1e-12
  %v61 = vrsqrt.pop %v59
  %v62 = vrsqrt.pop %v60
  %v63 = vmul.f32 %v43, %v61
  %v64 = vmul.f32 %v44, %v61
  %v65 = vmul.f32 %v45, %v62
  %v66 = vmul.f32 %v46, %v62
  %v68 = vlaneseq
  %v69 = vshrl.u32 %v68, 7
  %v70 = vsub.s32 0, %v69
  %v71 = vrot.slane %v32, %v70
  %v72 = vlaneseq
  %v73 = vshrl.u32 %v72, 7
  %v74 = vsub.s32 1, %v73
  %v75 = vrot.slane %v32, %v74
  %v78 = vmul.f32 %v63, %v71
  %v79 = vmul.f32 %v64, %v75
  %v80 = vmul.f32 %v65, %v71
  %v81 = vmul.f32 %v66, %v75
  %v83 = vlaneseq
  %v84 = vshrl.u32 %v83, 7
  %v85 = vsub.s32 0, %v84
  %v86 = vrot.slane %v33, %v85
  %v87 = vlaneseq
  %v88 = vshrl.u32 %v87, 7
  %v89 = vsub.s32 1, %v88
  %v90 = vrot.slane %v33, %v89
  %v93 = vadd.f32 %v78, %v86
  %v94 = vadd.f32 %v79, %v90
  %v95 = vadd.f32 %v80, %v86
  %v96 = vadd.f32 %v81, %v90
  %v97 = vpack.c.bf16 %v95, %v93
  %v98 = vpack.c.bf16 %v96, %v94
  %v99 = vld [vmem:[%s3] sm:$0xff]
  %v100 = vld [vmem:[%s3 + $0x8] sm:$0xff]
  %v101 = vld [vmem:[%s3 + $0x10] sm:$0xff]
  %v102 = vld [vmem:[%s3 + $0x18] sm:$0xff]
  %v103 = vld [vmem:[%s3 + $0x20] sm:$0xff]
  %v104 = vld [vmem:[%s3 + $0x28] sm:$0xff]
  %v105 = vld [vmem:[%s3 + $0x30] sm:$0xff]
  %v106 = vld [vmem:[%s3 + $0x38] sm:$0xff]
  %v107 = vld [vmem:[%s3 + $0x40] sm:$0xff]
  %v108 = vld [vmem:[%s3 + $0x48] sm:$0xff]
  %v109 = vld [vmem:[%s3 + $0x50] sm:$0xff]
  %v110 = vld [vmem:[%s3 + $0x58] sm:$0xff]
  %v111 = vld [vmem:[%s3 + $0x60] sm:$0xff]
  %v112 = vld [vmem:[%s3 + $0x68] sm:$0xff]
  %v113 = vld [vmem:[%s3 + $0x70] sm:$0xff]
  %v114 = vld [vmem:[%s3 + $0x78] sm:$0xff]
  %v115 = vld [vmem:[%s3 + $0x80] sm:$0xff]
  %v116 = vld [vmem:[%s3 + $0x88] sm:$0xff]
  %v117 = vld [vmem:[%s3 + $0x90] sm:$0xff]
  %v118 = vld [vmem:[%s3 + $0x98] sm:$0xff]
  %v119 = vld [vmem:[%s3 + $0xa0] sm:$0xff]
  %v120 = vld [vmem:[%s3 + $0xa8] sm:$0xff]
  %v121 = vld [vmem:[%s3 + $0xb0] sm:$0xff]
  %v122 = vld [vmem:[%s3 + $0xb8] sm:$0xff]
  %v123 = vld [vmem:[%s3 + $0xc0] sm:$0xff]
  %v124 = vld [vmem:[%s3 + $0xc8] sm:$0xff]
  %v125 = vld [vmem:[%s3 + $0xd0] sm:$0xff]
  %v126 = vld [vmem:[%s3 + $0xd8] sm:$0xff]
  %v127 = vld [vmem:[%s3 + $0xe0] sm:$0xff]
  %v128 = vld [vmem:[%s3 + $0xe8] sm:$0xff]
  %v129 = vld [vmem:[%s3 + $0xf0] sm:$0xff]
  %v130 = vld [vmem:[%s3 + $0xf8] sm:$0xff]
  %v131 = vld [vmem:[%s3 + $0x100] sm:$0xff]
  %v132 = vld [vmem:[%s3 + $0x108] sm:$0xff]
  %v133 = vld [vmem:[%s3 + $0x110] sm:$0xff]
  %v134 = vld [vmem:[%s3 + $0x118] sm:$0xff]
  %v135 = vld [vmem:[%s3 + $0x120] sm:$0xff]
  %v136 = vld [vmem:[%s3 + $0x128] sm:$0xff]
  %v137 = vld [vmem:[%s3 + $0x130] sm:$0xff]
  %v138 = vld [vmem:[%s3 + $0x138] sm:$0xff]
  %v139 = vld [vmem:[%s3 + $0x140] sm:$0xff]
  %v140 = vld [vmem:[%s3 + $0x148] sm:$0xff]
  %v141 = vld [vmem:[%s3 + $0x150] sm:$0xff]
  %v142 = vld [vmem:[%s3 + $0x158] sm:$0xff]
  %v143 = vld [vmem:[%s3 + $0x160] sm:$0xff]
  %v144 = vld [vmem:[%s3 + $0x168] sm:$0xff]
  %v145 = vld [vmem:[%s3 + $0x170] sm:$0xff]
  %v146 = vld [vmem:[%s3 + $0x178] sm:$0xff]
  %v147 = vld [vmem:[%s3 + $0x180] sm:$0xff]
  %v148 = vld [vmem:[%s3 + $0x188] sm:$0xff]
  %v149 = vld [vmem:[%s3 + $0x190] sm:$0xff]
  %v150 = vld [vmem:[%s3 + $0x198] sm:$0xff]
  %v151 = vld [vmem:[%s3 + $0x1a0] sm:$0xff]
  %v152 = vld [vmem:[%s3 + $0x1a8] sm:$0xff]
  %v153 = vld [vmem:[%s3 + $0x1b0] sm:$0xff]
  %v154 = vld [vmem:[%s3 + $0x1b8] sm:$0xff]
  %v155 = vld [vmem:[%s3 + $0x1c0] sm:$0xff]
  %v156 = vld [vmem:[%s3 + $0x1c8] sm:$0xff]
  %v157 = vld [vmem:[%s3 + $0x1d0] sm:$0xff]
  %v158 = vld [vmem:[%s3 + $0x1d8] sm:$0xff]
  %v159 = vld [vmem:[%s3 + $0x1e0] sm:$0xff]
  %v160 = vld [vmem:[%s3 + $0x1e8] sm:$0xff]
  %v161 = vld [vmem:[%s3 + $0x1f0] sm:$0xff]
  %v162 = vld [vmem:[%s3 + $0x1f8] sm:$0xff]
  %v163 = vld [vmem:[%s3 + $0x200] sm:$0xff]
  %v164 = vld [vmem:[%s3 + $0x208] sm:$0xff]
  %v165 = vld [vmem:[%s3 + $0x210] sm:$0xff]
  %v166 = vld [vmem:[%s3 + $0x218] sm:$0xff]
  %v167 = vld [vmem:[%s3 + $0x220] sm:$0xff]
  %v168 = vld [vmem:[%s3 + $0x228] sm:$0xff]
  %v169 = vld [vmem:[%s3 + $0x230] sm:$0xff]
  %v170 = vld [vmem:[%s3 + $0x238] sm:$0xff]
  %v171 = vld [vmem:[%s3 + $0x240] sm:$0xff]
  %v172 = vld [vmem:[%s3 + $0x248] sm:$0xff]
  %v173 = vld [vmem:[%s3 + $0x250] sm:$0xff]
  %v174 = vld [vmem:[%s3 + $0x258] sm:$0xff]
  %v175 = vld [vmem:[%s3 + $0x260] sm:$0xff]
  %v176 = vld [vmem:[%s3 + $0x268] sm:$0xff]
  %v177 = vld [vmem:[%s3 + $0x270] sm:$0xff]
  %v178 = vld [vmem:[%s3 + $0x278] sm:$0xff]
  %v179 = vld [vmem:[%s3 + $0x280] sm:$0xff]
  %v180 = vld [vmem:[%s3 + $0x288] sm:$0xff]
  %v181 = vld [vmem:[%s3 + $0x290] sm:$0xff]
  %v182 = vld [vmem:[%s3 + $0x298] sm:$0xff]
  %v183 = vld [vmem:[%s3 + $0x2a0] sm:$0xff]
  %v184 = vld [vmem:[%s3 + $0x2a8] sm:$0xff]
  %v185 = vld [vmem:[%s3 + $0x2b0] sm:$0xff]
  %v186 = vld [vmem:[%s3 + $0x2b8] sm:$0xff]
  %v187 = vld [vmem:[%s3 + $0x2c0] sm:$0xff]
  %v188 = vld [vmem:[%s3 + $0x2c8] sm:$0xff]
  %v189 = vld [vmem:[%s3 + $0x2d0] sm:$0xff]
  %v190 = vld [vmem:[%s3 + $0x2d8] sm:$0xff]
  %v191 = vld [vmem:[%s3 + $0x2e0] sm:$0xff]
  %v192 = vld [vmem:[%s3 + $0x2e8] sm:$0xff]
  %v193 = vld [vmem:[%s3 + $0x2f0] sm:$0xff]
  %v194 = vld [vmem:[%s3 + $0x2f8] sm:$0xff]
  %v195 = vld [vmem:[%s3 + $0x300] sm:$0xff]
  %v196 = vld [vmem:[%s3 + $0x308] sm:$0xff]
  %v197 = vld [vmem:[%s3 + $0x310] sm:$0xff]
  %v198 = vld [vmem:[%s3 + $0x318] sm:$0xff]
  %v199 = vld [vmem:[%s3 + $0x320] sm:$0xff]
  %v200 = vld [vmem:[%s3 + $0x328] sm:$0xff]
  %v201 = vld [vmem:[%s3 + $0x330] sm:$0xff]
  %v202 = vld [vmem:[%s3 + $0x338] sm:$0xff]
  %v203 = vld [vmem:[%s3 + $0x340] sm:$0xff]
  %v204 = vld [vmem:[%s3 + $0x348] sm:$0xff]
  %v205 = vld [vmem:[%s3 + $0x350] sm:$0xff]
  %v206 = vld [vmem:[%s3 + $0x358] sm:$0xff]
  %v207 = vld [vmem:[%s3 + $0x360] sm:$0xff]
  %v208 = vld [vmem:[%s3 + $0x368] sm:$0xff]
  %v209 = vld [vmem:[%s3 + $0x370] sm:$0xff]
  %v210 = vld [vmem:[%s3 + $0x378] sm:$0xff]
  %v211 = vld [vmem:[%s3 + $0x380] sm:$0xff]
  %v212 = vld [vmem:[%s3 + $0x388] sm:$0xff]
  %v213 = vld [vmem:[%s3 + $0x390] sm:$0xff]
  %v214 = vld [vmem:[%s3 + $0x398] sm:$0xff]
  %v215 = vld [vmem:[%s3 + $0x3a0] sm:$0xff]
  %v216 = vld [vmem:[%s3 + $0x3a8] sm:$0xff]
  %v217 = vld [vmem:[%s3 + $0x3b0] sm:$0xff]
  %v218 = vld [vmem:[%s3 + $0x3b8] sm:$0xff]
  %v219 = vld [vmem:[%s3 + $0x3c0] sm:$0xff]
  %v220 = vld [vmem:[%s3 + $0x3c8] sm:$0xff]
  %v221 = vld [vmem:[%s3 + $0x3d0] sm:$0xff]
  %v222 = vld [vmem:[%s3 + $0x3d8] sm:$0xff]
  %v223 = vld [vmem:[%s3 + $0x3e0] sm:$0xff]
  %v224 = vld [vmem:[%s3 + $0x3e8] sm:$0xff]
  %v225 = vld [vmem:[%s3 + $0x3f0] sm:$0xff]
  %v226 = vld [vmem:[%s3 + $0x3f8] sm:$0xff]
  %v227 = vld [vmem:[%s4] sm:$0xff]
  %v229 = vlaneseq
  %v230 = vshrl.u32 %v229, 7
  %v231 = vsub.s32 0, %v230
  %v232 = vrot.slane %v227, %v231
  %v233 = vlaneseq
  %v234 = vshrl.u32 %v233, 7
  %v235 = vsub.s32 1, %v234
  %v236 = vrot.slane %v227, %v235
  %v237 = vlaneseq
  %v238 = vshrl.u32 %v237, 7
  %v239 = vsub.s32 2, %v238
  %v240 = vrot.slane %v227, %v239
  %v241 = vlaneseq
  %v242 = vshrl.u32 %v241, 7
  %v243 = vsub.s32 3, %v242
  %v244 = vrot.slane %v227, %v243
  %v245 = vlaneseq
  %v246 = vshrl.u32 %v245, 7
  %v247 = vsub.s32 4, %v246
  %v248 = vrot.slane %v227, %v247
  %v249 = vlaneseq
  %v250 = vshrl.u32 %v249, 7
  %v251 = vsub.s32 5, %v250
  %v252 = vrot.slane %v227, %v251
  %v253 = vlaneseq
  %v254 = vshrl.u32 %v253, 7
  %v255 = vsub.s32 6, %v254
  %v256 = vrot.slane %v227, %v255
  %v257 = vlaneseq
  %v258 = vshrl.u32 %v257, 7
  %v259 = vsub.s32 7, %v258
  %v260 = vrot.slane %v227, %v259
  %v397 = vunpack.c.l.b16 %v99
  %v398 = vunpack.c.h.b16 %v99
  %v399 = vunpack.c.l.b16 %v100
  %v400 = vunpack.c.h.b16 %v100
  %v401 = vunpack.c.l.b16 %v101
  %v402 = vunpack.c.h.b16 %v101
  %v403 = vunpack.c.l.b16 %v102
  %v404 = vunpack.c.h.b16 %v102
  %v405 = vunpack.c.l.b16 %v103
  %v406 = vunpack.c.h.b16 %v103
  %v407 = vunpack.c.l.b16 %v104
  %v408 = vunpack.c.h.b16 %v104
  %v409 = vunpack.c.l.b16 %v105
  %v410 = vunpack.c.h.b16 %v105
  %v411 = vunpack.c.l.b16 %v106
  %v412 = vunpack.c.h.b16 %v106
  %v413 = vunpack.c.l.b16 %v107
  %v414 = vunpack.c.h.b16 %v107
  %v415 = vunpack.c.l.b16 %v108
  %v416 = vunpack.c.h.b16 %v108
  %v417 = vunpack.c.l.b16 %v109
  %v418 = vunpack.c.h.b16 %v109
  %v419 = vunpack.c.l.b16 %v110
  %v420 = vunpack.c.h.b16 %v110
  %v421 = vunpack.c.l.b16 %v111
  %v422 = vunpack.c.h.b16 %v111
  %v423 = vunpack.c.l.b16 %v112
  %v424 = vunpack.c.h.b16 %v112
  %v425 = vunpack.c.l.b16 %v113
  %v426 = vunpack.c.h.b16 %v113
  %v427 = vunpack.c.l.b16 %v114
  %v428 = vunpack.c.h.b16 %v114
  %v429 = vunpack.c.l.b16 %v115
  %v430 = vunpack.c.h.b16 %v115
  %v431 = vunpack.c.l.b16 %v116
  %v432 = vunpack.c.h.b16 %v116
  %v433 = vunpack.c.l.b16 %v117
  %v434 = vunpack.c.h.b16 %v117
  %v435 = vunpack.c.l.b16 %v118
  %v436 = vunpack.c.h.b16 %v118
  %v437 = vunpack.c.l.b16 %v119
  %v438 = vunpack.c.h.b16 %v119
  %v439 = vunpack.c.l.b16 %v120
  %v440 = vunpack.c.h.b16 %v120
  %v441 = vunpack.c.l.b16 %v121
  %v442 = vunpack.c.h.b16 %v121
  %v443 = vunpack.c.l.b16 %v122
  %v444 = vunpack.c.h.b16 %v122
  %v445 = vunpack.c.l.b16 %v123
  %v446 = vunpack.c.h.b16 %v123
  %v447 = vunpack.c.l.b16 %v124
  %v448 = vunpack.c.h.b16 %v124
  %v449 = vunpack.c.l.b16 %v125
  %v450 = vunpack.c.h.b16 %v125
  %v451 = vunpack.c.l.b16 %v126
  %v452 = vunpack.c.h.b16 %v126
  %v453 = vunpack.c.l.b16 %v127
  %v454 = vunpack.c.h.b16 %v127
  %v455 = vunpack.c.l.b16 %v128
  %v456 = vunpack.c.h.b16 %v128
  %v457 = vunpack.c.l.b16 %v129
  %v458 = vunpack.c.h.b16 %v129
  %v459 = vunpack.c.l.b16 %v130
  %v460 = vunpack.c.h.b16 %v130
  %v461 = vunpack.c.l.b16 %v131
  %v462 = vunpack.c.h.b16 %v131
  %v463 = vunpack.c.l.b16 %v132
  %v464 = vunpack.c.h.b16 %v132
  %v465 = vunpack.c.l.b16 %v133
  %v466 = vunpack.c.h.b16 %v133
  %v467 = vunpack.c.l.b16 %v134
  %v468 = vunpack.c.h.b16 %v134
  %v469 = vunpack.c.l.b16 %v135
  %v470 = vunpack.c.h.b16 %v135
  %v471 = vunpack.c.l.b16 %v136
  %v472 = vunpack.c.h.b16 %v136
  %v473 = vunpack.c.l.b16 %v137
  %v474 = vunpack.c.h.b16 %v137
  %v475 = vunpack.c.l.b16 %v138
  %v476 = vunpack.c.h.b16 %v138
  %v477 = vunpack.c.l.b16 %v139
  %v478 = vunpack.c.h.b16 %v139
  %v479 = vunpack.c.l.b16 %v140
  %v480 = vunpack.c.h.b16 %v140
  %v481 = vunpack.c.l.b16 %v141
  %v482 = vunpack.c.h.b16 %v141
  %v483 = vunpack.c.l.b16 %v142
  %v484 = vunpack.c.h.b16 %v142
  %v485 = vunpack.c.l.b16 %v143
  %v486 = vunpack.c.h.b16 %v143
  %v487 = vunpack.c.l.b16 %v144
  %v488 = vunpack.c.h.b16 %v144
  %v489 = vunpack.c.l.b16 %v145
  %v490 = vunpack.c.h.b16 %v145
  %v491 = vunpack.c.l.b16 %v146
  %v492 = vunpack.c.h.b16 %v146
  %v493 = vunpack.c.l.b16 %v147
  %v494 = vunpack.c.h.b16 %v147
  %v495 = vunpack.c.l.b16 %v148
  %v496 = vunpack.c.h.b16 %v148
  %v497 = vunpack.c.l.b16 %v149
  %v498 = vunpack.c.h.b16 %v149
  %v499 = vunpack.c.l.b16 %v150
  %v500 = vunpack.c.h.b16 %v150
  %v501 = vunpack.c.l.b16 %v151
  %v502 = vunpack.c.h.b16 %v151
  %v503 = vunpack.c.l.b16 %v152
  %v504 = vunpack.c.h.b16 %v152
  %v505 = vunpack.c.l.b16 %v153
  %v506 = vunpack.c.h.b16 %v153
  %v507 = vunpack.c.l.b16 %v154
  %v508 = vunpack.c.h.b16 %v154
  %v509 = vunpack.c.l.b16 %v155
  %v510 = vunpack.c.h.b16 %v155
  %v511 = vunpack.c.l.b16 %v156
  %v512 = vunpack.c.h.b16 %v156
  %v513 = vunpack.c.l.b16 %v157
  %v514 = vunpack.c.h.b16 %v157
  %v515 = vunpack.c.l.b16 %v158
  %v516 = vunpack.c.h.b16 %v158
  %v517 = vunpack.c.l.b16 %v159
  %v518 = vunpack.c.h.b16 %v159
  %v519 = vunpack.c.l.b16 %v160
  %v520 = vunpack.c.h.b16 %v160
  %v521 = vunpack.c.l.b16 %v161
  %v522 = vunpack.c.h.b16 %v161
  %v523 = vunpack.c.l.b16 %v162
  %v524 = vunpack.c.h.b16 %v162
  %v525 = vunpack.c.l.b16 %v163
  %v526 = vunpack.c.h.b16 %v163
  %v527 = vunpack.c.l.b16 %v164
  %v528 = vunpack.c.h.b16 %v164
  %v529 = vunpack.c.l.b16 %v165
  %v530 = vunpack.c.h.b16 %v165
  %v531 = vunpack.c.l.b16 %v166
  %v532 = vunpack.c.h.b16 %v166
  %v533 = vunpack.c.l.b16 %v167
  %v534 = vunpack.c.h.b16 %v167
  %v535 = vunpack.c.l.b16 %v168
  %v536 = vunpack.c.h.b16 %v168
  %v537 = vunpack.c.l.b16 %v169
  %v538 = vunpack.c.h.b16 %v169
  %v539 = vunpack.c.l.b16 %v170
  %v540 = vunpack.c.h.b16 %v170
  %v541 = vunpack.c.l.b16 %v171
  %v542 = vunpack.c.h.b16 %v171
  %v543 = vunpack.c.l.b16 %v172
  %v544 = vunpack.c.h.b16 %v172
  %v545 = vunpack.c.l.b16 %v173
  %v546 = vunpack.c.h.b16 %v173
  %v547 = vunpack.c.l.b16 %v174
  %v548 = vunpack.c.h.b16 %v174
  %v549 = vunpack.c.l.b16 %v175
  %v550 = vunpack.c.h.b16 %v175
  %v551 = vunpack.c.l.b16 %v176
  %v552 = vunpack.c.h.b16 %v176
  %v553 = vunpack.c.l.b16 %v177
  %v554 = vunpack.c.h.b16 %v177
  %v555 = vunpack.c.l.b16 %v178
  %v556 = vunpack.c.h.b16 %v178
  %v557 = vunpack.c.l.b16 %v179
  %v558 = vunpack.c.h.b16 %v179
  %v559 = vunpack.c.l.b16 %v180
  %v560 = vunpack.c.h.b16 %v180
  %v561 = vunpack.c.l.b16 %v181
  %v562 = vunpack.c.h.b16 %v181
  %v563 = vunpack.c.l.b16 %v182
  %v564 = vunpack.c.h.b16 %v182
  %v565 = vunpack.c.l.b16 %v183
  %v566 = vunpack.c.h.b16 %v183
  %v567 = vunpack.c.l.b16 %v184
  %v568 = vunpack.c.h.b16 %v184
  %v569 = vunpack.c.l.b16 %v185
  %v570 = vunpack.c.h.b16 %v185
  %v571 = vunpack.c.l.b16 %v186
  %v572 = vunpack.c.h.b16 %v186
  %v573 = vunpack.c.l.b16 %v187
  %v574 = vunpack.c.h.b16 %v187
  %v575 = vunpack.c.l.b16 %v188
  %v576 = vunpack.c.h.b16 %v188
  %v577 = vunpack.c.l.b16 %v189
  %v578 = vunpack.c.h.b16 %v189
  %v579 = vunpack.c.l.b16 %v190
  %v580 = vunpack.c.h.b16 %v190
  %v581 = vunpack.c.l.b16 %v191
  %v582 = vunpack.c.h.b16 %v191
  %v583 = vunpack.c.l.b16 %v192
  %v584 = vunpack.c.h.b16 %v192
  %v585 = vunpack.c.l.b16 %v193
  %v586 = vunpack.c.h.b16 %v193
  %v587 = vunpack.c.l.b16 %v194
  %v588 = vunpack.c.h.b16 %v194
  %v589 = vunpack.c.l.b16 %v195
  %v590 = vunpack.c.h.b16 %v195
  %v591 = vunpack.c.l.b16 %v196
  %v592 = vunpack.c.h.b16 %v196
  %v593 = vunpack.c.l.b16 %v197
  %v594 = vunpack.c.h.b16 %v197
  %v595 = vunpack.c.l.b16 %v198
  %v596 = vunpack.c.h.b16 %v198
  %v597 = vunpack.c.l.b16 %v199
  %v598 = vunpack.c.h.b16 %v199
  %v599 = vunpack.c.l.b16 %v200
  %v600 = vunpack.c.h.b16 %v200
  %v601 = vunpack.c.l.b16 %v201
  %v602 = vunpack.c.h.b16 %v201
  %v603 = vunpack.c.l.b16 %v202
  %v604 = vunpack.c.h.b16 %v202
  %v605 = vunpack.c.l.b16 %v203
  %v606 = vunpack.c.h.b16 %v203
  %v607 = vunpack.c.l.b16 %v204
  %v608 = vunpack.c.h.b16 %v204
  %v609 = vunpack.c.l.b16 %v205
  %v610 = vunpack.c.h.b16 %v205
  %v611 = vunpack.c.l.b16 %v206
  %v612 = vunpack.c.h.b16 %v206
  %v613 = vunpack.c.l.b16 %v207
  %v614 = vunpack.c.h.b16 %v207
  %v615 = vunpack.c.l.b16 %v208
  %v616 = vunpack.c.h.b16 %v208
  %v617 = vunpack.c.l.b16 %v209
  %v618 = vunpack.c.h.b16 %v209
  %v619 = vunpack.c.l.b16 %v210
  %v620 = vunpack.c.h.b16 %v210
  %v621 = vunpack.c.l.b16 %v211
  %v622 = vunpack.c.h.b16 %v211
  %v623 = vunpack.c.l.b16 %v212
  %v624 = vunpack.c.h.b16 %v212
  %v625 = vunpack.c.l.b16 %v213
  %v626 = vunpack.c.h.b16 %v213
  %v627 = vunpack.c.l.b16 %v214
  %v628 = vunpack.c.h.b16 %v214
  %v629 = vunpack.c.l.b16 %v215
  %v630 = vunpack.c.h.b16 %v215
  %v631 = vunpack.c.l.b16 %v216
  %v632 = vunpack.c.h.b16 %v216
  %v633 = vunpack.c.l.b16 %v217
  %v634 = vunpack.c.h.b16 %v217
  %v635 = vunpack.c.l.b16 %v218
  %v636 = vunpack.c.h.b16 %v218
  %v637 = vunpack.c.l.b16 %v219
  %v638 = vunpack.c.h.b16 %v219
  %v639 = vunpack.c.l.b16 %v220
  %v640 = vunpack.c.h.b16 %v220
  %v641 = vunpack.c.l.b16 %v221
  %v642 = vunpack.c.h.b16 %v221
  %v643 = vunpack.c.l.b16 %v222
  %v644 = vunpack.c.h.b16 %v222
  %v645 = vunpack.c.l.b16 %v223
  %v646 = vunpack.c.h.b16 %v223
  %v647 = vunpack.c.l.b16 %v224
  %v648 = vunpack.c.h.b16 %v224
  %v649 = vunpack.c.l.b16 %v225
  %v650 = vunpack.c.h.b16 %v225
  %v651 = vunpack.c.l.b16 %v226
  %v652 = vunpack.c.h.b16 %v226
  %v653 = vpack.c.b16 %v405, %v397
  %v654 = vpack.c.b16 %v406, %v398
  %v655 = vpack.c.b16 %v407, %v399
  %v656 = vpack.c.b16 %v408, %v400
  %v657 = vpack.c.b16 %v409, %v401
  %v658 = vpack.c.b16 %v410, %v402
  %v659 = vpack.c.b16 %v411, %v403
  %v660 = vpack.c.b16 %v412, %v404
  %v661 = vpack.c.b16 %v421, %v413
  %v662 = vpack.c.b16 %v422, %v414
  %v663 = vpack.c.b16 %v423, %v415
  %v664 = vpack.c.b16 %v424, %v416
  %v665 = vpack.c.b16 %v425, %v417
  %v666 = vpack.c.b16 %v426, %v418
  %v667 = vpack.c.b16 %v427, %v419
  %v668 = vpack.c.b16 %v428, %v420
  %v669 = vpack.c.b16 %v437, %v429
  %v670 = vpack.c.b16 %v438, %v430
  %v671 = vpack.c.b16 %v439, %v431
  %v672 = vpack.c.b16 %v440, %v432
  %v673 = vpack.c.b16 %v441, %v433
  %v674 = vpack.c.b16 %v442, %v434
  %v675 = vpack.c.b16 %v443, %v435
  %v676 = vpack.c.b16 %v444, %v436
  %v677 = vpack.c.b16 %v453, %v445
  %v678 = vpack.c.b16 %v454, %v446
  %v679 = vpack.c.b16 %v455, %v447
  %v680 = vpack.c.b16 %v456, %v448
  %v681 = vpack.c.b16 %v457, %v449
  %v682 = vpack.c.b16 %v458, %v450
  %v683 = vpack.c.b16 %v459, %v451
  %v684 = vpack.c.b16 %v460, %v452
  %v685 = vpack.c.b16 %v469, %v461
  %v686 = vpack.c.b16 %v470, %v462
  %v687 = vpack.c.b16 %v471, %v463
  %v688 = vpack.c.b16 %v472, %v464
  %v689 = vpack.c.b16 %v473, %v465
  %v690 = vpack.c.b16 %v474, %v466
  %v691 = vpack.c.b16 %v475, %v467
  %v692 = vpack.c.b16 %v476, %v468
  %v693 = vpack.c.b16 %v485, %v477
  %v694 = vpack.c.b16 %v486, %v478
  %v695 = vpack.c.b16 %v487, %v479
  %v696 = vpack.c.b16 %v488, %v480
  %v697 = vpack.c.b16 %v489, %v481
  %v698 = vpack.c.b16 %v490, %v482
  %v699 = vpack.c.b16 %v491, %v483
  %v700 = vpack.c.b16 %v492, %v484
  %v701 = vpack.c.b16 %v501, %v493
  %v702 = vpack.c.b16 %v502, %v494
  %v703 = vpack.c.b16 %v503, %v495
  %v704 = vpack.c.b16 %v504, %v496
  %v705 = vpack.c.b16 %v505, %v497
  %v706 = vpack.c.b16 %v506, %v498
  %v707 = vpack.c.b16 %v507, %v499
  %v708 = vpack.c.b16 %v508, %v500
  %v709 = vpack.c.b16 %v517, %v509
  %v710 = vpack.c.b16 %v518, %v510
  %v711 = vpack.c.b16 %v519, %v511
  %v712 = vpack.c.b16 %v520, %v512
  %v713 = vpack.c.b16 %v521, %v513
  %v714 = vpack.c.b16 %v522, %v514
  %v715 = vpack.c.b16 %v523, %v515
  %v716 = vpack.c.b16 %v524, %v516
  %v717 = vpack.c.b16 %v533, %v525
  %v718 = vpack.c.b16 %v534, %v526
  %v719 = vpack.c.b16 %v535, %v527
  %v720 = vpack.c.b16 %v536, %v528
  %v721 = vpack.c.b16 %v537, %v529
  %v722 = vpack.c.b16 %v538, %v530
  %v723 = vpack.c.b16 %v539, %v531
  %v724 = vpack.c.b16 %v540, %v532
  %v725 = vpack.c.b16 %v549, %v541
  %v726 = vpack.c.b16 %v550, %v542
  %v727 = vpack.c.b16 %v551, %v543
  %v728 = vpack.c.b16 %v552, %v544
  %v729 = vpack.c.b16 %v553, %v545
  %v730 = vpack.c.b16 %v554, %v546
  %v731 = vpack.c.b16 %v555, %v547
  %v732 = vpack.c.b16 %v556, %v548
  %v733 = vpack.c.b16 %v565, %v557
  %v734 = vpack.c.b16 %v566, %v558
  %v735 = vpack.c.b16 %v567, %v559
  %v736 = vpack.c.b16 %v568, %v560
  %v737 = vpack.c.b16 %v569, %v561
  %v738 = vpack.c.b16 %v570, %v562
  %v739 = vpack.c.b16 %v571, %v563
  %v740 = vpack.c.b16 %v572, %v564
  %v741 = vpack.c.b16 %v581, %v573
  %v742 = vpack.c.b16 %v582, %v574
  %v743 = vpack.c.b16 %v583, %v575
  %v744 = vpack.c.b16 %v584, %v576
  %v745 = vpack.c.b16 %v585, %v577
  %v746 = vpack.c.b16 %v586, %v578
  %v747 = vpack.c.b16 %v587, %v579
  %v748 = vpack.c.b16 %v588, %v580
  %v749 = vpack.c.b16 %v597, %v589
  %v750 = vpack.c.b16 %v598, %v590
  %v751 = vpack.c.b16 %v599, %v591
  %v752 = vpack.c.b16 %v600, %v592
  %v753 = vpack.c.b16 %v601, %v593
  %v754 = vpack.c.b16 %v602, %v594
  %v755 = vpack.c.b16 %v603, %v595
  %v756 = vpack.c.b16 %v604, %v596
  %v757 = vpack.c.b16 %v613, %v605
  %v758 = vpack.c.b16 %v614, %v606
  %v759 = vpack.c.b16 %v615, %v607
  %v760 = vpack.c.b16 %v616, %v608
  %v761 = vpack.c.b16 %v617, %v609
  %v762 = vpack.c.b16 %v618, %v610
  %v763 = vpack.c.b16 %v619, %v611
  %v764 = vpack.c.b16 %v620, %v612
  %v765 = vpack.c.b16 %v629, %v621
  %v766 = vpack.c.b16 %v630, %v622
  %v767 = vpack.c.b16 %v631, %v623
  %v768 = vpack.c.b16 %v632, %v624
  %v769 = vpack.c.b16 %v633, %v625
  %v770 = vpack.c.b16 %v634, %v626
  %v771 = vpack.c.b16 %v635, %v627
  %v772 = vpack.c.b16 %v636, %v628
  %v773 = vpack.c.b16 %v645, %v637
  %v774 = vpack.c.b16 %v646, %v638
  %v775 = vpack.c.b16 %v647, %v639
  %v776 = vpack.c.b16 %v648, %v640
  %v777 = vpack.c.b16 %v649, %v641
  %v778 = vpack.c.b16 %v650, %v642
  %v779 = vpack.c.b16 %v651, %v643
  %v780 = vpack.c.b16 %v652, %v644
  %909 = vmatprep.subr.bf16.mxu0 %v710
  %910 = vmatpush1.bf16.msra.mxu0 %v709
  %911 = vmatprep.subr.bf16.mxu0 %v702
  %912 = vmatpush1.bf16.msra.mxu0 %v701
  %913 = vmatprep.subr.bf16.mxu0 %v694
  %914 = vmatpush1.bf16.msra.mxu0 %v693
  %915 = vmatprep.subr.bf16.mxu0 %v686
  %916 = vmatpush1.bf16.msra.mxu0 %v685
  %917 = vmatprep.subr.bf16.mxu0 %v678
  %918 = vmatpush1.bf16.msra.mxu0 %v677
  %919 = vmatprep.subr.bf16.mxu0 %v670
  %920 = vmatpush1.bf16.msra.mxu0 %v669
  %921 = vmatprep.subr.bf16.mxu0 %v662
  %922 = vmatpush1.bf16.msra.mxu0 %v661
  %923 = vmatprep.subr.bf16.mxu0 %v654
  %924 = vmatpush1.bf16.msra.mxu0 %v653
  %925 = vmatprep.subr.bf16.mxu0 %v774
  %926 = vmatpush2.bf16.msra.mxu0 %v773
  %927 = vmatprep.subr.bf16.mxu0 %v766
  %928 = vmatpush2.bf16.msra.mxu0 %v765
  %929 = vmatprep.subr.bf16.mxu0 %v758
  %930 = vmatpush2.bf16.msra.mxu0 %v757
  %931 = vmatprep.subr.bf16.mxu0 %v750
  %932 = vmatpush2.bf16.msra.mxu0 %v749
  %933 = vmatprep.subr.bf16.mxu0 %v742
  %934 = vmatpush2.bf16.msra.mxu0 %v741
  %935 = vmatprep.subr.bf16.mxu0 %v734
  %936 = vmatpush2.bf16.msra.mxu0 %v733
  %937 = vmatprep.subr.bf16.mxu0 %v726
  %938 = vmatpush2.bf16.msra.mxu0 %v725
  %939 = vmatprep.subr.bf16.mxu0 %v718
  %940 = vmatpush2.bf16.msra.mxu0 %v717
  %941 = vmatprep.mubr.bf16.mxu0 %v98
  %942 = vmatmul.mubr.bf16.gmra.mxu0 %v97
  %v943 = vpop.f32.mrf.mxu0
  %v944 = vadd.f32 %v232, %v943
  %v945 = vpop.f32.mrf.mxu0
  %v946 = vadd.f32 %v236, %v945
  %v947 = vpop.f32.mrf.mxu0
  %v948 = vadd.f32 %v232, %v947
  %v949 = vpop.f32.mrf.mxu0
  %v950 = vadd.f32 %v236, %v949
  %951 = vdwg.mxu0
  %952 = vmatprep.subr.bf16.mxu0 %v712
  %953 = vmatpush1.bf16.msra.mxu0 %v711
  %954 = vmatprep.subr.bf16.mxu0 %v704
  %955 = vmatpush1.bf16.msra.mxu0 %v703
  %956 = vmatprep.subr.bf16.mxu0 %v696
  %957 = vmatpush1.bf16.msra.mxu0 %v695
  %958 = vmatprep.subr.bf16.mxu0 %v688
  %959 = vmatpush1.bf16.msra.mxu0 %v687
  %960 = vmatprep.subr.bf16.mxu0 %v680
  %961 = vmatpush1.bf16.msra.mxu0 %v679
  %962 = vmatprep.subr.bf16.mxu0 %v672
  %963 = vmatpush1.bf16.msra.mxu0 %v671
  %964 = vmatprep.subr.bf16.mxu0 %v664
  %965 = vmatpush1.bf16.msra.mxu0 %v663
  %966 = vmatprep.subr.bf16.mxu0 %v656
  %967 = vmatpush1.bf16.msra.mxu0 %v655
  %968 = vmatprep.subr.bf16.mxu0 %v776
  %969 = vmatpush2.bf16.msra.mxu0 %v775
  %970 = vmatprep.subr.bf16.mxu0 %v768
  %971 = vmatpush2.bf16.msra.mxu0 %v767
  %972 = vmatprep.subr.bf16.mxu0 %v760
  %973 = vmatpush2.bf16.msra.mxu0 %v759
  %974 = vmatprep.subr.bf16.mxu0 %v752
  %975 = vmatpush2.bf16.msra.mxu0 %v751
  %976 = vmatprep.subr.bf16.mxu0 %v744
  %977 = vmatpush2.bf16.msra.mxu0 %v743
  %978 = vmatprep.subr.bf16.mxu0 %v736
  %979 = vmatpush2.bf16.msra.mxu0 %v735
  %980 = vmatprep.subr.bf16.mxu0 %v728
  %981 = vmatpush2.bf16.msra.mxu0 %v727
  %982 = vmatprep.subr.bf16.mxu0 %v720
  %983 = vmatpush2.bf16.msra.mxu0 %v719
  %984 = vmatprep.mubr.bf16.mxu0 %v98
  %985 = vmatmul.mubr.bf16.gmra.mxu0 %v97
  %v986 = vpop.f32.mrf.mxu0
  %v987 = vadd.f32 %v240, %v986
  %v988 = vpop.f32.mrf.mxu0
  %v989 = vadd.f32 %v244, %v988
  %v990 = vpop.f32.mrf.mxu0
  %v991 = vadd.f32 %v240, %v990
  %v992 = vpop.f32.mrf.mxu0
  %v993 = vadd.f32 %v244, %v992
  %994 = vdwg.mxu0
  %995 = vmatprep.subr.bf16.mxu0 %v714
  %996 = vmatpush1.bf16.msra.mxu0 %v713
  %997 = vmatprep.subr.bf16.mxu0 %v706
  %998 = vmatpush1.bf16.msra.mxu0 %v705
  %999 = vmatprep.subr.bf16.mxu0 %v698
  %1000 = vmatpush1.bf16.msra.mxu0 %v697
  %1001 = vmatprep.subr.bf16.mxu0 %v690
  %1002 = vmatpush1.bf16.msra.mxu0 %v689
  %1003 = vmatprep.subr.bf16.mxu0 %v682
  %1004 = vmatpush1.bf16.msra.mxu0 %v681
  %1005 = vmatprep.subr.bf16.mxu0 %v674
  %1006 = vmatpush1.bf16.msra.mxu0 %v673
  %1007 = vmatprep.subr.bf16.mxu0 %v666
  %1008 = vmatpush1.bf16.msra.mxu0 %v665
  %1009 = vmatprep.subr.bf16.mxu0 %v658
  %1010 = vmatpush1.bf16.msra.mxu0 %v657
  %1011 = vmatprep.subr.bf16.mxu0 %v778
  %1012 = vmatpush2.bf16.msra.mxu0 %v777
  %1013 = vmatprep.subr.bf16.mxu0 %v770
  %1014 = vmatpush2.bf16.msra.mxu0 %v769
  %1015 = vmatprep.subr.bf16.mxu0 %v762
  %1016 = vmatpush2.bf16.msra.mxu0 %v761
  %1017 = vmatprep.subr.bf16.mxu0 %v754
  %1018 = vmatpush2.bf16.msra.mxu0 %v753
  %1019 = vmatprep.subr.bf16.mxu0 %v746
  %1020 = vmatpush2.bf16.msra.mxu0 %v745
  %1021 = vmatprep.subr.bf16.mxu0 %v738
  %1022 = vmatpush2.bf16.msra.mxu0 %v737
  %1023 = vmatprep.subr.bf16.mxu0 %v730
  %1024 = vmatpush2.bf16.msra.mxu0 %v729
  %1025 = vmatprep.subr.bf16.mxu0 %v722
  %1026 = vmatpush2.bf16.msra.mxu0 %v721
  %1027 = vmatprep.mubr.bf16.mxu0 %v98
  %1028 = vmatmul.mubr.bf16.gmra.mxu0 %v97
  %v1029 = vpop.f32.mrf.mxu0
  %v1030 = vadd.f32 %v248, %v1029
  %v1031 = vpop.f32.mrf.mxu0
  %v1032 = vadd.f32 %v252, %v1031
  %v1033 = vpop.f32.mrf.mxu0
  %v1034 = vadd.f32 %v248, %v1033
  %v1035 = vpop.f32.mrf.mxu0
  %v1036 = vadd.f32 %v252, %v1035
  %1037 = vdwg.mxu0
  %1038 = vmatprep.subr.bf16.mxu0 %v716
  %1039 = vmatpush1.bf16.msra.mxu0 %v715
  %1040 = vmatprep.subr.bf16.mxu0 %v708
  %1041 = vmatpush1.bf16.msra.mxu0 %v707
  %1042 = vmatprep.subr.bf16.mxu0 %v700
  %1043 = vmatpush1.bf16.msra.mxu0 %v699
  %1044 = vmatprep.subr.bf16.mxu0 %v692
  %1045 = vmatpush1.bf16.msra.mxu0 %v691
  %1046 = vmatprep.subr.bf16.mxu0 %v684
  %1047 = vmatpush1.bf16.msra.mxu0 %v683
  %1048 = vmatprep.subr.bf16.mxu0 %v676
  %1049 = vmatpush1.bf16.msra.mxu0 %v675
  %1050 = vmatprep.subr.bf16.mxu0 %v668
  %1051 = vmatpush1.bf16.msra.mxu0 %v667
  %1052 = vmatprep.subr.bf16.mxu0 %v660
  %1053 = vmatpush1.bf16.msra.mxu0 %v659
  %1054 = vmatprep.subr.bf16.mxu0 %v780
  %1055 = vmatpush2.bf16.msra.mxu0 %v779
  %1056 = vmatprep.subr.bf16.mxu0 %v772
  %1057 = vmatpush2.bf16.msra.mxu0 %v771
  %1058 = vmatprep.subr.bf16.mxu0 %v764
  %1059 = vmatpush2.bf16.msra.mxu0 %v763
  %1060 = vmatprep.subr.bf16.mxu0 %v756
  %1061 = vmatpush2.bf16.msra.mxu0 %v755
  %1062 = vmatprep.subr.bf16.mxu0 %v748
  %1063 = vmatpush2.bf16.msra.mxu0 %v747
  %1064 = vmatprep.subr.bf16.mxu0 %v740
  %1065 = vmatpush2.bf16.msra.mxu0 %v739
  %1066 = vmatprep.subr.bf16.mxu0 %v732
  %1067 = vmatpush2.bf16.msra.mxu0 %v731
  %1068 = vmatprep.subr.bf16.mxu0 %v724
  %1069 = vmatpush2.bf16.msra.mxu0 %v723
  %1070 = vmatprep.mubr.bf16.mxu0 %v98
  %1071 = vmatmul.mubr.bf16.gmra.mxu0 %v97
  %v1072 = vpop.f32.mrf.mxu0
  %v1073 = vadd.f32 %v256, %v1072
  %v1074 = vpop.f32.mrf.mxu0
  %v1075 = vadd.f32 %v260, %v1074
  %v1076 = vpop.f32.mrf.mxu0
  %v1077 = vadd.f32 %v256, %v1076
  %v1078 = vpop.f32.mrf.mxu0
  %v1079 = vadd.f32 %v260, %v1078
  %1080 = vdwg.mxu0
  %v1081 = vmax.f32 %v944, 0.0
  %v1082 = vmax.f32 %v946, 0.0
  %v1083 = vmax.f32 %v987, 0.0
  %v1084 = vmax.f32 %v989, 0.0
  %v1085 = vmax.f32 %v1030, 0.0
  %v1086 = vmax.f32 %v1032, 0.0
  %v1087 = vmax.f32 %v1073, 0.0
  %v1088 = vmax.f32 %v1075, 0.0
  %v1089 = vmax.f32 %v948, 0.0
  %v1090 = vmax.f32 %v950, 0.0
  %v1091 = vmax.f32 %v991, 0.0
  %v1092 = vmax.f32 %v993, 0.0
  %v1093 = vmax.f32 %v1034, 0.0
  %v1094 = vmax.f32 %v1036, 0.0
  %v1095 = vmax.f32 %v1077, 0.0
  %v1096 = vmax.f32 %v1079, 0.0
  %v1097 = vpack.c.bf16 %v1089, %v1081
  %v1098 = vpack.c.bf16 %v1090, %v1082
  %v1099 = vpack.c.bf16 %v1091, %v1083
  %v1100 = vpack.c.bf16 %v1092, %v1084
  %v1101 = vpack.c.bf16 %v1093, %v1085
  %v1102 = vpack.c.bf16 %v1094, %v1086
  %v1103 = vpack.c.bf16 %v1095, %v1087
  %v1104 = vpack.c.bf16 %v1096, %v1088
  %v1105 = vld [vmem:[%s5] sm:$0xff]
  %v1106 = vld [vmem:[%s5 + $0x8] sm:$0xff]
  %v1107 = vld [vmem:[%s5 + $0x10] sm:$0xff]
  %v1108 = vld [vmem:[%s5 + $0x18] sm:$0xff]
  %v1109 = vld [vmem:[%s5 + $0x20] sm:$0xff]
  %v1110 = vld [vmem:[%s5 + $0x28] sm:$0xff]
  %v1111 = vld [vmem:[%s5 + $0x30] sm:$0xff]
  %v1112 = vld [vmem:[%s5 + $0x38] sm:$0xff]
  %v1113 = vld [vmem:[%s5 + $0x40] sm:$0xff]
  %v1114 = vld [vmem:[%s5 + $0x48] sm:$0xff]
  %v1115 = vld [vmem:[%s5 + $0x50] sm:$0xff]
  %v1116 = vld [vmem:[%s5 + $0x58] sm:$0xff]
  %v1117 = vld [vmem:[%s5 + $0x60] sm:$0xff]
  %v1118 = vld [vmem:[%s5 + $0x68] sm:$0xff]
  %v1119 = vld [vmem:[%s5 + $0x70] sm:$0xff]
  %v1120 = vld [vmem:[%s5 + $0x78] sm:$0xff]
  %v1121 = vld [vmem:[%s5 + $0x80] sm:$0xff]
  %v1122 = vld [vmem:[%s5 + $0x88] sm:$0xff]
  %v1123 = vld [vmem:[%s5 + $0x90] sm:$0xff]
  %v1124 = vld [vmem:[%s5 + $0x98] sm:$0xff]
  %v1125 = vld [vmem:[%s5 + $0xa0] sm:$0xff]
  %v1126 = vld [vmem:[%s5 + $0xa8] sm:$0xff]
  %v1127 = vld [vmem:[%s5 + $0xb0] sm:$0xff]
  %v1128 = vld [vmem:[%s5 + $0xb8] sm:$0xff]
  %v1129 = vld [vmem:[%s5 + $0xc0] sm:$0xff]
  %v1130 = vld [vmem:[%s5 + $0xc8] sm:$0xff]
  %v1131 = vld [vmem:[%s5 + $0xd0] sm:$0xff]
  %v1132 = vld [vmem:[%s5 + $0xd8] sm:$0xff]
  %v1133 = vld [vmem:[%s5 + $0xe0] sm:$0xff]
  %v1134 = vld [vmem:[%s5 + $0xe8] sm:$0xff]
  %v1135 = vld [vmem:[%s5 + $0xf0] sm:$0xff]
  %v1136 = vld [vmem:[%s5 + $0xf8] sm:$0xff]
  %v1137 = vld [vmem:[%s5 + $0x100] sm:$0xff]
  %v1138 = vld [vmem:[%s5 + $0x108] sm:$0xff]
  %v1139 = vld [vmem:[%s5 + $0x110] sm:$0xff]
  %v1140 = vld [vmem:[%s5 + $0x118] sm:$0xff]
  %v1141 = vld [vmem:[%s5 + $0x120] sm:$0xff]
  %v1142 = vld [vmem:[%s5 + $0x128] sm:$0xff]
  %v1143 = vld [vmem:[%s5 + $0x130] sm:$0xff]
  %v1144 = vld [vmem:[%s5 + $0x138] sm:$0xff]
  %v1145 = vld [vmem:[%s5 + $0x140] sm:$0xff]
  %v1146 = vld [vmem:[%s5 + $0x148] sm:$0xff]
  %v1147 = vld [vmem:[%s5 + $0x150] sm:$0xff]
  %v1148 = vld [vmem:[%s5 + $0x158] sm:$0xff]
  %v1149 = vld [vmem:[%s5 + $0x160] sm:$0xff]
  %v1150 = vld [vmem:[%s5 + $0x168] sm:$0xff]
  %v1151 = vld [vmem:[%s5 + $0x170] sm:$0xff]
  %v1152 = vld [vmem:[%s5 + $0x178] sm:$0xff]
  %v1153 = vld [vmem:[%s5 + $0x180] sm:$0xff]
  %v1154 = vld [vmem:[%s5 + $0x188] sm:$0xff]
  %v1155 = vld [vmem:[%s5 + $0x190] sm:$0xff]
  %v1156 = vld [vmem:[%s5 + $0x198] sm:$0xff]
  %v1157 = vld [vmem:[%s5 + $0x1a0] sm:$0xff]
  %v1158 = vld [vmem:[%s5 + $0x1a8] sm:$0xff]
  %v1159 = vld [vmem:[%s5 + $0x1b0] sm:$0xff]
  %v1160 = vld [vmem:[%s5 + $0x1b8] sm:$0xff]
  %v1161 = vld [vmem:[%s5 + $0x1c0] sm:$0xff]
  %v1162 = vld [vmem:[%s5 + $0x1c8] sm:$0xff]
  %v1163 = vld [vmem:[%s5 + $0x1d0] sm:$0xff]
  %v1164 = vld [vmem:[%s5 + $0x1d8] sm:$0xff]
  %v1165 = vld [vmem:[%s5 + $0x1e0] sm:$0xff]
  %v1166 = vld [vmem:[%s5 + $0x1e8] sm:$0xff]
  %v1167 = vld [vmem:[%s5 + $0x1f0] sm:$0xff]
  %v1168 = vld [vmem:[%s5 + $0x1f8] sm:$0xff]
  %v1169 = vld [vmem:[%s5 + $0x200] sm:$0xff]
  %v1170 = vld [vmem:[%s5 + $0x208] sm:$0xff]
  %v1171 = vld [vmem:[%s5 + $0x210] sm:$0xff]
  %v1172 = vld [vmem:[%s5 + $0x218] sm:$0xff]
  %v1173 = vld [vmem:[%s5 + $0x220] sm:$0xff]
  %v1174 = vld [vmem:[%s5 + $0x228] sm:$0xff]
  %v1175 = vld [vmem:[%s5 + $0x230] sm:$0xff]
  %v1176 = vld [vmem:[%s5 + $0x238] sm:$0xff]
  %v1177 = vld [vmem:[%s5 + $0x240] sm:$0xff]
  %v1178 = vld [vmem:[%s5 + $0x248] sm:$0xff]
  %v1179 = vld [vmem:[%s5 + $0x250] sm:$0xff]
  %v1180 = vld [vmem:[%s5 + $0x258] sm:$0xff]
  %v1181 = vld [vmem:[%s5 + $0x260] sm:$0xff]
  %v1182 = vld [vmem:[%s5 + $0x268] sm:$0xff]
  %v1183 = vld [vmem:[%s5 + $0x270] sm:$0xff]
  %v1184 = vld [vmem:[%s5 + $0x278] sm:$0xff]
  %v1185 = vld [vmem:[%s5 + $0x280] sm:$0xff]
  %v1186 = vld [vmem:[%s5 + $0x288] sm:$0xff]
  %v1187 = vld [vmem:[%s5 + $0x290] sm:$0xff]
  %v1188 = vld [vmem:[%s5 + $0x298] sm:$0xff]
  %v1189 = vld [vmem:[%s5 + $0x2a0] sm:$0xff]
  %v1190 = vld [vmem:[%s5 + $0x2a8] sm:$0xff]
  %v1191 = vld [vmem:[%s5 + $0x2b0] sm:$0xff]
  %v1192 = vld [vmem:[%s5 + $0x2b8] sm:$0xff]
  %v1193 = vld [vmem:[%s5 + $0x2c0] sm:$0xff]
  %v1194 = vld [vmem:[%s5 + $0x2c8] sm:$0xff]
  %v1195 = vld [vmem:[%s5 + $0x2d0] sm:$0xff]
  %v1196 = vld [vmem:[%s5 + $0x2d8] sm:$0xff]
  %v1197 = vld [vmem:[%s5 + $0x2e0] sm:$0xff]
  %v1198 = vld [vmem:[%s5 + $0x2e8] sm:$0xff]
  %v1199 = vld [vmem:[%s5 + $0x2f0] sm:$0xff]
  %v1200 = vld [vmem:[%s5 + $0x2f8] sm:$0xff]
  %v1201 = vld [vmem:[%s5 + $0x300] sm:$0xff]
  %v1202 = vld [vmem:[%s5 + $0x308] sm:$0xff]
  %v1203 = vld [vmem:[%s5 + $0x310] sm:$0xff]
  %v1204 = vld [vmem:[%s5 + $0x318] sm:$0xff]
  %v1205 = vld [vmem:[%s5 + $0x320] sm:$0xff]
  %v1206 = vld [vmem:[%s5 + $0x328] sm:$0xff]
  %v1207 = vld [vmem:[%s5 + $0x330] sm:$0xff]
  %v1208 = vld [vmem:[%s5 + $0x338] sm:$0xff]
  %v1209 = vld [vmem:[%s5 + $0x340] sm:$0xff]
  %v1210 = vld [vmem:[%s5 + $0x348] sm:$0xff]
  %v1211 = vld [vmem:[%s5 + $0x350] sm:$0xff]
  %v1212 = vld [vmem:[%s5 + $0x358] sm:$0xff]
  %v1213 = vld [vmem:[%s5 + $0x360] sm:$0xff]
  %v1214 = vld [vmem:[%s5 + $0x368] sm:$0xff]
  %v1215 = vld [vmem:[%s5 + $0x370] sm:$0xff]
  %v1216 = vld [vmem:[%s5 + $0x378] sm:$0xff]
  %v1217 = vld [vmem:[%s5 + $0x380] sm:$0xff]
  %v1218 = vld [vmem:[%s5 + $0x388] sm:$0xff]
  %v1219 = vld [vmem:[%s5 + $0x390] sm:$0xff]
  %v1220 = vld [vmem:[%s5 + $0x398] sm:$0xff]
  %v1221 = vld [vmem:[%s5 + $0x3a0] sm:$0xff]
  %v1222 = vld [vmem:[%s5 + $0x3a8] sm:$0xff]
  %v1223 = vld [vmem:[%s5 + $0x3b0] sm:$0xff]
  %v1224 = vld [vmem:[%s5 + $0x3b8] sm:$0xff]
  %v1225 = vld [vmem:[%s5 + $0x3c0] sm:$0xff]
  %v1226 = vld [vmem:[%s5 + $0x3c8] sm:$0xff]
  %v1227 = vld [vmem:[%s5 + $0x3d0] sm:$0xff]
  %v1228 = vld [vmem:[%s5 + $0x3d8] sm:$0xff]
  %v1229 = vld [vmem:[%s5 + $0x3e0] sm:$0xff]
  %v1230 = vld [vmem:[%s5 + $0x3e8] sm:$0xff]
  %v1231 = vld [vmem:[%s5 + $0x3f0] sm:$0xff]
  %v1232 = vld [vmem:[%s5 + $0x3f8] sm:$0xff]
  %v1233 = vld [vmem:[%s6] sm:$0x3]
  %v1235 = vlaneseq
  %v1236 = vshrl.u32 %v1235, 7
  %v1237 = vsub.s32 0, %v1236
  %v1238 = vrot.slane %v1233, %v1237
  %v1239 = vlaneseq
  %v1240 = vshrl.u32 %v1239, 7
  %v1241 = vsub.s32 1, %v1240
  %v1242 = vrot.slane %v1233, %v1241
  %v1373 = vunpack.c.l.b16 %v1105
  %v1374 = vunpack.c.h.b16 %v1105
  %v1375 = vunpack.c.l.b16 %v1106
  %v1376 = vunpack.c.h.b16 %v1106
  %v1377 = vunpack.c.l.b16 %v1107
  %v1378 = vunpack.c.h.b16 %v1107
  %v1379 = vunpack.c.l.b16 %v1108
  %v1380 = vunpack.c.h.b16 %v1108
  %v1381 = vunpack.c.l.b16 %v1109
  %v1382 = vunpack.c.h.b16 %v1109
  %v1383 = vunpack.c.l.b16 %v1110
  %v1384 = vunpack.c.h.b16 %v1110
  %v1385 = vunpack.c.l.b16 %v1111
  %v1386 = vunpack.c.h.b16 %v1111
  %v1387 = vunpack.c.l.b16 %v1112
  %v1388 = vunpack.c.h.b16 %v1112
  %v1389 = vunpack.c.l.b16 %v1113
  %v1390 = vunpack.c.h.b16 %v1113
  %v1391 = vunpack.c.l.b16 %v1114
  %v1392 = vunpack.c.h.b16 %v1114
  %v1393 = vunpack.c.l.b16 %v1115
  %v1394 = vunpack.c.h.b16 %v1115
  %v1395 = vunpack.c.l.b16 %v1116
  %v1396 = vunpack.c.h.b16 %v1116
  %v1397 = vunpack.c.l.b16 %v1117
  %v1398 = vunpack.c.h.b16 %v1117
  %v1399 = vunpack.c.l.b16 %v1118
  %v1400 = vunpack.c.h.b16 %v1118
  %v1401 = vunpack.c.l.b16 %v1119
  %v1402 = vunpack.c.h.b16 %v1119
  %v1403 = vunpack.c.l.b16 %v1120
  %v1404 = vunpack.c.h.b16 %v1120
  %v1405 = vunpack.c.l.b16 %v1121
  %v1406 = vunpack.c.h.b16 %v1121
  %v1407 = vunpack.c.l.b16 %v1122
  %v1408 = vunpack.c.h.b16 %v1122
  %v1409 = vunpack.c.l.b16 %v1123
  %v1410 = vunpack.c.h.b16 %v1123
  %v1411 = vunpack.c.l.b16 %v1124
  %v1412 = vunpack.c.h.b16 %v1124
  %v1413 = vunpack.c.l.b16 %v1125
  %v1414 = vunpack.c.h.b16 %v1125
  %v1415 = vunpack.c.l.b16 %v1126
  %v1416 = vunpack.c.h.b16 %v1126
  %v1417 = vunpack.c.l.b16 %v1127
  %v1418 = vunpack.c.h.b16 %v1127
  %v1419 = vunpack.c.l.b16 %v1128
  %v1420 = vunpack.c.h.b16 %v1128
  %v1421 = vunpack.c.l.b16 %v1129
  %v1422 = vunpack.c.h.b16 %v1129
  %v1423 = vunpack.c.l.b16 %v1130
  %v1424 = vunpack.c.h.b16 %v1130
  %v1425 = vunpack.c.l.b16 %v1131
  %v1426 = vunpack.c.h.b16 %v1131
  %v1427 = vunpack.c.l.b16 %v1132
  %v1428 = vunpack.c.h.b16 %v1132
  %v1429 = vunpack.c.l.b16 %v1133
  %v1430 = vunpack.c.h.b16 %v1133
  %v1431 = vunpack.c.l.b16 %v1134
  %v1432 = vunpack.c.h.b16 %v1134
  %v1433 = vunpack.c.l.b16 %v1135
  %v1434 = vunpack.c.h.b16 %v1135
  %v1435 = vunpack.c.l.b16 %v1136
  %v1436 = vunpack.c.h.b16 %v1136
  %v1437 = vunpack.c.l.b16 %v1137
  %v1438 = vunpack.c.h.b16 %v1137
  %v1439 = vunpack.c.l.b16 %v1138
  %v1440 = vunpack.c.h.b16 %v1138
  %v1441 = vunpack.c.l.b16 %v1139
  %v1442 = vunpack.c.h.b16 %v1139
  %v1443 = vunpack.c.l.b16 %v1140
  %v1444 = vunpack.c.h.b16 %v1140
  %v1445 = vunpack.c.l.b16 %v1141
  %v1446 = vunpack.c.h.b16 %v1141
  %v1447 = vunpack.c.l.b16 %v1142
  %v1448 = vunpack.c.h.b16 %v1142
  %v1449 = vunpack.c.l.b16 %v1143
  %v1450 = vunpack.c.h.b16 %v1143
  %v1451 = vunpack.c.l.b16 %v1144
  %v1452 = vunpack.c.h.b16 %v1144
  %v1453 = vunpack.c.l.b16 %v1145
  %v1454 = vunpack.c.h.b16 %v1145
  %v1455 = vunpack.c.l.b16 %v1146
  %v1456 = vunpack.c.h.b16 %v1146
  %v1457 = vunpack.c.l.b16 %v1147
  %v1458 = vunpack.c.h.b16 %v1147
  %v1459 = vunpack.c.l.b16 %v1148
  %v1460 = vunpack.c.h.b16 %v1148
  %v1461 = vunpack.c.l.b16 %v1149
  %v1462 = vunpack.c.h.b16 %v1149
  %v1463 = vunpack.c.l.b16 %v1150
  %v1464 = vunpack.c.h.b16 %v1150
  %v1465 = vunpack.c.l.b16 %v1151
  %v1466 = vunpack.c.h.b16 %v1151
  %v1467 = vunpack.c.l.b16 %v1152
  %v1468 = vunpack.c.h.b16 %v1152
  %v1469 = vunpack.c.l.b16 %v1153
  %v1470 = vunpack.c.h.b16 %v1153
  %v1471 = vunpack.c.l.b16 %v1154
  %v1472 = vunpack.c.h.b16 %v1154
  %v1473 = vunpack.c.l.b16 %v1155
  %v1474 = vunpack.c.h.b16 %v1155
  %v1475 = vunpack.c.l.b16 %v1156
  %v1476 = vunpack.c.h.b16 %v1156
  %v1477 = vunpack.c.l.b16 %v1157
  %v1478 = vunpack.c.h.b16 %v1157
  %v1479 = vunpack.c.l.b16 %v1158
  %v1480 = vunpack.c.h.b16 %v1158
  %v1481 = vunpack.c.l.b16 %v1159
  %v1482 = vunpack.c.h.b16 %v1159
  %v1483 = vunpack.c.l.b16 %v1160
  %v1484 = vunpack.c.h.b16 %v1160
  %v1485 = vunpack.c.l.b16 %v1161
  %v1486 = vunpack.c.h.b16 %v1161
  %v1487 = vunpack.c.l.b16 %v1162
  %v1488 = vunpack.c.h.b16 %v1162
  %v1489 = vunpack.c.l.b16 %v1163
  %v1490 = vunpack.c.h.b16 %v1163
  %v1491 = vunpack.c.l.b16 %v1164
  %v1492 = vunpack.c.h.b16 %v1164
  %v1493 = vunpack.c.l.b16 %v1165
  %v1494 = vunpack.c.h.b16 %v1165
  %v1495 = vunpack.c.l.b16 %v1166
  %v1496 = vunpack.c.h.b16 %v1166
  %v1497 = vunpack.c.l.b16 %v1167
  %v1498 = vunpack.c.h.b16 %v1167
  %v1499 = vunpack.c.l.b16 %v1168
  %v1500 = vunpack.c.h.b16 %v1168
  %v1501 = vunpack.c.l.b16 %v1169
  %v1502 = vunpack.c.h.b16 %v1169
  %v1503 = vunpack.c.l.b16 %v1170
  %v1504 = vunpack.c.h.b16 %v1170
  %v1505 = vunpack.c.l.b16 %v1171
  %v1506 = vunpack.c.h.b16 %v1171
  %v1507 = vunpack.c.l.b16 %v1172
  %v1508 = vunpack.c.h.b16 %v1172
  %v1509 = vunpack.c.l.b16 %v1173
  %v1510 = vunpack.c.h.b16 %v1173
  %v1511 = vunpack.c.l.b16 %v1174
  %v1512 = vunpack.c.h.b16 %v1174
  %v1513 = vunpack.c.l.b16 %v1175
  %v1514 = vunpack.c.h.b16 %v1175
  %v1515 = vunpack.c.l.b16 %v1176
  %v1516 = vunpack.c.h.b16 %v1176
  %v1517 = vunpack.c.l.b16 %v1177
  %v1518 = vunpack.c.h.b16 %v1177
  %v1519 = vunpack.c.l.b16 %v1178
  %v1520 = vunpack.c.h.b16 %v1178
  %v1521 = vunpack.c.l.b16 %v1179
  %v1522 = vunpack.c.h.b16 %v1179
  %v1523 = vunpack.c.l.b16 %v1180
  %v1524 = vunpack.c.h.b16 %v1180
  %v1525 = vunpack.c.l.b16 %v1181
  %v1526 = vunpack.c.h.b16 %v1181
  %v1527 = vunpack.c.l.b16 %v1182
  %v1528 = vunpack.c.h.b16 %v1182
  %v1529 = vunpack.c.l.b16 %v1183
  %v1530 = vunpack.c.h.b16 %v1183
  %v1531 = vunpack.c.l.b16 %v1184
  %v1532 = vunpack.c.h.b16 %v1184
  %v1533 = vunpack.c.l.b16 %v1185
  %v1534 = vunpack.c.h.b16 %v1185
  %v1535 = vunpack.c.l.b16 %v1186
  %v1536 = vunpack.c.h.b16 %v1186
  %v1537 = vunpack.c.l.b16 %v1187
  %v1538 = vunpack.c.h.b16 %v1187
  %v1539 = vunpack.c.l.b16 %v1188
  %v1540 = vunpack.c.h.b16 %v1188
  %v1541 = vunpack.c.l.b16 %v1189
  %v1542 = vunpack.c.h.b16 %v1189
  %v1543 = vunpack.c.l.b16 %v1190
  %v1544 = vunpack.c.h.b16 %v1190
  %v1545 = vunpack.c.l.b16 %v1191
  %v1546 = vunpack.c.h.b16 %v1191
  %v1547 = vunpack.c.l.b16 %v1192
  %v1548 = vunpack.c.h.b16 %v1192
  %v1549 = vunpack.c.l.b16 %v1193
  %v1550 = vunpack.c.h.b16 %v1193
  %v1551 = vunpack.c.l.b16 %v1194
  %v1552 = vunpack.c.h.b16 %v1194
  %v1553 = vunpack.c.l.b16 %v1195
  %v1554 = vunpack.c.h.b16 %v1195
  %v1555 = vunpack.c.l.b16 %v1196
  %v1556 = vunpack.c.h.b16 %v1196
  %v1557 = vunpack.c.l.b16 %v1197
  %v1558 = vunpack.c.h.b16 %v1197
  %v1559 = vunpack.c.l.b16 %v1198
  %v1560 = vunpack.c.h.b16 %v1198
  %v1561 = vunpack.c.l.b16 %v1199
  %v1562 = vunpack.c.h.b16 %v1199
  %v1563 = vunpack.c.l.b16 %v1200
  %v1564 = vunpack.c.h.b16 %v1200
  %v1565 = vunpack.c.l.b16 %v1201
  %v1566 = vunpack.c.h.b16 %v1201
  %v1567 = vunpack.c.l.b16 %v1202
  %v1568 = vunpack.c.h.b16 %v1202
  %v1569 = vunpack.c.l.b16 %v1203
  %v1570 = vunpack.c.h.b16 %v1203
  %v1571 = vunpack.c.l.b16 %v1204
  %v1572 = vunpack.c.h.b16 %v1204
  %v1573 = vunpack.c.l.b16 %v1205
  %v1574 = vunpack.c.h.b16 %v1205
  %v1575 = vunpack.c.l.b16 %v1206
  %v1576 = vunpack.c.h.b16 %v1206
  %v1577 = vunpack.c.l.b16 %v1207
  %v1578 = vunpack.c.h.b16 %v1207
  %v1579 = vunpack.c.l.b16 %v1208
  %v1580 = vunpack.c.h.b16 %v1208
  %v1581 = vunpack.c.l.b16 %v1209
  %v1582 = vunpack.c.h.b16 %v1209
  %v1583 = vunpack.c.l.b16 %v1210
  %v1584 = vunpack.c.h.b16 %v1210
  %v1585 = vunpack.c.l.b16 %v1211
  %v1586 = vunpack.c.h.b16 %v1211
  %v1587 = vunpack.c.l.b16 %v1212
  %v1588 = vunpack.c.h.b16 %v1212
  %v1589 = vunpack.c.l.b16 %v1213
  %v1590 = vunpack.c.h.b16 %v1213
  %v1591 = vunpack.c.l.b16 %v1214
  %v1592 = vunpack.c.h.b16 %v1214
  %v1593 = vunpack.c.l.b16 %v1215
  %v1594 = vunpack.c.h.b16 %v1215
  %v1595 = vunpack.c.l.b16 %v1216
  %v1596 = vunpack.c.h.b16 %v1216
  %v1597 = vunpack.c.l.b16 %v1217
  %v1598 = vunpack.c.h.b16 %v1217
  %v1599 = vunpack.c.l.b16 %v1218
  %v1600 = vunpack.c.h.b16 %v1218
  %v1601 = vunpack.c.l.b16 %v1219
  %v1602 = vunpack.c.h.b16 %v1219
  %v1603 = vunpack.c.l.b16 %v1220
  %v1604 = vunpack.c.h.b16 %v1220
  %v1605 = vunpack.c.l.b16 %v1221
  %v1606 = vunpack.c.h.b16 %v1221
  %v1607 = vunpack.c.l.b16 %v1222
  %v1608 = vunpack.c.h.b16 %v1222
  %v1609 = vunpack.c.l.b16 %v1223
  %v1610 = vunpack.c.h.b16 %v1223
  %v1611 = vunpack.c.l.b16 %v1224
  %v1612 = vunpack.c.h.b16 %v1224
  %v1613 = vunpack.c.l.b16 %v1225
  %v1614 = vunpack.c.h.b16 %v1225
  %v1615 = vunpack.c.l.b16 %v1226
  %v1616 = vunpack.c.h.b16 %v1226
  %v1617 = vunpack.c.l.b16 %v1227
  %v1618 = vunpack.c.h.b16 %v1227
  %v1619 = vunpack.c.l.b16 %v1228
  %v1620 = vunpack.c.h.b16 %v1228
  %v1621 = vunpack.c.l.b16 %v1229
  %v1622 = vunpack.c.h.b16 %v1229
  %v1623 = vunpack.c.l.b16 %v1230
  %v1624 = vunpack.c.h.b16 %v1230
  %v1625 = vunpack.c.l.b16 %v1231
  %v1626 = vunpack.c.h.b16 %v1231
  %v1627 = vunpack.c.l.b16 %v1232
  %v1628 = vunpack.c.h.b16 %v1232
  %v1629 = vpack.c.b16 %v1375, %v1373
  %v1630 = vpack.c.b16 %v1376, %v1374
  %v1631 = vpack.c.b16 %v1379, %v1377
  %v1632 = vpack.c.b16 %v1380, %v1378
  %v1633 = vpack.c.b16 %v1383, %v1381
  %v1634 = vpack.c.b16 %v1384, %v1382
  %v1635 = vpack.c.b16 %v1387, %v1385
  %v1636 = vpack.c.b16 %v1388, %v1386
  %v1637 = vpack.c.b16 %v1391, %v1389
  %v1638 = vpack.c.b16 %v1392, %v1390
  %v1639 = vpack.c.b16 %v1395, %v1393
  %v1640 = vpack.c.b16 %v1396, %v1394
  %v1641 = vpack.c.b16 %v1399, %v1397
  %v1642 = vpack.c.b16 %v1400, %v1398
  %v1643 = vpack.c.b16 %v1403, %v1401
  %v1644 = vpack.c.b16 %v1404, %v1402
  %v1645 = vpack.c.b16 %v1407, %v1405
  %v1646 = vpack.c.b16 %v1408, %v1406
  %v1647 = vpack.c.b16 %v1411, %v1409
  %v1648 = vpack.c.b16 %v1412, %v1410
  %v1649 = vpack.c.b16 %v1415, %v1413
  %v1650 = vpack.c.b16 %v1416, %v1414
  %v1651 = vpack.c.b16 %v1419, %v1417
  %v1652 = vpack.c.b16 %v1420, %v1418
  %v1653 = vpack.c.b16 %v1423, %v1421
  %v1654 = vpack.c.b16 %v1424, %v1422
  %v1655 = vpack.c.b16 %v1427, %v1425
  %v1656 = vpack.c.b16 %v1428, %v1426
  %v1657 = vpack.c.b16 %v1431, %v1429
  %v1658 = vpack.c.b16 %v1432, %v1430
  %v1659 = vpack.c.b16 %v1435, %v1433
  %v1660 = vpack.c.b16 %v1436, %v1434
  %v1661 = vpack.c.b16 %v1439, %v1437
  %v1662 = vpack.c.b16 %v1440, %v1438
  %v1663 = vpack.c.b16 %v1443, %v1441
  %v1664 = vpack.c.b16 %v1444, %v1442
  %v1665 = vpack.c.b16 %v1447, %v1445
  %v1666 = vpack.c.b16 %v1448, %v1446
  %v1667 = vpack.c.b16 %v1451, %v1449
  %v1668 = vpack.c.b16 %v1452, %v1450
  %v1669 = vpack.c.b16 %v1455, %v1453
  %v1670 = vpack.c.b16 %v1456, %v1454
  %v1671 = vpack.c.b16 %v1459, %v1457
  %v1672 = vpack.c.b16 %v1460, %v1458
  %v1673 = vpack.c.b16 %v1463, %v1461
  %v1674 = vpack.c.b16 %v1464, %v1462
  %v1675 = vpack.c.b16 %v1467, %v1465
  %v1676 = vpack.c.b16 %v1468, %v1466
  %v1677 = vpack.c.b16 %v1471, %v1469
  %v1678 = vpack.c.b16 %v1472, %v1470
  %v1679 = vpack.c.b16 %v1475, %v1473
  %v1680 = vpack.c.b16 %v1476, %v1474
  %v1681 = vpack.c.b16 %v1479, %v1477
  %v1682 = vpack.c.b16 %v1480, %v1478
  %v1683 = vpack.c.b16 %v1483, %v1481
  %v1684 = vpack.c.b16 %v1484, %v1482
  %v1685 = vpack.c.b16 %v1487, %v1485
  %v1686 = vpack.c.b16 %v1488, %v1486
  %v1687 = vpack.c.b16 %v1491, %v1489
  %v1688 = vpack.c.b16 %v1492, %v1490
  %v1689 = vpack.c.b16 %v1495, %v1493
  %v1690 = vpack.c.b16 %v1496, %v1494
  %v1691 = vpack.c.b16 %v1499, %v1497
  %v1692 = vpack.c.b16 %v1500, %v1498
  %v1693 = vpack.c.b16 %v1503, %v1501
  %v1694 = vpack.c.b16 %v1504, %v1502
  %v1695 = vpack.c.b16 %v1507, %v1505
  %v1696 = vpack.c.b16 %v1508, %v1506
  %v1697 = vpack.c.b16 %v1511, %v1509
  %v1698 = vpack.c.b16 %v1512, %v1510
  %v1699 = vpack.c.b16 %v1515, %v1513
  %v1700 = vpack.c.b16 %v1516, %v1514
  %v1701 = vpack.c.b16 %v1519, %v1517
  %v1702 = vpack.c.b16 %v1520, %v1518
  %v1703 = vpack.c.b16 %v1523, %v1521
  %v1704 = vpack.c.b16 %v1524, %v1522
  %v1705 = vpack.c.b16 %v1527, %v1525
  %v1706 = vpack.c.b16 %v1528, %v1526
  %v1707 = vpack.c.b16 %v1531, %v1529
  %v1708 = vpack.c.b16 %v1532, %v1530
  %v1709 = vpack.c.b16 %v1535, %v1533
  %v1710 = vpack.c.b16 %v1536, %v1534
  %v1711 = vpack.c.b16 %v1539, %v1537
  %v1712 = vpack.c.b16 %v1540, %v1538
  %v1713 = vpack.c.b16 %v1543, %v1541
  %v1714 = vpack.c.b16 %v1544, %v1542
  %v1715 = vpack.c.b16 %v1547, %v1545
  %v1716 = vpack.c.b16 %v1548, %v1546
  %v1717 = vpack.c.b16 %v1551, %v1549
  %v1718 = vpack.c.b16 %v1552, %v1550
  %v1719 = vpack.c.b16 %v1555, %v1553
  %v1720 = vpack.c.b16 %v1556, %v1554
  %v1721 = vpack.c.b16 %v1559, %v1557
  %v1722 = vpack.c.b16 %v1560, %v1558
  %v1723 = vpack.c.b16 %v1563, %v1561
  %v1724 = vpack.c.b16 %v1564, %v1562
  %v1725 = vpack.c.b16 %v1567, %v1565
  %v1726 = vpack.c.b16 %v1568, %v1566
  %v1727 = vpack.c.b16 %v1571, %v1569
  %v1728 = vpack.c.b16 %v1572, %v1570
  %v1729 = vpack.c.b16 %v1575, %v1573
  %v1730 = vpack.c.b16 %v1576, %v1574
  %v1731 = vpack.c.b16 %v1579, %v1577
  %v1732 = vpack.c.b16 %v1580, %v1578
  %v1733 = vpack.c.b16 %v1583, %v1581
  %v1734 = vpack.c.b16 %v1584, %v1582
  %v1735 = vpack.c.b16 %v1587, %v1585
  %v1736 = vpack.c.b16 %v1588, %v1586
  %v1737 = vpack.c.b16 %v1591, %v1589
  %v1738 = vpack.c.b16 %v1592, %v1590
  %v1739 = vpack.c.b16 %v1595, %v1593
  %v1740 = vpack.c.b16 %v1596, %v1594
  %v1741 = vpack.c.b16 %v1599, %v1597
  %v1742 = vpack.c.b16 %v1600, %v1598
  %v1743 = vpack.c.b16 %v1603, %v1601
  %v1744 = vpack.c.b16 %v1604, %v1602
  %v1745 = vpack.c.b16 %v1607, %v1605
  %v1746 = vpack.c.b16 %v1608, %v1606
  %v1747 = vpack.c.b16 %v1611, %v1609
  %v1748 = vpack.c.b16 %v1612, %v1610
  %v1749 = vpack.c.b16 %v1615, %v1613
  %v1750 = vpack.c.b16 %v1616, %v1614
  %v1751 = vpack.c.b16 %v1619, %v1617
  %v1752 = vpack.c.b16 %v1620, %v1618
  %v1753 = vpack.c.b16 %v1623, %v1621
  %v1754 = vpack.c.b16 %v1624, %v1622
  %v1755 = vpack.c.b16 %v1627, %v1625
  %v1756 = vpack.c.b16 %v1628, %v1626
  %1885 = vmatprep.subr.bf16.mxu0 %v1644
  %1886 = vmatpush1.bf16.msra.mxu0 %v1643
  %1887 = vmatprep.subr.bf16.mxu0 %v1642
  %1888 = vmatpush1.bf16.msra.mxu0 %v1641
  %1889 = vmatprep.subr.bf16.mxu0 %v1640
  %1890 = vmatpush1.bf16.msra.mxu0 %v1639
  %1891 = vmatprep.subr.bf16.mxu0 %v1638
  %1892 = vmatpush1.bf16.msra.mxu0 %v1637
  %1893 = vmatprep.subr.bf16.mxu0 %v1636
  %1894 = vmatpush1.bf16.msra.mxu0 %v1635
  %1895 = vmatprep.subr.bf16.mxu0 %v1634
  %1896 = vmatpush1.bf16.msra.mxu0 %v1633
  %1897 = vmatprep.subr.bf16.mxu0 %v1632
  %1898 = vmatpush1.bf16.msra.mxu0 %v1631
  %1899 = vmatprep.subr.bf16.mxu0 %v1630
  %1900 = vmatpush1.bf16.msra.mxu0 %v1629
  %1901 = vmatprep.subr.bf16.mxu0 %v1660
  %1902 = vmatpush2.bf16.msra.mxu0 %v1659
  %1903 = vmatprep.subr.bf16.mxu0 %v1658
  %1904 = vmatpush2.bf16.msra.mxu0 %v1657
  %1905 = vmatprep.subr.bf16.mxu0 %v1656
  %1906 = vmatpush2.bf16.msra.mxu0 %v1655
  %1907 = vmatprep.subr.bf16.mxu0 %v1654
  %1908 = vmatpush2.bf16.msra.mxu0 %v1653
  %1909 = vmatprep.subr.bf16.mxu0 %v1652
  %1910 = vmatpush2.bf16.msra.mxu0 %v1651
  %1911 = vmatprep.subr.bf16.mxu0 %v1650
  %1912 = vmatpush2.bf16.msra.mxu0 %v1649
  %1913 = vmatprep.subr.bf16.mxu0 %v1648
  %1914 = vmatpush2.bf16.msra.mxu0 %v1647
  %1915 = vmatprep.subr.bf16.mxu0 %v1646
  %1916 = vmatpush2.bf16.msra.mxu0 %v1645
  %1917 = vmatprep.mubr.bf16.mxu0 %v1098
  %1918 = vmatmul.mubr.bf16.gmra.mxu0 %v1097
  %v1919 = vpop.f32.mrf.mxu0
  %v1920 = vadd.f32 %v1238, %v1919
  %v1921 = vpop.f32.mrf.mxu0
  %v1922 = vadd.f32 %v1242, %v1921
  %v1923 = vpop.f32.mrf.mxu0
  %v1924 = vadd.f32 %v1238, %v1923
  %v1925 = vpop.f32.mrf.mxu0
  %v1926 = vadd.f32 %v1242, %v1925
  %1927 = vdwg.mxu0
  %1928 = vmatprep.subr.bf16.mxu0 %v1676
  %1929 = vmatpush1.bf16.msra.mxu0 %v1675
  %1930 = vmatprep.subr.bf16.mxu0 %v1674
  %1931 = vmatpush1.bf16.msra.mxu0 %v1673
  %1932 = vmatprep.subr.bf16.mxu0 %v1672
  %1933 = vmatpush1.bf16.msra.mxu0 %v1671
  %1934 = vmatprep.subr.bf16.mxu0 %v1670
  %1935 = vmatpush1.bf16.msra.mxu0 %v1669
  %1936 = vmatprep.subr.bf16.mxu0 %v1668
  %1937 = vmatpush1.bf16.msra.mxu0 %v1667
  %1938 = vmatprep.subr.bf16.mxu0 %v1666
  %1939 = vmatpush1.bf16.msra.mxu0 %v1665
  %1940 = vmatprep.subr.bf16.mxu0 %v1664
  %1941 = vmatpush1.bf16.msra.mxu0 %v1663
  %1942 = vmatprep.subr.bf16.mxu0 %v1662
  %1943 = vmatpush1.bf16.msra.mxu0 %v1661
  %1944 = vmatprep.subr.bf16.mxu0 %v1692
  %1945 = vmatpush2.bf16.msra.mxu0 %v1691
  %1946 = vmatprep.subr.bf16.mxu0 %v1690
  %1947 = vmatpush2.bf16.msra.mxu0 %v1689
  %1948 = vmatprep.subr.bf16.mxu0 %v1688
  %1949 = vmatpush2.bf16.msra.mxu0 %v1687
  %1950 = vmatprep.subr.bf16.mxu0 %v1686
  %1951 = vmatpush2.bf16.msra.mxu0 %v1685
  %1952 = vmatprep.subr.bf16.mxu0 %v1684
  %1953 = vmatpush2.bf16.msra.mxu0 %v1683
  %1954 = vmatprep.subr.bf16.mxu0 %v1682
  %1955 = vmatpush2.bf16.msra.mxu0 %v1681
  %1956 = vmatprep.subr.bf16.mxu0 %v1680
  %1957 = vmatpush2.bf16.msra.mxu0 %v1679
  %1958 = vmatprep.subr.bf16.mxu0 %v1678
  %1959 = vmatpush2.bf16.msra.mxu0 %v1677
  %1960 = vmatprep.mubr.bf16.mxu0 %v1100
  %1961 = vmatmul.mubr.bf16.gmra.mxu0 %v1099
  %v1962 = vpop.f32.mrf.mxu0
  %v1963 = vadd.f32 %v1920, %v1962
  %v1964 = vpop.f32.mrf.mxu0
  %v1965 = vadd.f32 %v1922, %v1964
  %v1966 = vpop.f32.mrf.mxu0
  %v1967 = vadd.f32 %v1924, %v1966
  %v1968 = vpop.f32.mrf.mxu0
  %v1969 = vadd.f32 %v1926, %v1968
  %1970 = vdwg.mxu0
  %1971 = vmatprep.subr.bf16.mxu0 %v1708
  %1972 = vmatpush1.bf16.msra.mxu0 %v1707
  %1973 = vmatprep.subr.bf16.mxu0 %v1706
  %1974 = vmatpush1.bf16.msra.mxu0 %v1705
  %1975 = vmatprep.subr.bf16.mxu0 %v1704
  %1976 = vmatpush1.bf16.msra.mxu0 %v1703
  %1977 = vmatprep.subr.bf16.mxu0 %v1702
  %1978 = vmatpush1.bf16.msra.mxu0 %v1701
  %1979 = vmatprep.subr.bf16.mxu0 %v1700
  %1980 = vmatpush1.bf16.msra.mxu0 %v1699
  %1981 = vmatprep.subr.bf16.mxu0 %v1698
  %1982 = vmatpush1.bf16.msra.mxu0 %v1697
  %1983 = vmatprep.subr.bf16.mxu0 %v1696
  %1984 = vmatpush1.bf16.msra.mxu0 %v1695
  %1985 = vmatprep.subr.bf16.mxu0 %v1694
  %1986 = vmatpush1.bf16.msra.mxu0 %v1693
  %1987 = vmatprep.subr.bf16.mxu0 %v1724
  %1988 = vmatpush2.bf16.msra.mxu0 %v1723
  %1989 = vmatprep.subr.bf16.mxu0 %v1722
  %1990 = vmatpush2.bf16.msra.mxu0 %v1721
  %1991 = vmatprep.subr.bf16.mxu0 %v1720
  %1992 = vmatpush2.bf16.msra.mxu0 %v1719
  %1993 = vmatprep.subr.bf16.mxu0 %v1718
  %1994 = vmatpush2.bf16.msra.mxu0 %v1717
  %1995 = vmatprep.subr.bf16.mxu0 %v1716
  %1996 = vmatpush2.bf16.msra.mxu0 %v1715
  %1997 = vmatprep.subr.bf16.mxu0 %v1714
  %1998 = vmatpush2.bf16.msra.mxu0 %v1713
  %1999 = vmatprep.subr.bf16.mxu0 %v1712
  %2000 = vmatpush2.bf16.msra.mxu0 %v1711
  %2001 = vmatprep.subr.bf16.mxu0 %v1710
  %2002 = vmatpush2.bf16.msra.mxu0 %v1709
  %2003 = vmatprep.mubr.bf16.mxu0 %v1102
  %2004 = vmatmul.mubr.bf16.gmra.mxu0 %v1101
  %v2005 = vpop.f32.mrf.mxu0
  %v2006 = vadd.f32 %v1963, %v2005
  %v2007 = vpop.f32.mrf.mxu0
  %v2008 = vadd.f32 %v1965, %v2007
  %v2009 = vpop.f32.mrf.mxu0
  %v2010 = vadd.f32 %v1967, %v2009
  %v2011 = vpop.f32.mrf.mxu0
  %v2012 = vadd.f32 %v1969, %v2011
  %2013 = vdwg.mxu0
  %2014 = vmatprep.subr.bf16.mxu0 %v1740
  %2015 = vmatpush1.bf16.msra.mxu0 %v1739
  %2016 = vmatprep.subr.bf16.mxu0 %v1738
  %2017 = vmatpush1.bf16.msra.mxu0 %v1737
  %2018 = vmatprep.subr.bf16.mxu0 %v1736
  %2019 = vmatpush1.bf16.msra.mxu0 %v1735
  %2020 = vmatprep.subr.bf16.mxu0 %v1734
  %2021 = vmatpush1.bf16.msra.mxu0 %v1733
  %2022 = vmatprep.subr.bf16.mxu0 %v1732
  %2023 = vmatpush1.bf16.msra.mxu0 %v1731
  %2024 = vmatprep.subr.bf16.mxu0 %v1730
  %2025 = vmatpush1.bf16.msra.mxu0 %v1729
  %2026 = vmatprep.subr.bf16.mxu0 %v1728
  %2027 = vmatpush1.bf16.msra.mxu0 %v1727
  %2028 = vmatprep.subr.bf16.mxu0 %v1726
  %2029 = vmatpush1.bf16.msra.mxu0 %v1725
  %2030 = vmatprep.subr.bf16.mxu0 %v1756
  %2031 = vmatpush2.bf16.msra.mxu0 %v1755
  %2032 = vmatprep.subr.bf16.mxu0 %v1754
  %2033 = vmatpush2.bf16.msra.mxu0 %v1753
  %2034 = vmatprep.subr.bf16.mxu0 %v1752
  %2035 = vmatpush2.bf16.msra.mxu0 %v1751
  %2036 = vmatprep.subr.bf16.mxu0 %v1750
  %2037 = vmatpush2.bf16.msra.mxu0 %v1749
  %2038 = vmatprep.subr.bf16.mxu0 %v1748
  %2039 = vmatpush2.bf16.msra.mxu0 %v1747
  %2040 = vmatprep.subr.bf16.mxu0 %v1746
  %2041 = vmatpush2.bf16.msra.mxu0 %v1745
  %2042 = vmatprep.subr.bf16.mxu0 %v1744
  %2043 = vmatpush2.bf16.msra.mxu0 %v1743
  %2044 = vmatprep.subr.bf16.mxu0 %v1742
  %2045 = vmatpush2.bf16.msra.mxu0 %v1741
  %2046 = vmatprep.mubr.bf16.mxu0 %v1104
  %2047 = vmatmul.mubr.bf16.gmra.mxu0 %v1103
  %v2048 = vpop.f32.mrf.mxu0
  %v2049 = vadd.f32 %v2006, %v2048
  %v2050 = vpop.f32.mrf.mxu0
  %v2051 = vadd.f32 %v2008, %v2050
  %v2052 = vpop.f32.mrf.mxu0
  %v2053 = vadd.f32 %v2010, %v2052
  %v2054 = vpop.f32.mrf.mxu0
  %v2055 = vadd.f32 %v2012, %v2054
  %2056 = vdwg.mxu0
  %v2057 = vadd.f32 %v2049, %v28
  %v2058 = vadd.f32 %v2051, %v29
  %v2059 = vadd.f32 %v2053, %v30
  %v2060 = vadd.f32 %v2055, %v31
  %v2061 = vpack.c.bf16 %v2059, %v2057
  %v2062 = vpack.c.bf16 %v2060, %v2058
  %v2065 = vunpack.c.l.b16 %v2061
  %v2066 = vunpack.c.l.b16 %v2062
  %v2067 = vunpack.c.h.b16 %v2061
  %v2068 = vunpack.c.h.b16 %v2062
  %v2069 = vpack.c.b16 %v2066, %v2065
  %v2070 = vpack.c.b16 %v2068, %v2067
  %2073 = vst [vmem:[%s7] sm:$0xff] %v2069
  %2074 = vst [vmem:[%s7 + $0x8] sm:$0xff] %v2070
  // Predicated region
  $region30: #{dialog_acts_predictor_forward.14} parent=0 // pred_check
    _
  $region31: #{dialog_acts_predictor_forward.14} parent=0 // pred_check_branch
    %2076 = sbr.rel (0) target = $region33
  $region32: #{dialog_acts_predictor_forward.14} parent=0 // pred_region
    _
  $region33: #{dialog_acts_predictor_forward.14} parent=0 // pred_fallthru
    _
  // Predicated region
  $region34: #{dialog_acts_predictor_forward.14} parent=0 // pred_check
    _
  $region35: #{dialog_acts_predictor_forward.14} parent=0 // pred_check_branch
    %2078 = sbr.rel (0) target = $region37
  $region36: #{dialog_acts_predictor_forward.14} parent=0 // pred_region
    _
  $region37: #{dialog_acts_predictor_forward.14} parent=0 // pred_fallthru
    _

</llo_original>
